<compile_context>
chip_gen: v7x
topology: tpu7x:2x2x1
jax: 0.10.0
libtpu: 0.0.40
codegen_flags: <defaults>
</compile_context>

<pallas_src>
import jax
import jax.numpy as jnp
from jax import lax
from jax.experimental import pallas as pl
from jax.experimental.pallas import tpu as pltpu


# --------------------------- fused forward kernel --------------------------- #
# One grid step == one image.  Activation layout everywhere: rows = flattened
# spatial position with a fixed row stride of 32 (sublanes), columns = channels
# (lanes).

def _fused_net_kernel(xp_ref, w1_ref, b1_ref, w2_ref, b2_ref, w3_ref, b3_ref,
                      out_ref,
                      y1_ref, a1_ref, a1w_ref, y2_ref, a2_ref):
    f32 = jnp.float32

    # ---- conv1 (1->32, 5x5, pad=2) + ReLU: one MXU matmul ------------------- #
    # xp_ref[0] is the per-image im2col patch matrix: row j = 32*ho + wo
    # (rows with wo >= 28 are junk, never selected downstream); 25 taps padded
    # to 32 columns (w1 rows 25..31 are zero).
    y1 = jnp.dot(xp_ref[0], w1_ref[...], preferred_element_type=f32)
    y1 = jnp.maximum(y1 + b1_ref[...], 0.0)                      # (896, 32)
    y1_ref[pl.ds(0, 896), :] = y1
    # keep the strided pooling reads in-bounds and finite
    y1_ref[pl.ds(896, 32), :] = jnp.zeros((32, 32), f32)

    # ---- maxpool1 2x2/2 (28x28 -> 14x14), loop-free ------------------------- #
    # a1 row m = 32*po + qo  ->  window top-left slab row = 2*m.
    p00 = y1_ref[pl.ds(0, 448, stride=2), :]
    p01 = y1_ref[pl.ds(1, 448, stride=2), :]
    p10 = y1_ref[pl.ds(32, 448, stride=2), :]
    p11 = y1_ref[pl.ds(33, 448, stride=2), :]
    a1_ref[...] = jnp.maximum(jnp.maximum(p00, p01), jnp.maximum(p10, p11))

    # ---- build lane-wide a1w[m, 32*kw + ci] = a1[m + kw, ci]  (bf16) --------- #
    a1w = jnp.concatenate([a1_ref[pl.ds(kw, 432), :] for kw in range(5)], axis=1)
    a1w_ref[...] = a1w.astype(jnp.bfloat16)                      # (432, 160)

    # ---- conv2 (32->64, 5x5, valid) + ReLU: 5 deep-K (K=160) bf16 matmuls ---- #
    # Output slab row j2 = 32*ho2 + wo2 (rows with wo2 >= 10 are junk).
    acc2 = jnp.zeros((304, 64), f32)
    for kh in range(5):
        acc2 = acc2 + jnp.dot(a1w_ref[pl.ds(32 * kh, 304), :], w2_ref[kh],
                              preferred_element_type=f32)
    y2_ref[pl.ds(0, 304), :] = jnp.maximum(acc2 + b2_ref[...], 0.0)
    y2_ref[pl.ds(304, 48), :] = jnp.zeros((48, 64), f32)

    # ---- maxpool2 2x2/2 (10x10 -> 5x5), loop-free ---------------------------- #
    # a2 row m = 32*po2 + qo2  ->  window top-left slab row = 2*m.
    q00 = y2_ref[pl.ds(0, 160, stride=2), :]
    q01 = y2_ref[pl.ds(1, 160, stride=2), :]
    q10 = y2_ref[pl.ds(32, 160, stride=2), :]
    q11 = y2_ref[pl.ds(33, 160, stride=2), :]
    a2_ref[...] = jnp.maximum(jnp.maximum(q00, q01), jnp.maximum(q10, q11))

    # ---- conv3 (64->10, 5x5 on the 5x5 map -> 1x1): one flat matmul ---------- #
    # Gather the 25 valid pooled rows into a (1, 1600) lane-dense row, zero-pad
    # M to a full sublane tile (no 8x broadcast), single MXU matmul.
    row = jnp.concatenate(
        [a2_ref[pl.ds(32 * p + q, 1), :] for p in range(5) for q in range(5)],
        axis=1)                                                  # (1, 1600)
    rows8 = jnp.concatenate([row, jnp.zeros((7, 1600), f32)], axis=0)
    res = jnp.dot(rows8, w3_ref[...], preferred_element_type=f32)    # (8, 10)
    out_ref[0] = res[0:1, :] + b3_ref[...]


# --------------------------------- wrapper ---------------------------------- #

def net_forward(params, x):
    N = x.shape[0]
    assert x.shape[1:] == (1, 28, 28), x.shape   # MaxPool/view(-1,10) invariant

    # Input glue: zero-pad (pad=2), flatten spatial to the 32-row-stride slab,
    # build the 25-tap im2col patch matrix (tap columns padded 25 -> 32).
    xf = jnp.pad(x, ((0, 0), (0, 0), (2, 2), (2, 2))).reshape(N, 32 * 32)
    xf = jnp.pad(xf, ((0, 0), (0, 32)))                               # (N, 1056)
    shifts = [32 * kh + kw for kh in range(5) for kw in range(5)]
    patches = jnp.stack([xf[:, s:s + 896] for s in shifts], axis=-1)  # (N, 896, 25)
    patches = jnp.pad(patches, ((0, 0), (0, 0), (0, 7)))              # (N, 896, 32)

    # Kernel-friendly weight layouts (one-time, tiny).
    w1 = jnp.pad(params["w1"].reshape(32, 25).T, ((0, 7), (0, 0)))    # (32, 32)  [k, co]
    b1 = params["b1"].reshape(1, 32)
    w2 = jnp.transpose(params["w2"], (2, 3, 1, 0)).reshape(5, 160, 64)
    w2 = w2.astype(jnp.bfloat16)                                      # [kh, (kw,ci), co]
    b2 = params["b2"].reshape(1, 64)
    w3 = jnp.transpose(params["w3"], (2, 3, 1, 0)).reshape(25 * 64, 10)  # [(kh,kw,ci), co]
    b3 = params["b3"].reshape(1, 10)

    flops = N * 2 * (896 * 32 * 32 + 304 * 800 * 64 + 8 * 1600 * 10)
    bytes_accessed = (4 * (patches.size + w1.size + b1.size + b2.size
                           + w3.size + b3.size + N * 10) + 2 * w2.size)

    out = pl.pallas_call(
        _fused_net_kernel,
        out_shape=jax.ShapeDtypeStruct((N, 1, 10), jnp.float32),
        grid=(N,),
        in_specs=[
            pl.BlockSpec((1, 896, 32), lambda i: (i, 0, 0)),   # im2col patches
            pl.BlockSpec((32, 32), lambda i: (0, 0)),          # conv1 weights
            pl.BlockSpec((1, 32), lambda i: (0, 0)),
            pl.BlockSpec((5, 160, 64), lambda i: (0, 0, 0)),   # conv2 weights (bf16)
            pl.BlockSpec((1, 64), lambda i: (0, 0)),
            pl.BlockSpec((1600, 10), lambda i: (0, 0)),        # conv3 weights
            pl.BlockSpec((1, 10), lambda i: (0, 0)),
        ],
        out_specs=pl.BlockSpec((1, 1, 10), lambda i: (i, 0, 0)),
        scratch_shapes=[
            pltpu.VMEM((928, 32), jnp.float32),    # y1 slab (+relu), 32-row stride
            pltpu.VMEM((448, 32), jnp.float32),    # a1: pooled stage-1, row = 32*po+qo
            pltpu.VMEM((432, 160), jnp.bfloat16),  # a1w: (kw,ci) lane concat for deep-K conv2
            pltpu.VMEM((352, 64), jnp.float32),    # y2 slab (+relu)
            pltpu.VMEM((160, 64), jnp.float32),    # a2: pooled stage-2, row = 32*po2+qo2
        ],
        compiler_params=pltpu.CompilerParams(
            dimension_semantics=("parallel",),
            vmem_limit_bytes=4 * 1024 * 1024,
        ),
        cost_estimate=pl.CostEstimate(flops=flops, transcendentals=0,
                                      bytes_accessed=bytes_accessed),
    )(patches, w1, b1, w2, b2, w3, b3)
    return out.reshape(N, 10)


# ----------------------- pure-JAX reference (for checking) ------------------ #

def _reference_forward(params, x):
    dn = ("NCHW", "OIHW", "NCHW")

    def conv(h, w, b, pad):
        y = lax.conv_general_dilated(h, w, (1, 1), [(pad, pad), (pad, pad)],
                                     dimension_numbers=dn,
                                     precision=lax.Precision.HIGHEST)
        return y + b[None, :, None, None]

    def pool(h):
        return lax.reduce_window(h, -jnp.inf, lax.max,
                                 (1, 1, 2, 2), (1, 1, 2, 2), "VALID")

    y = pool(jnp.maximum(conv(x, params["w1"], params["b1"], 2), 0.0))
    y = pool(jnp.maximum(conv(y, params["w2"], params["b2"], 0), 0.0))
    y = conv(y, params["w3"], params["b3"], 0)
    return y.reshape(-1, 10)


# ----------------------------------- main ------------------------------------ #

if __name__ == "__main__":
    key = jax.random.PRNGKey(0)
    k1, k2, k3, k4, k5, k6, kx = jax.random.split(key, 7)

    params = {
        "w1": 0.10 * jax.random.normal(k1, (32, 1, 5, 5), jnp.float32),
        "b1": 0.10 * jax.random.normal(k2, (32,), jnp.float32),
        "w2": 0.05 * jax.random.normal(k3, (64, 32, 5, 5), jnp.float32),
        "b2": 0.05 * jax.random.normal(k4, (64,), jnp.float32),
        "w3": 0.05 * jax.random.normal(k5, (10, 64, 5, 5), jnp.float32),
        "b3": 0.05 * jax.random.normal(k6, (10,), jnp.float32),
    }
    x = jax.random.normal(kx, (2, 1, 28, 28), jnp.float32)

    out = jax.block_until_ready(jax.jit(net_forward)(params, x))
    assert out.shape == (2, 10) and out.dtype == jnp.float32, (out.shape, out.dtype)

    ref = jax.block_until_ready(jax.jit(_reference_forward)(params, x))
    max_err = float(jnp.max(jnp.abs(out - ref)))
    assert jnp.allclose(out, ref, rtol=3e-2, atol=3e-2), f"max abs err {max_err}"

    print("KERNEL_OK")
</pallas_src>

<mosaic_0001>
module attributes {stable_mosaic.version = 11 : i64} {
  func.func @_fused_net_kernel(%arg0: i32, %arg1: memref<1x896x32xf32, #tpu.memory_space<vmem>>, %arg2: memref<32x32xf32, #tpu.memory_space<vmem>>, %arg3: memref<1x32xf32, #tpu.memory_space<vmem>>, %arg4: memref<5x160x64xbf16, #tpu.memory_space<vmem>>, %arg5: memref<1x64xf32, #tpu.memory_space<vmem>>, %arg6: memref<1600x10xf32, #tpu.memory_space<vmem>>, %arg7: memref<1x10xf32, #tpu.memory_space<vmem>>, %arg8: memref<1x1x10xf32, #tpu.memory_space<vmem>>, %arg9: memref<928x32xf32, #tpu.memory_space<vmem>>, %arg10: memref<448x32xf32, #tpu.memory_space<vmem>>, %arg11: memref<432x160xbf16, #tpu.memory_space<vmem>>, %arg12: memref<352x64xf32, #tpu.memory_space<vmem>>, %arg13: memref<160x64xf32, #tpu.memory_space<vmem>>) attributes {dimension_semantics = [#tpu.dimension_semantics<parallel>], iteration_bounds = array<i64: 2>, scalar_prefetch = 0 : i64, scratch_operands = 5 : i64, tpu.core_type = #tpu.core_type<tc>, window_params = [{transform_indices = @transform_0, window_bounds = array<i64: 1, 896, 32>}, {pipeline_mode = #tpu.pipeline_mode<synchronous>, transform_indices = @transform_1, window_bounds = array<i64: 32, 32>}, {pipeline_mode = #tpu.pipeline_mode<synchronous>, transform_indices = @transform_2, window_bounds = array<i64: 1, 32>}, {pipeline_mode = #tpu.pipeline_mode<synchronous>, transform_indices = @transform_3, window_bounds = array<i64: 5, 160, 64>}, {pipeline_mode = #tpu.pipeline_mode<synchronous>, transform_indices = @transform_4, window_bounds = array<i64: 1, 64>}, {pipeline_mode = #tpu.pipeline_mode<synchronous>, transform_indices = @transform_5, window_bounds = array<i64: 1600, 10>}, {pipeline_mode = #tpu.pipeline_mode<synchronous>, transform_indices = @transform_6, window_bounds = array<i64: 1, 10>}, {transform_indices = @transform_7, window_bounds = array<i64: 1, 1, 10>}]} {
    %c0 = arith.constant 0 : index
    %c0_0 = arith.constant 0 : index
    %c0_1 = arith.constant 0 : index
    %0 = vector.load %arg1[%c0, %c0_0, %c0_1] : memref<1x896x32xf32, #tpu.memory_space<vmem>>, vector<1x896x32xf32>
    %1 = vector.shape_cast %0 : vector<1x896x32xf32> to vector<896x32xf32>
    %c0_2 = arith.constant 0 : index
    %c0_3 = arith.constant 0 : index
    %2 = vector.load %arg2[%c0_2, %c0_3] : memref<32x32xf32, #tpu.memory_space<vmem>>, vector<32x32xf32>
    %cst = arith.constant dense<0.000000e+00> : vector<896x32xf32>
    %3 = tpu.matmul %1, %2, %cst {dimension_numbers = #tpu.dot_dimension_numbers<[1], [0], [0], [1], [0, 0, 1, 1], [], []>} : vector<896x32xf32>, vector<32x32xf32>, vector<896x32xf32> -> vector<896x32xf32>
    %c0_4 = arith.constant 0 : index
    %c0_5 = arith.constant 0 : index
    %4 = vector.load %arg3[%c0_4, %c0_5] : memref<1x32xf32, #tpu.memory_space<vmem>>, vector<1x32xf32>
    %5 = vector.broadcast %4 : vector<1x32xf32> to vector<896x32xf32>
    %6 = arith.addf %3, %5 : vector<896x32xf32>
    %cst_6 = arith.constant 0.000000e+00 : f32
    %7 = vector.broadcast %cst_6 : f32 to vector<896x32xf32>
    %8 = arith.maximumf %6, %7 : vector<896x32xf32>
    %c0_7 = arith.constant 0 : index
    %c0_8 = arith.constant 0 : index
    %9 = vector.load %arg9[%c0_7, %c0_8] : memref<928x32xf32, #tpu.memory_space<vmem>>, vector<896x32xf32>
    tpu.vector_store %arg9[%c0_7, %c0_8], %8 {strides = array<i32>} : memref<928x32xf32, #tpu.memory_space<vmem>>, vector<896x32xf32>,
    %cst_9 = arith.constant 0.000000e+00 : f32
    %10 = vector.broadcast %cst_9 : f32 to vector<32x32xf32>
    %c896 = arith.constant 896 : index
    %c0_10 = arith.constant 0 : index
    %11 = vector.load %arg9[%c896, %c0_10] : memref<928x32xf32, #tpu.memory_space<vmem>>, vector<32x32xf32>
    tpu.vector_store %arg9[%c896, %c0_10], %10 {strides = array<i32>} : memref<928x32xf32, #tpu.memory_space<vmem>>, vector<32x32xf32>,
    %c0_11 = arith.constant 0 : index
    %c0_12 = arith.constant 0 : index
    %12 = tpu.strided_load %arg9[%c0_11, %c0_12] {strides = array<i32: 2, 1>} : memref<928x32xf32, #tpu.memory_space<vmem>>, vector<448x32xf32>
    %c1 = arith.constant 1 : index
    %c0_13 = arith.constant 0 : index
    %13 = tpu.strided_load %arg9[%c1, %c0_13] {strides = array<i32: 2, 1>} : memref<928x32xf32, #tpu.memory_space<vmem>>, vector<448x32xf32>
    %c32 = arith.constant 32 : index
    %c0_14 = arith.constant 0 : index
    %14 = tpu.strided_load %arg9[%c32, %c0_14] {strides = array<i32: 2, 1>} : memref<928x32xf32, #tpu.memory_space<vmem>>, vector<448x32xf32>
    %c33 = arith.constant 33 : index
    %c0_15 = arith.constant 0 : index
    %15 = tpu.strided_load %arg9[%c33, %c0_15] {strides = array<i32: 2, 1>} : memref<928x32xf32, #tpu.memory_space<vmem>>, vector<448x32xf32>
    %16 = arith.maximumf %12, %13 : vector<448x32xf32>
    %17 = arith.maximumf %14, %15 : vector<448x32xf32>
    %18 = arith.maximumf %16, %17 : vector<448x32xf32>
    %c0_16 = arith.constant 0 : index
    %c0_17 = arith.constant 0 : index
    %19 = vector.load %arg10[%c0_16, %c0_17] : memref<448x32xf32, #tpu.memory_space<vmem>>, vector<448x32xf32>
    tpu.vector_store %arg10[%c0_16, %c0_17], %18 {strides = array<i32>} : memref<448x32xf32, #tpu.memory_space<vmem>>, vector<448x32xf32>,
    %c0_18 = arith.constant 0 : index
    %c0_19 = arith.constant 0 : index
    %20 = vector.load %arg10[%c0_18, %c0_19] : memref<448x32xf32, #tpu.memory_space<vmem>>, vector<432x32xf32>
    %c1_20 = arith.constant 1 : index
    %c0_21 = arith.constant 0 : index
    %21 = vector.load %arg10[%c1_20, %c0_21] : memref<448x32xf32, #tpu.memory_space<vmem>>, vector<432x32xf32>
    %c2 = arith.constant 2 : index
    %c0_22 = arith.constant 0 : index
    %22 = vector.load %arg10[%c2, %c0_22] : memref<448x32xf32, #tpu.memory_space<vmem>>, vector<432x32xf32>
    %c3 = arith.constant 3 : index
    %c0_23 = arith.constant 0 : index
    %23 = vector.load %arg10[%c3, %c0_23] : memref<448x32xf32, #tpu.memory_space<vmem>>, vector<432x32xf32>
    %c4 = arith.constant 4 : index
    %c0_24 = arith.constant 0 : index
    %24 = vector.load %arg10[%c4, %c0_24] : memref<448x32xf32, #tpu.memory_space<vmem>>, vector<432x32xf32>
    %25 = tpu.concatenate %20, %21, %22, %23, %24 in 1 : vector<432x32xf32>, vector<432x32xf32>, vector<432x32xf32>, vector<432x32xf32>, vector<432x32xf32> -> vector<432x160xf32>
    %26 = arith.truncf %25 : vector<432x160xf32> to vector<432x160xbf16>
    %c0_25 = arith.constant 0 : index
    %c0_26 = arith.constant 0 : index
    %27 = vector.load %arg11[%c0_25, %c0_26] : memref<432x160xbf16, #tpu.memory_space<vmem>>, vector<432x160xbf16>
    tpu.vector_store %arg11[%c0_25, %c0_26], %26 {strides = array<i32>} : memref<432x160xbf16, #tpu.memory_space<vmem>>, vector<432x160xbf16>,
    %cst_27 = arith.constant 0.000000e+00 : f32
    %28 = vector.broadcast %cst_27 : f32 to vector<304x64xf32>
    %c0_28 = arith.constant 0 : index
    %c0_29 = arith.constant 0 : index
    %29 = vector.load %arg11[%c0_28, %c0_29] : memref<432x160xbf16, #tpu.memory_space<vmem>>, vector<304x160xbf16>
    %c0_30 = arith.constant 0 : index
    %c0_31 = arith.constant 0 : index
    %c0_32 = arith.constant 0 : index
    %30 = vector.load %arg4[%c0_30, %c0_31, %c0_32] : memref<5x160x64xbf16, #tpu.memory_space<vmem>>, vector<1x160x64xbf16>
    %31 = vector.shape_cast %30 : vector<1x160x64xbf16> to vector<160x64xbf16>
    %cst_33 = arith.constant dense<0.000000e+00> : vector<304x64xf32>
    %32 = tpu.matmul %29, %31, %cst_33 {dimension_numbers = #tpu.dot_dimension_numbers<[1], [0], [0], [1], [0, 0, 1, 1], [], []>} : vector<304x160xbf16>, vector<160x64xbf16>, vector<304x64xf32> -> vector<304x64xf32>
    %33 = arith.addf %28, %32 : vector<304x64xf32>
    %c32_34 = arith.constant 32 : index
    %c0_35 = arith.constant 0 : index
    %34 = vector.load %arg11[%c32_34, %c0_35] : memref<432x160xbf16, #tpu.memory_space<vmem>>, vector<304x160xbf16>
    %c1_36 = arith.constant 1 : index
    %c0_37 = arith.constant 0 : index
    %c0_38 = arith.constant 0 : index
    %35 = vector.load %arg4[%c1_36, %c0_37, %c0_38] : memref<5x160x64xbf16, #tpu.memory_space<vmem>>, vector<1x160x64xbf16>
    %36 = vector.shape_cast %35 : vector<1x160x64xbf16> to vector<160x64xbf16>
    %cst_39 = arith.constant dense<0.000000e+00> : vector<304x64xf32>
    %37 = tpu.matmul %34, %36, %cst_39 {dimension_numbers = #tpu.dot_dimension_numbers<[1], [0], [0], [1], [0, 0, 1, 1], [], []>} : vector<304x160xbf16>, vector<160x64xbf16>, vector<304x64xf32> -> vector<304x64xf32>
    %38 = arith.addf %33, %37 : vector<304x64xf32>
    %c64 = arith.constant 64 : index
    %c0_40 = arith.constant 0 : index
    %39 = vector.load %arg11[%c64, %c0_40] : memref<432x160xbf16, #tpu.memory_space<vmem>>, vector<304x160xbf16>
    %c2_41 = arith.constant 2 : index
    %c0_42 = arith.constant 0 : index
    %c0_43 = arith.constant 0 : index
    %40 = vector.load %arg4[%c2_41, %c0_42, %c0_43] : memref<5x160x64xbf16, #tpu.memory_space<vmem>>, vector<1x160x64xbf16>
    %41 = vector.shape_cast %40 : vector<1x160x64xbf16> to vector<160x64xbf16>
    %cst_44 = arith.constant dense<0.000000e+00> : vector<304x64xf32>
    %42 = tpu.matmul %39, %41, %cst_44 {dimension_numbers = #tpu.dot_dimension_numbers<[1], [0], [0], [1], [0, 0, 1, 1], [], []>} : vector<304x160xbf16>, vector<160x64xbf16>, vector<304x64xf32> -> vector<304x64xf32>
    %43 = arith.addf %38, %42 : vector<304x64xf32>
    %c96 = arith.constant 96 : index
    %c0_45 = arith.constant 0 : index
    %44 = vector.load %arg11[%c96, %c0_45] : memref<432x160xbf16, #tpu.memory_space<vmem>>, vector<304x160xbf16>
    %c3_46 = arith.constant 3 : index
    %c0_47 = arith.constant 0 : index
    %c0_48 = arith.constant 0 : index
    %45 = vector.load %arg4[%c3_46, %c0_47, %c0_48] : memref<5x160x64xbf16, #tpu.memory_space<vmem>>, vector<1x160x64xbf16>
    %46 = vector.shape_cast %45 : vector<1x160x64xbf16> to vector<160x64xbf16>
    %cst_49 = arith.constant dense<0.000000e+00> : vector<304x64xf32>
    %47 = tpu.matmul %44, %46, %cst_49 {dimension_numbers = #tpu.dot_dimension_numbers<[1], [0], [0], [1], [0, 0, 1, 1], [], []>} : vector<304x160xbf16>, vector<160x64xbf16>, vector<304x64xf32> -> vector<304x64xf32>
    %48 = arith.addf %43, %47 : vector<304x64xf32>
    %c128 = arith.constant 128 : index
    %c0_50 = arith.constant 0 : index
    %49 = vector.load %arg11[%c128, %c0_50] : memref<432x160xbf16, #tpu.memory_space<vmem>>, vector<304x160xbf16>
    %c4_51 = arith.constant 4 : index
    %c0_52 = arith.constant 0 : index
    %c0_53 = arith.constant 0 : index
    %50 = vector.load %arg4[%c4_51, %c0_52, %c0_53] : memref<5x160x64xbf16, #tpu.memory_space<vmem>>, vector<1x160x64xbf16>
    %51 = vector.shape_cast %50 : vector<1x160x64xbf16> to vector<160x64xbf16>
    %cst_54 = arith.constant dense<0.000000e+00> : vector<304x64xf32>
    %52 = tpu.matmul %49, %51, %cst_54 {dimension_numbers = #tpu.dot_dimension_numbers<[1], [0], [0], [1], [0, 0, 1, 1], [], []>} : vector<304x160xbf16>, vector<160x64xbf16>, vector<304x64xf32> -> vector<304x64xf32>
    %53 = arith.addf %48, %52 : vector<304x64xf32>
    %c0_55 = arith.constant 0 : index
    %c0_56 = arith.constant 0 : index
    %54 = vector.load %arg5[%c0_55, %c0_56] : memref<1x64xf32, #tpu.memory_space<vmem>>, vector<1x64xf32>
    %55 = vector.broadcast %54 : vector<1x64xf32> to vector<304x64xf32>
    %56 = arith.addf %53, %55 : vector<304x64xf32>
    %cst_57 = arith.constant 0.000000e+00 : f32
    %57 = vector.broadcast %cst_57 : f32 to vector<304x64xf32>
    %58 = arith.maximumf %56, %57 : vector<304x64xf32>
    %c0_58 = arith.constant 0 : index
    %c0_59 = arith.constant 0 : index
    %59 = vector.load %arg12[%c0_58, %c0_59] : memref<352x64xf32, #tpu.memory_space<vmem>>, vector<304x64xf32>
    tpu.vector_store %arg12[%c0_58, %c0_59], %58 {strides = array<i32>} : memref<352x64xf32, #tpu.memory_space<vmem>>, vector<304x64xf32>,
    %cst_60 = arith.constant 0.000000e+00 : f32
    %60 = vector.broadcast %cst_60 : f32 to vector<48x64xf32>
    %c304 = arith.constant 304 : index
    %c0_61 = arith.constant 0 : index
    %61 = vector.load %arg12[%c304, %c0_61] : memref<352x64xf32, #tpu.memory_space<vmem>>, vector<48x64xf32>
    tpu.vector_store %arg12[%c304, %c0_61], %60 {strides = array<i32>} : memref<352x64xf32, #tpu.memory_space<vmem>>, vector<48x64xf32>,
    %c0_62 = arith.constant 0 : index
    %c0_63 = arith.constant 0 : index
    %62 = tpu.strided_load %arg12[%c0_62, %c0_63] {strides = array<i32: 2, 1>} : memref<352x64xf32, #tpu.memory_space<vmem>>, vector<160x64xf32>
    %c1_64 = arith.constant 1 : index
    %c0_65 = arith.constant 0 : index
    %63 = tpu.strided_load %arg12[%c1_64, %c0_65] {strides = array<i32: 2, 1>} : memref<352x64xf32, #tpu.memory_space<vmem>>, vector<160x64xf32>
    %c32_66 = arith.constant 32 : index
    %c0_67 = arith.constant 0 : index
    %64 = tpu.strided_load %arg12[%c32_66, %c0_67] {strides = array<i32: 2, 1>} : memref<352x64xf32, #tpu.memory_space<vmem>>, vector<160x64xf32>
    %c33_68 = arith.constant 33 : index
    %c0_69 = arith.constant 0 : index
    %65 = tpu.strided_load %arg12[%c33_68, %c0_69] {strides = array<i32: 2, 1>} : memref<352x64xf32, #tpu.memory_space<vmem>>, vector<160x64xf32>
    %66 = arith.maximumf %62, %63 : vector<160x64xf32>
    %67 = arith.maximumf %64, %65 : vector<160x64xf32>
    %68 = arith.maximumf %66, %67 : vector<160x64xf32>
    %c0_70 = arith.constant 0 : index
    %c0_71 = arith.constant 0 : index
    %69 = vector.load %arg13[%c0_70, %c0_71] : memref<160x64xf32, #tpu.memory_space<vmem>>, vector<160x64xf32>
    tpu.vector_store %arg13[%c0_70, %c0_71], %68 {strides = array<i32>} : memref<160x64xf32, #tpu.memory_space<vmem>>, vector<160x64xf32>,
    %c0_72 = arith.constant 0 : index
    %c0_73 = arith.constant 0 : index
    %70 = vector.load %arg13[%c0_72, %c0_73] : memref<160x64xf32, #tpu.memory_space<vmem>>, vector<1x64xf32>
    %c1_74 = arith.constant 1 : index
    %c0_75 = arith.constant 0 : index
    %71 = vector.load %arg13[%c1_74, %c0_75] : memref<160x64xf32, #tpu.memory_space<vmem>>, vector<1x64xf32>
    %c2_76 = arith.constant 2 : index
    %c0_77 = arith.constant 0 : index
    %72 = vector.load %arg13[%c2_76, %c0_77] : memref<160x64xf32, #tpu.memory_space<vmem>>, vector<1x64xf32>
    %c3_78 = arith.constant 3 : index
    %c0_79 = arith.constant 0 : index
    %73 = vector.load %arg13[%c3_78, %c0_79] : memref<160x64xf32, #tpu.memory_space<vmem>>, vector<1x64xf32>
    %c4_80 = arith.constant 4 : index
    %c0_81 = arith.constant 0 : index
    %74 = vector.load %arg13[%c4_80, %c0_81] : memref<160x64xf32, #tpu.memory_space<vmem>>, vector<1x64xf32>
    %c32_82 = arith.constant 32 : index
    %c0_83 = arith.constant 0 : index
    %75 = vector.load %arg13[%c32_82, %c0_83] : memref<160x64xf32, #tpu.memory_space<vmem>>, vector<1x64xf32>
    %c33_84 = arith.constant 33 : index
    %c0_85 = arith.constant 0 : index
    %76 = vector.load %arg13[%c33_84, %c0_85] : memref<160x64xf32, #tpu.memory_space<vmem>>, vector<1x64xf32>
    %c34 = arith.constant 34 : index
    %c0_86 = arith.constant 0 : index
    %77 = vector.load %arg13[%c34, %c0_86] : memref<160x64xf32, #tpu.memory_space<vmem>>, vector<1x64xf32>
    %c35 = arith.constant 35 : index
    %c0_87 = arith.constant 0 : index
    %78 = vector.load %arg13[%c35, %c0_87] : memref<160x64xf32, #tpu.memory_space<vmem>>, vector<1x64xf32>
    %c36 = arith.constant 36 : index
    %c0_88 = arith.constant 0 : index
    %79 = vector.load %arg13[%c36, %c0_88] : memref<160x64xf32, #tpu.memory_space<vmem>>, vector<1x64xf32>
    %c64_89 = arith.constant 64 : index
    %c0_90 = arith.constant 0 : index
    %80 = vector.load %arg13[%c64_89, %c0_90] : memref<160x64xf32, #tpu.memory_space<vmem>>, vector<1x64xf32>
    %c65 = arith.constant 65 : index
    %c0_91 = arith.constant 0 : index
    %81 = vector.load %arg13[%c65, %c0_91] : memref<160x64xf32, #tpu.memory_space<vmem>>, vector<1x64xf32>
    %c66 = arith.constant 66 : index
    %c0_92 = arith.constant 0 : index
    %82 = vector.load %arg13[%c66, %c0_92] : memref<160x64xf32, #tpu.memory_space<vmem>>, vector<1x64xf32>
    %c67 = arith.constant 67 : index
    %c0_93 = arith.constant 0 : index
    %83 = vector.load %arg13[%c67, %c0_93] : memref<160x64xf32, #tpu.memory_space<vmem>>, vector<1x64xf32>
    %c68 = arith.constant 68 : index
    %c0_94 = arith.constant 0 : index
    %84 = vector.load %arg13[%c68, %c0_94] : memref<160x64xf32, #tpu.memory_space<vmem>>, vector<1x64xf32>
    %c96_95 = arith.constant 96 : index
    %c0_96 = arith.constant 0 : index
    %85 = vector.load %arg13[%c96_95, %c0_96] : memref<160x64xf32, #tpu.memory_space<vmem>>, vector<1x64xf32>
    %c97 = arith.constant 97 : index
    %c0_97 = arith.constant 0 : index
    %86 = vector.load %arg13[%c97, %c0_97] : memref<160x64xf32, #tpu.memory_space<vmem>>, vector<1x64xf32>
    %c98 = arith.constant 98 : index
    %c0_98 = arith.constant 0 : index
    %87 = vector.load %arg13[%c98, %c0_98] : memref<160x64xf32, #tpu.memory_space<vmem>>, vector<1x64xf32>
    %c99 = arith.constant 99 : index
    %c0_99 = arith.constant 0 : index
    %88 = vector.load %arg13[%c99, %c0_99] : memref<160x64xf32, #tpu.memory_space<vmem>>, vector<1x64xf32>
    %c100 = arith.constant 100 : index
    %c0_100 = arith.constant 0 : index
    %89 = vector.load %arg13[%c100, %c0_100] : memref<160x64xf32, #tpu.memory_space<vmem>>, vector<1x64xf32>
    %c128_101 = arith.constant 128 : index
    %c0_102 = arith.constant 0 : index
    %90 = vector.load %arg13[%c128_101, %c0_102] : memref<160x64xf32, #tpu.memory_space<vmem>>, vector<1x64xf32>
    %c129 = arith.constant 129 : index
    %c0_103 = arith.constant 0 : index
    %91 = vector.load %arg13[%c129, %c0_103] : memref<160x64xf32, #tpu.memory_space<vmem>>, vector<1x64xf32>
    %c130 = arith.constant 130 : index
    %c0_104 = arith.constant 0 : index
    %92 = vector.load %arg13[%c130, %c0_104] : memref<160x64xf32, #tpu.memory_space<vmem>>, vector<1x64xf32>
    %c131 = arith.constant 131 : index
    %c0_105 = arith.constant 0 : index
    %93 = vector.load %arg13[%c131, %c0_105] : memref<160x64xf32, #tpu.memory_space<vmem>>, vector<1x64xf32>
    %c132 = arith.constant 132 : index
    %c0_106 = arith.constant 0 : index
    %94 = vector.load %arg13[%c132, %c0_106] : memref<160x64xf32, #tpu.memory_space<vmem>>, vector<1x64xf32>
    %95 = tpu.concatenate %70, %71, %72, %73, %74, %75, %76, %77, %78, %79, %80, %81, %82, %83, %84, %85 in 1 : vector<1x64xf32>, vector<1x64xf32>, vector<1x64xf32>, vector<1x64xf32>, vector<1x64xf32>, vector<1x64xf32>, vector<1x64xf32>, vector<1x64xf32>, vector<1x64xf32>, vector<1x64xf32>, vector<1x64xf32>, vector<1x64xf32>, vector<1x64xf32>, vector<1x64xf32>, vector<1x64xf32>, vector<1x64xf32> -> vector<1x1024xf32>
    %96 = tpu.concatenate %86, %87, %88, %89, %90, %91, %92, %93, %94 in 1 : vector<1x64xf32>, vector<1x64xf32>, vector<1x64xf32>, vector<1x64xf32>, vector<1x64xf32>, vector<1x64xf32>, vector<1x64xf32>, vector<1x64xf32>, vector<1x64xf32> -> vector<1x576xf32>
    %97 = tpu.concatenate %95, %96 in 1 : vector<1x1024xf32>, vector<1x576xf32> -> vector<1x1600xf32>
    %cst_107 = arith.constant 0.000000e+00 : f32
    %98 = vector.broadcast %cst_107 : f32 to vector<7x1600xf32>
    %99 = tpu.concatenate %97, %98 in 0 : vector<1x1600xf32>, vector<7x1600xf32> -> vector<8x1600xf32>
    %c0_108 = arith.constant 0 : index
    %c0_109 = arith.constant 0 : index
    %100 = vector.load %arg6[%c0_108, %c0_109] : memref<1600x10xf32, #tpu.memory_space<vmem>>, vector<1600x10xf32>
    %cst_110 = arith.constant dense<0.000000e+00> : vector<8x10xf32>
    %101 = tpu.matmul %99, %100, %cst_110 {dimension_numbers = #tpu.dot_dimension_numbers<[1], [0], [0], [1], [0, 0, 1, 1], [], []>} : vector<8x1600xf32>, vector<1600x10xf32>, vector<8x10xf32> -> vector<8x10xf32>
    %102 = vector.extract_strided_slice %101 {offsets = [0, 0], sizes = [1, 10], strides = [1, 1]} : vector<8x10xf32> to vector<1x10xf32>
    %c0_111 = arith.constant 0 : index
    %c0_112 = arith.constant 0 : index
    %103 = vector.load %arg7[%c0_111, %c0_112] : memref<1x10xf32, #tpu.memory_space<vmem>>, vector<1x10xf32>
    %104 = arith.addf %102, %103 : vector<1x10xf32>
    %c0_113 = arith.constant 0 : index
    %c0_114 = arith.constant 0 : index
    %c0_115 = arith.constant 0 : index
    %105 = vector.load %arg8[%c0_113, %c0_114, %c0_115] : memref<1x1x10xf32, #tpu.memory_space<vmem>>, vector<1x1x10xf32>
    %106 = vector.shape_cast %105 : vector<1x1x10xf32> to vector<1x10xf32>
    %107 = vector.shape_cast %104 : vector<1x10xf32> to vector<1x1x10xf32>
    tpu.vector_store %arg8[%c0_113, %c0_114, %c0_115], %107 {strides = array<i32>} : memref<1x1x10xf32, #tpu.memory_space<vmem>>, vector<1x1x10xf32>,
    return
  }
  func.func @transform_0(%arg0: i32) -> (i32, i32, i32) {
    %c0_i32 = arith.constant 0 : i32
    %c0_i32_0 = arith.constant 0 : i32
    %c0_i32_1 = arith.constant 0 : i32
    return %arg0, %c0_i32, %c0_i32_0 : i32, i32, i32
  }
  func.func @transform_1(%arg0: i32) -> (i32, i32) {
    %c0_i32 = arith.constant 0 : i32
    %c0_i32_0 = arith.constant 0 : i32
    %c0_i32_1 = arith.constant 0 : i32
    return %c0_i32, %c0_i32_0 : i32, i32
  }
  func.func @transform_2(%arg0: i32) -> (i32, i32) {
    %c0_i32 = arith.constant 0 : i32
    %c0_i32_0 = arith.constant 0 : i32
    %c0_i32_1 = arith.constant 0 : i32
    return %c0_i32, %c0_i32_0 : i32, i32
  }
  func.func @transform_3(%arg0: i32) -> (i32, i32, i32) {
    %c0_i32 = arith.constant 0 : i32
    %c0_i32_0 = arith.constant 0 : i32
    %c0_i32_1 = arith.constant 0 : i32
    %c0_i32_2 = arith.constant 0 : i32
    return %c0_i32, %c0_i32_0, %c0_i32_1 : i32, i32, i32
  }
  func.func @transform_4(%arg0: i32) -> (i32, i32) {
    %c0_i32 = arith.constant 0 : i32
    %c0_i32_0 = arith.constant 0 : i32
    %c0_i32_1 = arith.constant 0 : i32
    return %c0_i32, %c0_i32_0 : i32, i32
  }
  func.func @transform_5(%arg0: i32) -> (i32, i32) {
    %c0_i32 = arith.constant 0 : i32
    %c0_i32_0 = arith.constant 0 : i32
    %c0_i32_1 = arith.constant 0 : i32
    return %c0_i32, %c0_i32_0 : i32, i32
  }
  func.func @transform_6(%arg0: i32) -> (i32, i32) {
    %c0_i32 = arith.constant 0 : i32
    %c0_i32_0 = arith.constant 0 : i32
    %c0_i32_1 = arith.constant 0 : i32
    return %c0_i32, %c0_i32_0 : i32, i32
  }
  func.func @transform_7(%arg0: i32) -> (i32, i32, i32) {
    %c0_i32 = arith.constant 0 : i32
    %c0_i32_0 = arith.constant 0 : i32
    %c0_i32_1 = arith.constant 0 : i32
    return %arg0, %c0_i32, %c0_i32_0 : i32, i32, i32
  }
}

</mosaic_0001>

<llo_original>
// kernel: net_forward.1
$region0: #{net_forward.1}
  #allocation0 [shape = 'u32[]', space=smem, size = 0x4, offset = 0x4, fixed_abs, tag = 'smem constant byte address 0x4 - core index']
  #allocation1 [shape = 'u32[144,128]{1,0:T(1,128)}', space=vmem, size = 0x12000, scoped, tag = 'internal scratch']
  #allocation2 [shape = 'f32[928,32]{1,0:T(8,128)}', space=vmem, size = 0x74000, scoped, tag = 'scratch operand']
  #allocation3 [shape = 'f32[448,32]{1,0:T(8,128)}', space=vmem, size = 0x38000, scoped, tag = 'scratch operand']
  #allocation4 [shape = 'bf16[432,160]{1,0:T(16,128)(2,1)}', space=vmem, size = 0x36000, scoped, tag = 'scratch operand']
  #allocation5 [shape = 'f32[352,64]{1,0:T(8,128)}', space=vmem, size = 0x2c000, scoped, tag = 'scratch operand']
  #allocation6 [shape = 'f32[160,64]{1,0:T(8,128)}', space=vmem, size = 0x14000, scoped, tag = 'scratch operand']
  %s0 = inlined_call_operand.vmem [shape: f32[2,896,32], index: 0, kind: input, shape index: {}]
  %s1 = inlined_call_operand.vmem [shape: f32[32,32], index: 1, kind: input, shape index: {}]
  %s2 = inlined_call_operand.vmem [shape: f32[1,32], index: 2, kind: input, shape index: {}]
  %s3 = inlined_call_operand.vmem [shape: bf16[5,160,64], index: 3, kind: input, shape index: {}]
  %s4 = inlined_call_operand.vmem [shape: f32[1,64], index: 4, kind: input, shape index: {}]
  %s5 = inlined_call_operand.vmem [shape: f32[1600,10], index: 5, kind: input, shape index: {}]
  %s6 = inlined_call_operand.vmem [shape: f32[1,10], index: 6, kind: input, shape index: {}]
  %s7 = inlined_call_operand.hbm [shape: f32[2,1,10], index: 7, kind: output, shape index: {}]
  %s8 = sld [smem:[#allocation0]]
  $region61: #{net_forward.1} parent=0
    _
  %s10 = ssub.s32 1, %s8
  %s11 = scalar_select 0, %s10, %s8
  $region1: #{net_forward.1} parent=0
    #allocation7 [shape = 'u8[1024]{0}', space=vmem, size = 0x400, scoped, tag = 'output window, operand 0']
    #allocation8 [shape = 's32[2]{0}', space=sflag, size = 0x8, scoped, tag = 'scoped memory for net_forward.1']
    %12 = vsyncpa [#allocation8], 0
    %s13 = scalar_lea.sflag [#allocation8], 1
    %14 = vsyncpa %s13, 0
    loop: start=0, step=1, limit=4
    $region2: #{net_forward.1} parent=1 // loop_pre_header
      _
    $region3: #{net_forward.1} parent=1 // loop_header
      %s16 = sphi 0, %s20
      %p17 = scmp.ge.s32.totalorder %s16, 4
      %s26 = sphi 0, %s28
      %s29 = sphi 0, %s26
      %s30 = sphi 0, %s29
      %s46 = sphi 0, %s30
      %s50 = sphi 0, %s50
      %s52 = sphi 0, %s50
      %s53 = sphi 0, %s52
      %s67 = sphi 0, %s53
      %s71 = sphi 0, %s71
      %s73 = sphi 0, %s71
      %s74 = sphi 0, %s73
      %s88 = sphi 0, %s74
      %s92 = sphi 0, %s92
      %s94 = sphi 0, %s92
      %s95 = sphi 0, %s94
      %s109 = sphi 0, %s95
      %s113 = sphi 0, %s113
      %s115 = sphi 0, %s113
      %s116 = sphi 0, %s115
      %s130 = sphi 0, %s116
      %s134 = sphi 0, %s134
      %s136 = sphi 0, %s134
      %s137 = sphi 0, %s136
      %s151 = sphi 0, %s137
      %s155 = sphi 0, %s155
      %s157 = sphi 0, %s155
      %s158 = sphi 0, %s157
      %s172 = sphi 0, %s158
      %s178 = sphi 0, %s180
      %s181 = sphi 0, %s178
      %s182 = sphi 0, %s181
      %s198 = sphi 0, %s182
    $region4: #{net_forward.1} parent=1 // loop_header_branch
      %19 = sbr.rel (%p17) target = $region8
    $region5: #{net_forward.1} parent=1 // loop_body
      %s21 = ssub.s32 %s16, 1
      %s22 = ssub.s32 %s16, 2
      %s23 = sadd.s32 %s16, 1
      %s24 = ssub.s32 %s16, %s23
      %p25 = scmp.eq.s32.totalorder %s24, 0
      %s27 = sadd.s32 %s26, 1
      %s28 = scalar_select %p25, %s26, %s27
      %p31 = pneg %p25
      %p32 = scmp.eq.s32.totalorder %s16, 1
      %p33 = por %p31, %p32
      %p34 = scmp.ne.s32.totalorder %s26, %s29
      %p35 = scmp.eq.s32.totalorder %s16, 0
      %p36 = por %p34, %p35
      %p37 = scmp.ne.s32.totalorder %s26, %s29
      %p38 = scmp.eq.s32.totalorder %s21, 1
      %p39 = por %p37, %p38
      %p40 = scmp.ne.s32.totalorder %s29, %s30
      %p41 = scmp.eq.s32.totalorder %s21, 0
      %p42 = por %p40, %p41
      %p43 = scmp.ne.s32.totalorder %s29, %s30
      %p44 = scmp.eq.s32.totalorder %s22, 1
      %p45 = por %p43, %p44
      %p47 = scmp.ne.s32.totalorder %s30, %s46
      %p48 = scmp.eq.s32.totalorder %s22, 0
      %p49 = por %p47, %p48
      %s51 = sadd.s32 %s50, 1
      %p54 = scmp.eq.s32.totalorder %s16, 1
      %p55 = scmp.ne.s32.totalorder %s50, %s52
      %p56 = scmp.eq.s32.totalorder %s16, 0
      %p57 = por %p55, %p56
      %p58 = scmp.ne.s32.totalorder %s50, %s52
      %p59 = scmp.eq.s32.totalorder %s21, 1
      %p60 = por %p58, %p59
      %p61 = scmp.ne.s32.totalorder %s52, %s53
      %p62 = scmp.eq.s32.totalorder %s21, 0
      %p63 = por %p61, %p62
      %p64 = scmp.ne.s32.totalorder %s52, %s53
      %p65 = scmp.eq.s32.totalorder %s22, 1
      %p66 = por %p64, %p65
      %p68 = scmp.ne.s32.totalorder %s53, %s67
      %p69 = scmp.eq.s32.totalorder %s22, 0
      %p70 = por %p68, %p69
      %s72 = sadd.s32 %s71, 1
      %p75 = scmp.eq.s32.totalorder %s16, 1
      %p76 = scmp.ne.s32.totalorder %s71, %s73
      %p77 = scmp.eq.s32.totalorder %s16, 0
      %p78 = por %p76, %p77
      %p79 = scmp.ne.s32.totalorder %s71, %s73
      %p80 = scmp.eq.s32.totalorder %s21, 1
      %p81 = por %p79, %p80
      %p82 = scmp.ne.s32.totalorder %s73, %s74
      %p83 = scmp.eq.s32.totalorder %s21, 0
      %p84 = por %p82, %p83
      %p85 = scmp.ne.s32.totalorder %s73, %s74
      %p86 = scmp.eq.s32.totalorder %s22, 1
      %p87 = por %p85, %p86
      %p89 = scmp.ne.s32.totalorder %s74, %s88
      %p90 = scmp.eq.s32.totalorder %s22, 0
      %p91 = por %p89, %p90
      %s93 = sadd.s32 %s92, 1
      %p96 = scmp.eq.s32.totalorder %s16, 1
      %p97 = scmp.ne.s32.totalorder %s92, %s94
      %p98 = scmp.eq.s32.totalorder %s16, 0
      %p99 = por %p97, %p98
      %p100 = scmp.ne.s32.totalorder %s92, %s94
      %p101 = scmp.eq.s32.totalorder %s21, 1
      %p102 = por %p100, %p101
      %p103 = scmp.ne.s32.totalorder %s94, %s95
      %p104 = scmp.eq.s32.totalorder %s21, 0
      %p105 = por %p103, %p104
      %p106 = scmp.ne.s32.totalorder %s94, %s95
      %p107 = scmp.eq.s32.totalorder %s22, 1
      %p108 = por %p106, %p107
      %p110 = scmp.ne.s32.totalorder %s95, %s109
      %p111 = scmp.eq.s32.totalorder %s22, 0
      %p112 = por %p110, %p111
      %s114 = sadd.s32 %s113, 1
      %p117 = scmp.eq.s32.totalorder %s16, 1
      %p118 = scmp.ne.s32.totalorder %s113, %s115
      %p119 = scmp.eq.s32.totalorder %s16, 0
      %p120 = por %p118, %p119
      %p121 = scmp.ne.s32.totalorder %s113, %s115
      %p122 = scmp.eq.s32.totalorder %s21, 1
      %p123 = por %p121, %p122
      %p124 = scmp.ne.s32.totalorder %s115, %s116
      %p125 = scmp.eq.s32.totalorder %s21, 0
      %p126 = por %p124, %p125
      %p127 = scmp.ne.s32.totalorder %s115, %s116
      %p128 = scmp.eq.s32.totalorder %s22, 1
      %p129 = por %p127, %p128
      %p131 = scmp.ne.s32.totalorder %s116, %s130
      %p132 = scmp.eq.s32.totalorder %s22, 0
      %p133 = por %p131, %p132
      %s135 = sadd.s32 %s134, 1
      %p138 = scmp.eq.s32.totalorder %s16, 1
      %p139 = scmp.ne.s32.totalorder %s134, %s136
      %p140 = scmp.eq.s32.totalorder %s16, 0
      %p141 = por %p139, %p140
      %p142 = scmp.ne.s32.totalorder %s134, %s136
      %p143 = scmp.eq.s32.totalorder %s21, 1
      %p144 = por %p142, %p143
      %p145 = scmp.ne.s32.totalorder %s136, %s137
      %p146 = scmp.eq.s32.totalorder %s21, 0
      %p147 = por %p145, %p146
      %p148 = scmp.ne.s32.totalorder %s136, %s137
      %p149 = scmp.eq.s32.totalorder %s22, 1
      %p150 = por %p148, %p149
      %p152 = scmp.ne.s32.totalorder %s137, %s151
      %p153 = scmp.eq.s32.totalorder %s22, 0
      %p154 = por %p152, %p153
      %s156 = sadd.s32 %s155, 1
      %p159 = scmp.eq.s32.totalorder %s16, 1
      %p160 = scmp.ne.s32.totalorder %s155, %s157
      %p161 = scmp.eq.s32.totalorder %s16, 0
      %p162 = por %p160, %p161
      %p163 = scmp.ne.s32.totalorder %s155, %s157
      %p164 = scmp.eq.s32.totalorder %s21, 1
      %p165 = por %p163, %p164
      %p166 = scmp.ne.s32.totalorder %s157, %s158
      %p167 = scmp.eq.s32.totalorder %s21, 0
      %p168 = por %p166, %p167
      %p169 = scmp.ne.s32.totalorder %s157, %s158
      %p170 = scmp.eq.s32.totalorder %s22, 1
      %p171 = por %p169, %p170
      %p173 = scmp.ne.s32.totalorder %s158, %s172
      %p174 = scmp.eq.s32.totalorder %s22, 0
      %p175 = por %p173, %p174
      %s176 = ssub.s32 %s16, %s23
      %p177 = scmp.eq.s32.totalorder %s176, 0
      %s179 = sadd.s32 %s178, 1
      %s180 = scalar_select %p177, %s178, %s179
      %p183 = pneg %p177
      %p184 = scmp.eq.s32.totalorder %s16, 1
      %p185 = por %p183, %p184
      %p186 = scmp.ne.s32.totalorder %s178, %s181
      %p187 = scmp.eq.s32.totalorder %s16, 0
      %p188 = por %p186, %p187
      %p189 = scmp.ne.s32.totalorder %s178, %s181
      %p190 = scmp.eq.s32.totalorder %s21, 1
      %p191 = por %p189, %p190
      %p192 = scmp.ne.s32.totalorder %s181, %s182
      %p193 = scmp.eq.s32.totalorder %s21, 0
      %p194 = por %p192, %p193
      %p195 = scmp.ne.s32.totalorder %s181, %s182
      %p196 = scmp.eq.s32.totalorder %s22, 1
      %p197 = por %p195, %p196
      %p199 = scmp.ne.s32.totalorder %s182, %s198
      %p200 = scmp.eq.s32.totalorder %s22, 0
      %p201 = por %p199, %p200
      %p202 = scmp.le.s32.totalorder 1, %s16
      %p203 = scmp.lt.s32.totalorder %s16, 3
      %p204 = pnand %p202, %p203
      %p205 = pneg %p204
      // Predicated region
      $region9: #{net_forward.1} parent=5 // pred_check
        _
      $region10: #{net_forward.1} parent=5 // pred_check_branch
        %207 = sbr.rel (%p204) target = $region12
      $region11: #{net_forward.1} parent=5 // pred_region
        %s208 = ssub.s32 %s16, 1
        // Predicated region
        $region13: #{net_forward.1} parent=11 // pred_check
          %p209 = pneg %p63
        $region14: #{net_forward.1} parent=11 // pred_check_branch
          %211 = sbr.rel (%p209) target = $region16
        $region15: #{net_forward.1} parent=11 // pred_region
          _
        $region16: #{net_forward.1} parent=11 // pred_fallthru
          _
        // Predicated region
        $region17: #{net_forward.1} parent=11 // pred_check
          %p212 = pneg %p84
        $region18: #{net_forward.1} parent=11 // pred_check_branch
          %214 = sbr.rel (%p212) target = $region20
        $region19: #{net_forward.1} parent=11 // pred_region
          _
        $region20: #{net_forward.1} parent=11 // pred_fallthru
          _
        // Predicated region
        $region21: #{net_forward.1} parent=11 // pred_check
          %p215 = pneg %p105
        $region22: #{net_forward.1} parent=11 // pred_check_branch
          %217 = sbr.rel (%p215) target = $region24
        $region23: #{net_forward.1} parent=11 // pred_region
          _
        $region24: #{net_forward.1} parent=11 // pred_fallthru
          _
        // Predicated region
        $region25: #{net_forward.1} parent=11 // pred_check
          %p218 = pneg %p126
        $region26: #{net_forward.1} parent=11 // pred_check_branch
          %220 = sbr.rel (%p218) target = $region28
        $region27: #{net_forward.1} parent=11 // pred_region
          _
        $region28: #{net_forward.1} parent=11 // pred_fallthru
          _
        // Predicated region
        $region29: #{net_forward.1} parent=11 // pred_check
          %p221 = pneg %p147
        $region30: #{net_forward.1} parent=11 // pred_check_branch
          %223 = sbr.rel (%p221) target = $region32
        $region31: #{net_forward.1} parent=11 // pred_region
          _
        $region32: #{net_forward.1} parent=11 // pred_fallthru
          _
        // Predicated region
        $region33: #{net_forward.1} parent=11 // pred_check
          %p224 = pneg %p168
        $region34: #{net_forward.1} parent=11 // pred_check_branch
          %226 = sbr.rel (%p224) target = $region36
        $region35: #{net_forward.1} parent=11 // pred_region
          _
        $region36: #{net_forward.1} parent=11 // pred_fallthru
          _
      $region12: #{net_forward.1} parent=5 // pred_fallthru
        _
      %p227 = scmp.lt.s32.totalorder %s16, 2
      // Predicated region
      $region37: #{net_forward.1} parent=5 // pred_check
        %p228 = pneg %p227
      $region38: #{net_forward.1} parent=5 // pred_check_branch
        %230 = sbr.rel (%p228) target = $region40
      $region39: #{net_forward.1} parent=5 // pred_region
        // Predicated region
        $region41: #{net_forward.1} parent=39 // pred_check
          %p231 = pneg %p36
        $region42: #{net_forward.1} parent=39 // pred_check_branch
          %233 = sbr.rel (%p231) target = $region44
        $region43: #{net_forward.1} parent=39 // pred_region
          %p234 = scmp.lt.s32.totalorder %s16, 1
          %s235 = scalar_select %p234, %s16, 1
          %s236 = smul.addr %s235, 112
          %s237 = smul.addr %s236, 8
          %s238 = scalar_lea.vmem %s0, %s237
        $region44: #{net_forward.1} parent=39 // pred_fallthru
          _
      $region40: #{net_forward.1} parent=5 // pred_fallthru
        _
      %p239 = scmp.le.s32.totalorder 1, %s16
      %p240 = scmp.lt.s32.totalorder %s16, 3
      %p241 = pnand %p239, %p240
      %p242 = pneg %p241
      // Predicated region
      $region45: #{net_forward.1} parent=5 // pred_check
        _
      $region46: #{net_forward.1} parent=5 // pred_check_branch
        %244 = sbr.rel (%p241) target = $region48
      $region47: #{net_forward.1} parent=5 // pred_region
        %s245 = ssub.s32 %s16, 1
        %p246 = scmp.lt.s32.totalorder %s21, 1
        %s247 = scalar_select %p246, %s21, 1
        %s248 = smul.addr %s247, 112
        %s249 = smul.addr %s248, 8
        %s250 = scalar_lea.vmem %s0, %s249
        %p251 = pneg %p42
        %p252 = pneg %p39
        %p253 = pneg %p63
        %p254 = pneg %p60
        %p255 = pneg %p84
        %p256 = pneg %p81
        %p257 = pneg %p105
        %p258 = pneg %p102
        %p259 = pneg %p126
        %p260 = pneg %p123
        %p261 = pneg %p147
        %p262 = pneg %p144
        %p263 = pneg %p168
        %p264 = pneg %p165
        %p265 = pneg %p194
        %p266 = pneg %p191
        %s267 = sand.u32 %s181, 1
        %s268 = scalar_lea.sflag [#allocation8], %s267
        %s269 = sand.u32 %s181, 1
        %s270 = scalar_lea.vmem [#allocation7], %s269
        %p271 = scmp.lt.s32.totalorder %s21, 1
        %s272 = scalar_select %p271, %s21, 1
        %s273 = smul.addr %s272, 112
        %s274 = smul.addr %s273, 8
        %s275 = scalar_lea.vmem %s0, %s274
        %v277 = vld [vmem:[%s275] sm:$0xff]
        %v278 = vld [vmem:[%s275 + $0x8] sm:$0xff]
        %v279 = vld [vmem:[%s275 + $0x10] sm:$0xff]
        %v280 = vld [vmem:[%s275 + $0x18] sm:$0xff]
        %v281 = vld [vmem:[%s275 + $0x20] sm:$0xff]
        %v282 = vld [vmem:[%s275 + $0x28] sm:$0xff]
        %v283 = vld [vmem:[%s275 + $0x30] sm:$0xff]
        %v284 = vld [vmem:[%s275 + $0x38] sm:$0xff]
        %v285 = vld [vmem:[%s275 + $0x40] sm:$0xff]
        %v286 = vld [vmem:[%s275 + $0x48] sm:$0xff]
        %v287 = vld [vmem:[%s275 + $0x50] sm:$0xff]
        %v288 = vld [vmem:[%s275 + $0x58] sm:$0xff]
        %v289 = vld [vmem:[%s275 + $0x60] sm:$0xff]
        %v290 = vld [vmem:[%s275 + $0x68] sm:$0xff]
        %v291 = vld [vmem:[%s275 + $0x70] sm:$0xff]
        %v292 = vld [vmem:[%s275 + $0x78] sm:$0xff]
        %v293 = vld [vmem:[%s275 + $0x80] sm:$0xff]
        %v294 = vld [vmem:[%s275 + $0x88] sm:$0xff]
        %v295 = vld [vmem:[%s275 + $0x90] sm:$0xff]
        %v296 = vld [vmem:[%s275 + $0x98] sm:$0xff]
        %v297 = vld [vmem:[%s275 + $0xa0] sm:$0xff]
        %v298 = vld [vmem:[%s275 + $0xa8] sm:$0xff]
        %v299 = vld [vmem:[%s275 + $0xb0] sm:$0xff]
        %v300 = vld [vmem:[%s275 + $0xb8] sm:$0xff]
        %v301 = vld [vmem:[%s275 + $0xc0] sm:$0xff]
        %v302 = vld [vmem:[%s275 + $0xc8] sm:$0xff]
        %v303 = vld [vmem:[%s275 + $0xd0] sm:$0xff]
        %v304 = vld [vmem:[%s275 + $0xd8] sm:$0xff]
        %v305 = vld [vmem:[%s275 + $0xe0] sm:$0xff]
        %v306 = vld [vmem:[%s275 + $0xe8] sm:$0xff]
        %v307 = vld [vmem:[%s275 + $0xf0] sm:$0xff]
        %v308 = vld [vmem:[%s275 + $0xf8] sm:$0xff]
        %v309 = vld [vmem:[%s275 + $0x100] sm:$0xff]
        %v310 = vld [vmem:[%s275 + $0x108] sm:$0xff]
        %v311 = vld [vmem:[%s275 + $0x110] sm:$0xff]
        %v312 = vld [vmem:[%s275 + $0x118] sm:$0xff]
        %v313 = vld [vmem:[%s275 + $0x120] sm:$0xff]
        %v314 = vld [vmem:[%s275 + $0x128] sm:$0xff]
        %v315 = vld [vmem:[%s275 + $0x130] sm:$0xff]
        %v316 = vld [vmem:[%s275 + $0x138] sm:$0xff]
        %v317 = vld [vmem:[%s275 + $0x140] sm:$0xff]
        %v318 = vld [vmem:[%s275 + $0x148] sm:$0xff]
        %v319 = vld [vmem:[%s275 + $0x150] sm:$0xff]
        %v320 = vld [vmem:[%s275 + $0x158] sm:$0xff]
        %v321 = vld [vmem:[%s275 + $0x160] sm:$0xff]
        %v322 = vld [vmem:[%s275 + $0x168] sm:$0xff]
        %v323 = vld [vmem:[%s275 + $0x170] sm:$0xff]
        %v324 = vld [vmem:[%s275 + $0x178] sm:$0xff]
        %v325 = vld [vmem:[%s275 + $0x180] sm:$0xff]
        %v326 = vld [vmem:[%s275 + $0x188] sm:$0xff]
        %v327 = vld [vmem:[%s275 + $0x190] sm:$0xff]
        %v328 = vld [vmem:[%s275 + $0x198] sm:$0xff]
        %v329 = vld [vmem:[%s275 + $0x1a0] sm:$0xff]
        %v330 = vld [vmem:[%s275 + $0x1a8] sm:$0xff]
        %v331 = vld [vmem:[%s275 + $0x1b0] sm:$0xff]
        %v332 = vld [vmem:[%s275 + $0x1b8] sm:$0xff]
        %v333 = vld [vmem:[%s275 + $0x1c0] sm:$0xff]
        %v334 = vld [vmem:[%s275 + $0x1c8] sm:$0xff]
        %v335 = vld [vmem:[%s275 + $0x1d0] sm:$0xff]
        %v336 = vld [vmem:[%s275 + $0x1d8] sm:$0xff]
        %v337 = vld [vmem:[%s275 + $0x1e0] sm:$0xff]
        %v338 = vld [vmem:[%s275 + $0x1e8] sm:$0xff]
        %v339 = vld [vmem:[%s275 + $0x1f0] sm:$0xff]
        %v340 = vld [vmem:[%s275 + $0x1f8] sm:$0xff]
        %v341 = vld [vmem:[%s275 + $0x200] sm:$0xff]
        %v342 = vld [vmem:[%s275 + $0x208] sm:$0xff]
        %v343 = vld [vmem:[%s275 + $0x210] sm:$0xff]
        %v344 = vld [vmem:[%s275 + $0x218] sm:$0xff]
        %v345 = vld [vmem:[%s275 + $0x220] sm:$0xff]
        %v346 = vld [vmem:[%s275 + $0x228] sm:$0xff]
        %v347 = vld [vmem:[%s275 + $0x230] sm:$0xff]
        %v348 = vld [vmem:[%s275 + $0x238] sm:$0xff]
        %v349 = vld [vmem:[%s275 + $0x240] sm:$0xff]
        %v350 = vld [vmem:[%s275 + $0x248] sm:$0xff]
        %v351 = vld [vmem:[%s275 + $0x250] sm:$0xff]
        %v352 = vld [vmem:[%s275 + $0x258] sm:$0xff]
        %v353 = vld [vmem:[%s275 + $0x260] sm:$0xff]
        %v354 = vld [vmem:[%s275 + $0x268] sm:$0xff]
        %v355 = vld [vmem:[%s275 + $0x270] sm:$0xff]
        %v356 = vld [vmem:[%s275 + $0x278] sm:$0xff]
        %v357 = vld [vmem:[%s275 + $0x280] sm:$0xff]
        %v358 = vld [vmem:[%s275 + $0x288] sm:$0xff]
        %v359 = vld [vmem:[%s275 + $0x290] sm:$0xff]
        %v360 = vld [vmem:[%s275 + $0x298] sm:$0xff]
        %v361 = vld [vmem:[%s275 + $0x2a0] sm:$0xff]
        %v362 = vld [vmem:[%s275 + $0x2a8] sm:$0xff]
        %v363 = vld [vmem:[%s275 + $0x2b0] sm:$0xff]
        %v364 = vld [vmem:[%s275 + $0x2b8] sm:$0xff]
        %v365 = vld [vmem:[%s275 + $0x2c0] sm:$0xff]
        %v366 = vld [vmem:[%s275 + $0x2c8] sm:$0xff]
        %v367 = vld [vmem:[%s275 + $0x2d0] sm:$0xff]
        %v368 = vld [vmem:[%s275 + $0x2d8] sm:$0xff]
        %v369 = vld [vmem:[%s275 + $0x2e0] sm:$0xff]
        %v370 = vld [vmem:[%s275 + $0x2e8] sm:$0xff]
        %v371 = vld [vmem:[%s275 + $0x2f0] sm:$0xff]
        %v372 = vld [vmem:[%s275 + $0x2f8] sm:$0xff]
        %v373 = vld [vmem:[%s275 + $0x300] sm:$0xff]
        %v374 = vld [vmem:[%s275 + $0x308] sm:$0xff]
        %v375 = vld [vmem:[%s275 + $0x310] sm:$0xff]
        %v376 = vld [vmem:[%s275 + $0x318] sm:$0xff]
        %v377 = vld [vmem:[%s275 + $0x320] sm:$0xff]
        %v378 = vld [vmem:[%s275 + $0x328] sm:$0xff]
        %v379 = vld [vmem:[%s275 + $0x330] sm:$0xff]
        %v380 = vld [vmem:[%s275 + $0x338] sm:$0xff]
        %v381 = vld [vmem:[%s275 + $0x340] sm:$0xff]
        %v382 = vld [vmem:[%s275 + $0x348] sm:$0xff]
        %v383 = vld [vmem:[%s275 + $0x350] sm:$0xff]
        %v384 = vld [vmem:[%s275 + $0x358] sm:$0xff]
        %v385 = vld [vmem:[%s275 + $0x360] sm:$0xff]
        %v386 = vld [vmem:[%s275 + $0x368] sm:$0xff]
        %v387 = vld [vmem:[%s275 + $0x370] sm:$0xff]
        %v388 = vld [vmem:[%s275 + $0x378] sm:$0xff]
        %v389 = vld [vmem:[%s1] sm:$0xff]
        %v390 = vld [vmem:[%s1 + $0x8] sm:$0xff]
        %v391 = vld [vmem:[%s1 + $0x10] sm:$0xff]
        %v392 = vld [vmem:[%s1 + $0x18] sm:$0xff]
        %v393 = vld [vmem:[%s2] sm:$0x1]
        %v395 = vlaneseq
        %v396 = vshrl.u32 %v395, 7
        %v397 = vsub.s32 0, %v396
        %v398 = vrot.slane %v393, %v397
        %vm400 = vcmask 261120
        %v402 = vsel %vm400, %v277, 0
        %v405 = vsel %vm400, %v278, 0
        %v408 = vsel %vm400, %v279, 0
        %v411 = vsel %vm400, %v280, 0
        %v414 = vsel %vm400, %v281, 0
        %v417 = vsel %vm400, %v282, 0
        %v420 = vsel %vm400, %v283, 0
        %v423 = vsel %vm400, %v284, 0
        %v426 = vsel %vm400, %v285, 0
        %v429 = vsel %vm400, %v286, 0
        %v432 = vsel %vm400, %v287, 0
        %v435 = vsel %vm400, %v288, 0
        %v438 = vsel %vm400, %v289, 0
        %v441 = vsel %vm400, %v290, 0
        %v444 = vsel %vm400, %v291, 0
        %v447 = vsel %vm400, %v292, 0
        %v450 = vsel %vm400, %v293, 0
        %v453 = vsel %vm400, %v294, 0
        %v456 = vsel %vm400, %v295, 0
        %v459 = vsel %vm400, %v296, 0
        %v462 = vsel %vm400, %v297, 0
        %v465 = vsel %vm400, %v298, 0
        %v468 = vsel %vm400, %v299, 0
        %v471 = vsel %vm400, %v300, 0
        %v474 = vsel %vm400, %v301, 0
        %v477 = vsel %vm400, %v302, 0
        %v480 = vsel %vm400, %v303, 0
        %v483 = vsel %vm400, %v304, 0
        %v486 = vsel %vm400, %v305, 0
        %v489 = vsel %vm400, %v306, 0
        %v492 = vsel %vm400, %v307, 0
        %v495 = vsel %vm400, %v308, 0
        %v498 = vsel %vm400, %v309, 0
        %v501 = vsel %vm400, %v310, 0
        %v504 = vsel %vm400, %v311, 0
        %v507 = vsel %vm400, %v312, 0
        %v510 = vsel %vm400, %v313, 0
        %v513 = vsel %vm400, %v314, 0
        %v516 = vsel %vm400, %v315, 0
        %v519 = vsel %vm400, %v316, 0
        %v522 = vsel %vm400, %v317, 0
        %v525 = vsel %vm400, %v318, 0
        %v528 = vsel %vm400, %v319, 0
        %v531 = vsel %vm400, %v320, 0
        %v534 = vsel %vm400, %v321, 0
        %v537 = vsel %vm400, %v322, 0
        %v540 = vsel %vm400, %v323, 0
        %v543 = vsel %vm400, %v324, 0
        %v546 = vsel %vm400, %v325, 0
        %v549 = vsel %vm400, %v326, 0
        %v552 = vsel %vm400, %v327, 0
        %v555 = vsel %vm400, %v328, 0
        %v558 = vsel %vm400, %v329, 0
        %v561 = vsel %vm400, %v330, 0
        %v564 = vsel %vm400, %v331, 0
        %v567 = vsel %vm400, %v332, 0
        %v570 = vsel %vm400, %v333, 0
        %v573 = vsel %vm400, %v334, 0
        %v576 = vsel %vm400, %v335, 0
        %v579 = vsel %vm400, %v336, 0
        %v582 = vsel %vm400, %v337, 0
        %v585 = vsel %vm400, %v338, 0
        %v588 = vsel %vm400, %v339, 0
        %v591 = vsel %vm400, %v340, 0
        %v594 = vsel %vm400, %v341, 0
        %v597 = vsel %vm400, %v342, 0
        %v600 = vsel %vm400, %v343, 0
        %v603 = vsel %vm400, %v344, 0
        %v606 = vsel %vm400, %v345, 0
        %v609 = vsel %vm400, %v346, 0
        %v612 = vsel %vm400, %v347, 0
        %v615 = vsel %vm400, %v348, 0
        %v618 = vsel %vm400, %v349, 0
        %v621 = vsel %vm400, %v350, 0
        %v624 = vsel %vm400, %v351, 0
        %v627 = vsel %vm400, %v352, 0
        %v630 = vsel %vm400, %v353, 0
        %v633 = vsel %vm400, %v354, 0
        %v636 = vsel %vm400, %v355, 0
        %v639 = vsel %vm400, %v356, 0
        %v642 = vsel %vm400, %v357, 0
        %v645 = vsel %vm400, %v358, 0
        %v648 = vsel %vm400, %v359, 0
        %v651 = vsel %vm400, %v360, 0
        %v654 = vsel %vm400, %v361, 0
        %v657 = vsel %vm400, %v362, 0
        %v660 = vsel %vm400, %v363, 0
        %v663 = vsel %vm400, %v364, 0
        %v666 = vsel %vm400, %v365, 0
        %v669 = vsel %vm400, %v366, 0
        %v672 = vsel %vm400, %v367, 0
        %v675 = vsel %vm400, %v368, 0
        %v678 = vsel %vm400, %v369, 0
        %v681 = vsel %vm400, %v370, 0
        %v684 = vsel %vm400, %v371, 0
        %v687 = vsel %vm400, %v372, 0
        %v690 = vsel %vm400, %v373, 0
        %v693 = vsel %vm400, %v374, 0
        %v696 = vsel %vm400, %v375, 0
        %v699 = vsel %vm400, %v376, 0
        %v702 = vsel %vm400, %v377, 0
        %v705 = vsel %vm400, %v378, 0
        %v708 = vsel %vm400, %v379, 0
        %v711 = vsel %vm400, %v380, 0
        %v714 = vsel %vm400, %v381, 0
        %v717 = vsel %vm400, %v382, 0
        %v720 = vsel %vm400, %v383, 0
        %v723 = vsel %vm400, %v384, 0
        %v726 = vsel %vm400, %v385, 0
        %v729 = vsel %vm400, %v386, 0
        %v732 = vsel %vm400, %v387, 0
        %v735 = vsel %vm400, %v388, 0
        %737 = vmatprep.subr.mxu0 0.0
        %738 = vmatpush1.msra.mxu0 %v389
        %739 = vmatprep.subr.mxu0 0.0
        %740 = vmatpush1.msra.mxu0 %v390
        %741 = vmatprep.subr.mxu0 0.0
        %742 = vmatpush1.msra.mxu0 %v391
        %743 = vmatprep.subr.mxu0 0.0
        %744 = vmatpush1.msra.mxu0 %v392
        %745 = vmatprep.subr.mxu0 0.0
        %746 = vmatpush1.msra.mxu0 0.0
        %747 = vmatprep.subr.mxu0 0.0
        %748 = vmatpush1.msra.mxu0 0.0
        %749 = vmatprep.subr.mxu0 0.0
        %750 = vmatpush1.msra.mxu0 0.0
        %751 = vmatprep.subr.mxu0 0.0
        %752 = vmatpush1.msra.mxu0 0.0
        %753 = vmatprep.subr.mxu0 0.0
        %754 = vmatpush1.msra.mxu0 0.0
        %755 = vmatprep.subr.mxu0 0.0
        %756 = vmatpush1.msra.mxu0 0.0
        %757 = vmatprep.subr.mxu0 0.0
        %758 = vmatpush1.msra.mxu0 0.0
        %759 = vmatprep.subr.mxu0 0.0
        %760 = vmatpush1.msra.mxu0 0.0
        %761 = vmatprep.subr.mxu0 0.0
        %762 = vmatpush1.msra.mxu0 0.0
        %763 = vmatprep.subr.mxu0 0.0
        %764 = vmatpush1.msra.mxu0 0.0
        %765 = vmatprep.subr.mxu0 0.0
        %766 = vmatpush1.msra.mxu0 0.0
        %767 = vmatprep.subr.mxu0 0.0
        %768 = vmatpush1.msra.mxu0 0.0
        %769 = vmatprep.subr.mxu0 0.0
        %770 = vmatpush1.msra.mxu0 0.0
        %771 = vmatprep.subr.mxu0 0.0
        %772 = vmatpush1.msra.mxu0 0.0
        %773 = vmatprep.subr.mxu0 0.0
        %774 = vmatpush1.msra.mxu0 0.0
        %775 = vmatprep.subr.mxu0 0.0
        %776 = vmatpush1.msra.mxu0 0.0
        %777 = vmatprep.subr.mxu0 0.0
        %778 = vmatpush1.msra.mxu0 0.0
        %779 = vmatprep.subr.mxu0 0.0
        %780 = vmatpush1.msra.mxu0 0.0
        %781 = vmatprep.subr.mxu0 0.0
        %782 = vmatpush1.msra.mxu0 0.0
        %783 = vmatprep.subr.mxu0 0.0
        %784 = vmatpush1.msra.mxu0 0.0
        %785 = vmatprep.subr.mxu0 0.0
        %786 = vmatpush1.msra.mxu0 0.0
        %787 = vmatprep.subr.mxu0 0.0
        %788 = vmatpush1.msra.mxu0 0.0
        %789 = vmatprep.subr.mxu0 0.0
        %790 = vmatpush1.msra.mxu0 0.0
        %791 = vmatprep.subr.mxu0 0.0
        %792 = vmatpush1.msra.mxu0 0.0
        %793 = vmatprep.subr.mxu0 0.0
        %794 = vmatpush1.msra.mxu0 0.0
        %795 = vmatprep.subr.mxu0 0.0
        %796 = vmatpush1.msra.mxu0 0.0
        %797 = vmatprep.subr.mxu0 0.0
        %798 = vmatpush1.msra.mxu0 0.0
        %799 = vmatprep.subr.mxu0 0.0
        %800 = vmatpush1.msra.mxu0 0.0
        %801 = vmatprep.mubr.f32.mxu0 0.0
        %802 = vmatmul.mubr.f32.gmra.mrb[0].mxu0 %v402
        %v803 = vpop.f32.mrb[0].mxu0
        %v804 = vadd.f32 %v398, %v803
        %v805 = vpop.f32.mrb[0].mxu0
        %806 = vmatprep.mubr.f32.mxu0 0.0
        %807 = vmatmul.mubr.f32.gmra.mrb[0].mxu0 %v405
        %v808 = vpop.f32.mrb[0].mxu0
        %v809 = vadd.f32 %v398, %v808
        %v810 = vpop.f32.mrb[0].mxu0
        %811 = vmatprep.mubr.f32.mxu0 0.0
        %812 = vmatmul.mubr.f32.gmra.mrb[0].mxu0 %v408
        %v813 = vpop.f32.mrb[0].mxu0
        %v814 = vadd.f32 %v398, %v813
        %v815 = vpop.f32.mrb[0].mxu0
        %816 = vmatprep.mubr.f32.mxu0 0.0
        %817 = vmatmul.mubr.f32.gmra.mrb[0].mxu0 %v411
        %v818 = vpop.f32.mrb[0].mxu0
        %v819 = vadd.f32 %v398, %v818
        %v820 = vpop.f32.mrb[0].mxu0
        %821 = vmatprep.mubr.f32.mxu0 0.0
        %822 = vmatmul.mubr.f32.gmra.mrb[0].mxu0 %v414
        %v823 = vpop.f32.mrb[0].mxu0
        %v824 = vadd.f32 %v398, %v823
        %v825 = vpop.f32.mrb[0].mxu0
        %826 = vmatprep.mubr.f32.mxu0 0.0
        %827 = vmatmul.mubr.f32.gmra.mrb[0].mxu0 %v417
        %v828 = vpop.f32.mrb[0].mxu0
        %v829 = vadd.f32 %v398, %v828
        %v830 = vpop.f32.mrb[0].mxu0
        %831 = vmatprep.mubr.f32.mxu0 0.0
        %832 = vmatmul.mubr.f32.gmra.mrb[0].mxu0 %v420
        %v833 = vpop.f32.mrb[0].mxu0
        %v834 = vadd.f32 %v398, %v833
        %v835 = vpop.f32.mrb[0].mxu0
        %836 = vmatprep.mubr.f32.mxu0 0.0
        %837 = vmatmul.mubr.f32.gmra.mrb[0].mxu0 %v423
        %v838 = vpop.f32.mrb[0].mxu0
        %v839 = vadd.f32 %v398, %v838
        %v840 = vpop.f32.mrb[0].mxu0
        %841 = vmatprep.mubr.f32.mxu0 0.0
        %842 = vmatmul.mubr.f32.gmra.mrb[0].mxu0 %v426
        %v843 = vpop.f32.mrb[0].mxu0
        %v844 = vadd.f32 %v398, %v843
        %v845 = vpop.f32.mrb[0].mxu0
        %846 = vmatprep.mubr.f32.mxu0 0.0
        %847 = vmatmul.mubr.f32.gmra.mrb[0].mxu0 %v429
        %v848 = vpop.f32.mrb[0].mxu0
        %v849 = vadd.f32 %v398, %v848
        %v850 = vpop.f32.mrb[0].mxu0
        %851 = vmatprep.mubr.f32.mxu0 0.0
        %852 = vmatmul.mubr.f32.gmra.mrb[0].mxu0 %v432
        %v853 = vpop.f32.mrb[0].mxu0
        %v854 = vadd.f32 %v398, %v853
        %v855 = vpop.f32.mrb[0].mxu0
        %856 = vmatprep.mubr.f32.mxu0 0.0
        %857 = vmatmul.mubr.f32.gmra.mrb[0].mxu0 %v435
        %v858 = vpop.f32.mrb[0].mxu0
        %v859 = vadd.f32 %v398, %v858
        %v860 = vpop.f32.mrb[0].mxu0
        %861 = vmatprep.mubr.f32.mxu0 0.0
        %862 = vmatmul.mubr.f32.gmra.mrb[0].mxu0 %v438
        %v863 = vpop.f32.mrb[0].mxu0
        %v864 = vadd.f32 %v398, %v863
        %v865 = vpop.f32.mrb[0].mxu0
        %866 = vmatprep.mubr.f32.mxu0 0.0
        %867 = vmatmul.mubr.f32.gmra.mrb[0].mxu0 %v441
        %v868 = vpop.f32.mrb[0].mxu0
        %v869 = vadd.f32 %v398, %v868
        %v870 = vpop.f32.mrb[0].mxu0
        %871 = vmatprep.mubr.f32.mxu0 0.0
        %872 = vmatmul.mubr.f32.gmra.mrb[0].mxu0 %v444
        %v873 = vpop.f32.mrb[0].mxu0
        %v874 = vadd.f32 %v398, %v873
        %v875 = vpop.f32.mrb[0].mxu0
        %876 = vmatprep.mubr.f32.mxu0 0.0
        %877 = vmatmul.mubr.f32.gmra.mrb[0].mxu0 %v447
        %v878 = vpop.f32.mrb[0].mxu0
        %v879 = vadd.f32 %v398, %v878
        %v880 = vpop.f32.mrb[0].mxu0
        %881 = vmatprep.mubr.f32.mxu0 0.0
        %882 = vmatmul.mubr.f32.gmra.mrb[0].mxu0 %v450
        %v883 = vpop.f32.mrb[0].mxu0
        %v884 = vadd.f32 %v398, %v883
        %v885 = vpop.f32.mrb[0].mxu0
        %886 = vmatprep.mubr.f32.mxu0 0.0
        %887 = vmatmul.mubr.f32.gmra.mrb[0].mxu0 %v453
        %v888 = vpop.f32.mrb[0].mxu0
        %v889 = vadd.f32 %v398, %v888
        %v890 = vpop.f32.mrb[0].mxu0
        %891 = vmatprep.mubr.f32.mxu0 0.0
        %892 = vmatmul.mubr.f32.gmra.mrb[0].mxu0 %v456
        %v893 = vpop.f32.mrb[0].mxu0
        %v894 = vadd.f32 %v398, %v893
        %v895 = vpop.f32.mrb[0].mxu0
        %896 = vmatprep.mubr.f32.mxu0 0.0
        %897 = vmatmul.mubr.f32.gmra.mrb[0].mxu0 %v459
        %v898 = vpop.f32.mrb[0].mxu0
        %v899 = vadd.f32 %v398, %v898
        %v900 = vpop.f32.mrb[0].mxu0
        %901 = vmatprep.mubr.f32.mxu0 0.0
        %902 = vmatmul.mubr.f32.gmra.mrb[0].mxu0 %v462
        %v903 = vpop.f32.mrb[0].mxu0
        %v904 = vadd.f32 %v398, %v903
        %v905 = vpop.f32.mrb[0].mxu0
        %906 = vmatprep.mubr.f32.mxu0 0.0
        %907 = vmatmul.mubr.f32.gmra.mrb[0].mxu0 %v465
        %v908 = vpop.f32.mrb[0].mxu0
        %v909 = vadd.f32 %v398, %v908
        %v910 = vpop.f32.mrb[0].mxu0
        %911 = vmatprep.mubr.f32.mxu0 0.0
        %912 = vmatmul.mubr.f32.gmra.mrb[0].mxu0 %v468
        %v913 = vpop.f32.mrb[0].mxu0
        %v914 = vadd.f32 %v398, %v913
        %v915 = vpop.f32.mrb[0].mxu0
        %916 = vmatprep.mubr.f32.mxu0 0.0
        %917 = vmatmul.mubr.f32.gmra.mrb[0].mxu0 %v471
        %v918 = vpop.f32.mrb[0].mxu0
        %v919 = vadd.f32 %v398, %v918
        %v920 = vpop.f32.mrb[0].mxu0
        %921 = vmatprep.mubr.f32.mxu0 0.0
        %922 = vmatmul.mubr.f32.gmra.mrb[0].mxu0 %v474
        %v923 = vpop.f32.mrb[0].mxu0
        %v924 = vadd.f32 %v398, %v923
        %v925 = vpop.f32.mrb[0].mxu0
        %926 = vmatprep.mubr.f32.mxu0 0.0
        %927 = vmatmul.mubr.f32.gmra.mrb[0].mxu0 %v477
        %v928 = vpop.f32.mrb[0].mxu0
        %v929 = vadd.f32 %v398, %v928
        %v930 = vpop.f32.mrb[0].mxu0
        %931 = vmatprep.mubr.f32.mxu0 0.0
        %932 = vmatmul.mubr.f32.gmra.mrb[0].mxu0 %v480
        %v933 = vpop.f32.mrb[0].mxu0
        %v934 = vadd.f32 %v398, %v933
        %v935 = vpop.f32.mrb[0].mxu0
        %936 = vmatprep.mubr.f32.mxu0 0.0
        %937 = vmatmul.mubr.f32.gmra.mrb[0].mxu0 %v483
        %v938 = vpop.f32.mrb[0].mxu0
        %v939 = vadd.f32 %v398, %v938
        %v940 = vpop.f32.mrb[0].mxu0
        %941 = vmatprep.mubr.f32.mxu0 0.0
        %942 = vmatmul.mubr.f32.gmra.mrb[0].mxu0 %v486
        %v943 = vpop.f32.mrb[0].mxu0
        %v944 = vadd.f32 %v398, %v943
        %v945 = vpop.f32.mrb[0].mxu0
        %946 = vmatprep.mubr.f32.mxu0 0.0
        %947 = vmatmul.mubr.f32.gmra.mrb[0].mxu0 %v489
        %v948 = vpop.f32.mrb[0].mxu0
        %v949 = vadd.f32 %v398, %v948
        %v950 = vpop.f32.mrb[0].mxu0
        %951 = vmatprep.mubr.f32.mxu0 0.0
        %952 = vmatmul.mubr.f32.gmra.mrb[0].mxu0 %v492
        %v953 = vpop.f32.mrb[0].mxu0
        %v954 = vadd.f32 %v398, %v953
        %v955 = vpop.f32.mrb[0].mxu0
        %956 = vmatprep.mubr.f32.mxu0 0.0
        %957 = vmatmul.mubr.f32.gmra.mrb[0].mxu0 %v495
        %v958 = vpop.f32.mrb[0].mxu0
        %v959 = vadd.f32 %v398, %v958
        %v960 = vpop.f32.mrb[0].mxu0
        %961 = vmatprep.mubr.f32.mxu0 0.0
        %962 = vmatmul.mubr.f32.gmra.mrb[0].mxu0 %v498
        %v963 = vpop.f32.mrb[0].mxu0
        %v964 = vadd.f32 %v398, %v963
        %v965 = vpop.f32.mrb[0].mxu0
        %966 = vmatprep.mubr.f32.mxu0 0.0
        %967 = vmatmul.mubr.f32.gmra.mrb[0].mxu0 %v501
        %v968 = vpop.f32.mrb[0].mxu0
        %v969 = vadd.f32 %v398, %v968
        %v970 = vpop.f32.mrb[0].mxu0
        %971 = vmatprep.mubr.f32.mxu0 0.0
        %972 = vmatmul.mubr.f32.gmra.mrb[0].mxu0 %v504
        %v973 = vpop.f32.mrb[0].mxu0
        %v974 = vadd.f32 %v398, %v973
        %v975 = vpop.f32.mrb[0].mxu0
        %976 = vmatprep.mubr.f32.mxu0 0.0
        %977 = vmatmul.mubr.f32.gmra.mrb[0].mxu0 %v507
        %v978 = vpop.f32.mrb[0].mxu0
        %v979 = vadd.f32 %v398, %v978
        %v980 = vpop.f32.mrb[0].mxu0
        %981 = vmatprep.mubr.f32.mxu0 0.0
        %982 = vmatmul.mubr.f32.gmra.mrb[0].mxu0 %v510
        %v983 = vpop.f32.mrb[0].mxu0
        %v984 = vadd.f32 %v398, %v983
        %v985 = vpop.f32.mrb[0].mxu0
        %986 = vmatprep.mubr.f32.mxu0 0.0
        %987 = vmatmul.mubr.f32.gmra.mrb[0].mxu0 %v513
        %v988 = vpop.f32.mrb[0].mxu0
        %v989 = vadd.f32 %v398, %v988
        %v990 = vpop.f32.mrb[0].mxu0
        %991 = vmatprep.mubr.f32.mxu0 0.0
        %992 = vmatmul.mubr.f32.gmra.mrb[0].mxu0 %v516
        %v993 = vpop.f32.mrb[0].mxu0
        %v994 = vadd.f32 %v398, %v993
        %v995 = vpop.f32.mrb[0].mxu0
        %996 = vmatprep.mubr.f32.mxu0 0.0
        %997 = vmatmul.mubr.f32.gmra.mrb[0].mxu0 %v519
        %v998 = vpop.f32.mrb[0].mxu0
        %v999 = vadd.f32 %v398, %v998
        %v1000 = vpop.f32.mrb[0].mxu0
        %1001 = vmatprep.mubr.f32.mxu0 0.0
        %1002 = vmatmul.mubr.f32.gmra.mrb[0].mxu0 %v522
        %v1003 = vpop.f32.mrb[0].mxu0
        %v1004 = vadd.f32 %v398, %v1003
        %v1005 = vpop.f32.mrb[0].mxu0
        %1006 = vmatprep.mubr.f32.mxu0 0.0
        %1007 = vmatmul.mubr.f32.gmra.mrb[0].mxu0 %v525
        %v1008 = vpop.f32.mrb[0].mxu0
        %v1009 = vadd.f32 %v398, %v1008
        %v1010 = vpop.f32.mrb[0].mxu0
        %1011 = vmatprep.mubr.f32.mxu0 0.0
        %1012 = vmatmul.mubr.f32.gmra.mrb[0].mxu0 %v528
        %v1013 = vpop.f32.mrb[0].mxu0
        %v1014 = vadd.f32 %v398, %v1013
        %v1015 = vpop.f32.mrb[0].mxu0
        %1016 = vmatprep.mubr.f32.mxu0 0.0
        %1017 = vmatmul.mubr.f32.gmra.mrb[0].mxu0 %v531
        %v1018 = vpop.f32.mrb[0].mxu0
        %v1019 = vadd.f32 %v398, %v1018
        %v1020 = vpop.f32.mrb[0].mxu0
        %1021 = vmatprep.mubr.f32.mxu0 0.0
        %1022 = vmatmul.mubr.f32.gmra.mrb[0].mxu0 %v534
        %v1023 = vpop.f32.mrb[0].mxu0
        %v1024 = vadd.f32 %v398, %v1023
        %v1025 = vpop.f32.mrb[0].mxu0
        %1026 = vmatprep.mubr.f32.mxu0 0.0
        %1027 = vmatmul.mubr.f32.gmra.mrb[0].mxu0 %v537
        %v1028 = vpop.f32.mrb[0].mxu0
        %v1029 = vadd.f32 %v398, %v1028
        %v1030 = vpop.f32.mrb[0].mxu0
        %1031 = vmatprep.mubr.f32.mxu0 0.0
        %1032 = vmatmul.mubr.f32.gmra.mrb[0].mxu0 %v540
        %v1033 = vpop.f32.mrb[0].mxu0
        %v1034 = vadd.f32 %v398, %v1033
        %v1035 = vpop.f32.mrb[0].mxu0
        %1036 = vmatprep.mubr.f32.mxu0 0.0
        %1037 = vmatmul.mubr.f32.gmra.mrb[0].mxu0 %v543
        %v1038 = vpop.f32.mrb[0].mxu0
        %v1039 = vadd.f32 %v398, %v1038
        %v1040 = vpop.f32.mrb[0].mxu0
        %1041 = vmatprep.mubr.f32.mxu0 0.0
        %1042 = vmatmul.mubr.f32.gmra.mrb[0].mxu0 %v546
        %v1043 = vpop.f32.mrb[0].mxu0
        %v1044 = vadd.f32 %v398, %v1043
        %v1045 = vpop.f32.mrb[0].mxu0
        %1046 = vmatprep.mubr.f32.mxu0 0.0
        %1047 = vmatmul.mubr.f32.gmra.mrb[0].mxu0 %v549
        %v1048 = vpop.f32.mrb[0].mxu0
        %v1049 = vadd.f32 %v398, %v1048
        %v1050 = vpop.f32.mrb[0].mxu0
        %1051 = vmatprep.mubr.f32.mxu0 0.0
        %1052 = vmatmul.mubr.f32.gmra.mrb[0].mxu0 %v552
        %v1053 = vpop.f32.mrb[0].mxu0
        %v1054 = vadd.f32 %v398, %v1053
        %v1055 = vpop.f32.mrb[0].mxu0
        %1056 = vmatprep.mubr.f32.mxu0 0.0
        %1057 = vmatmul.mubr.f32.gmra.mrb[0].mxu0 %v555
        %v1058 = vpop.f32.mrb[0].mxu0
        %v1059 = vadd.f32 %v398, %v1058
        %v1060 = vpop.f32.mrb[0].mxu0
        %1061 = vmatprep.mubr.f32.mxu0 0.0
        %1062 = vmatmul.mubr.f32.gmra.mrb[0].mxu0 %v558
        %v1063 = vpop.f32.mrb[0].mxu0
        %v1064 = vadd.f32 %v398, %v1063
        %v1065 = vpop.f32.mrb[0].mxu0
        %1066 = vmatprep.mubr.f32.mxu0 0.0
        %1067 = vmatmul.mubr.f32.gmra.mrb[0].mxu0 %v561
        %v1068 = vpop.f32.mrb[0].mxu0
        %v1069 = vadd.f32 %v398, %v1068
        %v1070 = vpop.f32.mrb[0].mxu0
        %1071 = vmatprep.mubr.f32.mxu0 0.0
        %1072 = vmatmul.mubr.f32.gmra.mrb[0].mxu0 %v564
        %v1073 = vpop.f32.mrb[0].mxu0
        %v1074 = vadd.f32 %v398, %v1073
        %v1075 = vpop.f32.mrb[0].mxu0
        %1076 = vmatprep.mubr.f32.mxu0 0.0
        %1077 = vmatmul.mubr.f32.gmra.mrb[0].mxu0 %v567
        %v1078 = vpop.f32.mrb[0].mxu0
        %v1079 = vadd.f32 %v398, %v1078
        %v1080 = vpop.f32.mrb[0].mxu0
        %1081 = vmatprep.mubr.f32.mxu0 0.0
        %1082 = vmatmul.mubr.f32.gmra.mrb[0].mxu0 %v570
        %v1083 = vpop.f32.mrb[0].mxu0
        %v1084 = vadd.f32 %v398, %v1083
        %v1085 = vpop.f32.mrb[0].mxu0
        %1086 = vmatprep.mubr.f32.mxu0 0.0
        %1087 = vmatmul.mubr.f32.gmra.mrb[0].mxu0 %v573
        %v1088 = vpop.f32.mrb[0].mxu0
        %v1089 = vadd.f32 %v398, %v1088
        %v1090 = vpop.f32.mrb[0].mxu0
        %1091 = vmatprep.mubr.f32.mxu0 0.0
        %1092 = vmatmul.mubr.f32.gmra.mrb[0].mxu0 %v576
        %v1093 = vpop.f32.mrb[0].mxu0
        %v1094 = vadd.f32 %v398, %v1093
        %v1095 = vpop.f32.mrb[0].mxu0
        %1096 = vmatprep.mubr.f32.mxu0 0.0
        %1097 = vmatmul.mubr.f32.gmra.mrb[0].mxu0 %v579
        %v1098 = vpop.f32.mrb[0].mxu0
        %v1099 = vadd.f32 %v398, %v1098
        %v1100 = vpop.f32.mrb[0].mxu0
        %1101 = vmatprep.mubr.f32.mxu0 0.0
        %1102 = vmatmul.mubr.f32.gmra.mrb[0].mxu0 %v582
        %v1103 = vpop.f32.mrb[0].mxu0
        %v1104 = vadd.f32 %v398, %v1103
        %v1105 = vpop.f32.mrb[0].mxu0
        %1106 = vmatprep.mubr.f32.mxu0 0.0
        %1107 = vmatmul.mubr.f32.gmra.mrb[0].mxu0 %v585
        %v1108 = vpop.f32.mrb[0].mxu0
        %v1109 = vadd.f32 %v398, %v1108
        %v1110 = vpop.f32.mrb[0].mxu0
        %1111 = vmatprep.mubr.f32.mxu0 0.0
        %1112 = vmatmul.mubr.f32.gmra.mrb[0].mxu0 %v588
        %v1113 = vpop.f32.mrb[0].mxu0
        %v1114 = vadd.f32 %v398, %v1113
        %v1115 = vpop.f32.mrb[0].mxu0
        %1116 = vmatprep.mubr.f32.mxu0 0.0
        %1117 = vmatmul.mubr.f32.gmra.mrb[0].mxu0 %v591
        %v1118 = vpop.f32.mrb[0].mxu0
        %v1119 = vadd.f32 %v398, %v1118
        %v1120 = vpop.f32.mrb[0].mxu0
        %1121 = vmatprep.mubr.f32.mxu0 0.0
        %1122 = vmatmul.mubr.f32.gmra.mrb[0].mxu0 %v594
        %v1123 = vpop.f32.mrb[0].mxu0
        %v1124 = vadd.f32 %v398, %v1123
        %v1125 = vpop.f32.mrb[0].mxu0
        %1126 = vmatprep.mubr.f32.mxu0 0.0
        %1127 = vmatmul.mubr.f32.gmra.mrb[0].mxu0 %v597
        %v1128 = vpop.f32.mrb[0].mxu0
        %v1129 = vadd.f32 %v398, %v1128
        %v1130 = vpop.f32.mrb[0].mxu0
        %1131 = vmatprep.mubr.f32.mxu0 0.0
        %1132 = vmatmul.mubr.f32.gmra.mrb[0].mxu0 %v600
        %v1133 = vpop.f32.mrb[0].mxu0
        %v1134 = vadd.f32 %v398, %v1133
        %v1135 = vpop.f32.mrb[0].mxu0
        %1136 = vmatprep.mubr.f32.mxu0 0.0
        %1137 = vmatmul.mubr.f32.gmra.mrb[0].mxu0 %v603
        %v1138 = vpop.f32.mrb[0].mxu0
        %v1139 = vadd.f32 %v398, %v1138
        %v1140 = vpop.f32.mrb[0].mxu0
        %1141 = vmatprep.mubr.f32.mxu0 0.0
        %1142 = vmatmul.mubr.f32.gmra.mrb[0].mxu0 %v606
        %v1143 = vpop.f32.mrb[0].mxu0
        %v1144 = vadd.f32 %v398, %v1143
        %v1145 = vpop.f32.mrb[0].mxu0
        %1146 = vmatprep.mubr.f32.mxu0 0.0
        %1147 = vmatmul.mubr.f32.gmra.mrb[0].mxu0 %v609
        %v1148 = vpop.f32.mrb[0].mxu0
        %v1149 = vadd.f32 %v398, %v1148
        %v1150 = vpop.f32.mrb[0].mxu0
        %1151 = vmatprep.mubr.f32.mxu0 0.0
        %1152 = vmatmul.mubr.f32.gmra.mrb[0].mxu0 %v612
        %v1153 = vpop.f32.mrb[0].mxu0
        %v1154 = vadd.f32 %v398, %v1153
        %v1155 = vpop.f32.mrb[0].mxu0
        %1156 = vmatprep.mubr.f32.mxu0 0.0
        %1157 = vmatmul.mubr.f32.gmra.mrb[0].mxu0 %v615
        %v1158 = vpop.f32.mrb[0].mxu0
        %v1159 = vadd.f32 %v398, %v1158
        %v1160 = vpop.f32.mrb[0].mxu0
        %1161 = vmatprep.mubr.f32.mxu0 0.0
        %1162 = vmatmul.mubr.f32.gmra.mrb[0].mxu0 %v618
        %v1163 = vpop.f32.mrb[0].mxu0
        %v1164 = vadd.f32 %v398, %v1163
        %v1165 = vpop.f32.mrb[0].mxu0
        %1166 = vmatprep.mubr.f32.mxu0 0.0
        %1167 = vmatmul.mubr.f32.gmra.mrb[0].mxu0 %v621
        %v1168 = vpop.f32.mrb[0].mxu0
        %v1169 = vadd.f32 %v398, %v1168
        %v1170 = vpop.f32.mrb[0].mxu0
        %1171 = vmatprep.mubr.f32.mxu0 0.0
        %1172 = vmatmul.mubr.f32.gmra.mrb[0].mxu0 %v624
        %v1173 = vpop.f32.mrb[0].mxu0
        %v1174 = vadd.f32 %v398, %v1173
        %v1175 = vpop.f32.mrb[0].mxu0
        %1176 = vmatprep.mubr.f32.mxu0 0.0
        %1177 = vmatmul.mubr.f32.gmra.mrb[0].mxu0 %v627
        %v1178 = vpop.f32.mrb[0].mxu0
        %v1179 = vadd.f32 %v398, %v1178
        %v1180 = vpop.f32.mrb[0].mxu0
        %1181 = vmatprep.mubr.f32.mxu0 0.0
        %1182 = vmatmul.mubr.f32.gmra.mrb[0].mxu0 %v630
        %v1183 = vpop.f32.mrb[0].mxu0
        %v1184 = vadd.f32 %v398, %v1183
        %v1185 = vpop.f32.mrb[0].mxu0
        %1186 = vmatprep.mubr.f32.mxu0 0.0
        %1187 = vmatmul.mubr.f32.gmra.mrb[0].mxu0 %v633
        %v1188 = vpop.f32.mrb[0].mxu0
        %v1189 = vadd.f32 %v398, %v1188
        %v1190 = vpop.f32.mrb[0].mxu0
        %1191 = vmatprep.mubr.f32.mxu0 0.0
        %1192 = vmatmul.mubr.f32.gmra.mrb[0].mxu0 %v636
        %v1193 = vpop.f32.mrb[0].mxu0
        %v1194 = vadd.f32 %v398, %v1193
        %v1195 = vpop.f32.mrb[0].mxu0
        %1196 = vmatprep.mubr.f32.mxu0 0.0
        %1197 = vmatmul.mubr.f32.gmra.mrb[0].mxu0 %v639
        %v1198 = vpop.f32.mrb[0].mxu0
        %v1199 = vadd.f32 %v398, %v1198
        %v1200 = vpop.f32.mrb[0].mxu0
        %1201 = vmatprep.mubr.f32.mxu0 0.0
        %1202 = vmatmul.mubr.f32.gmra.mrb[0].mxu0 %v642
        %v1203 = vpop.f32.mrb[0].mxu0
        %v1204 = vadd.f32 %v398, %v1203
        %v1205 = vpop.f32.mrb[0].mxu0
        %1206 = vmatprep.mubr.f32.mxu0 0.0
        %1207 = vmatmul.mubr.f32.gmra.mrb[0].mxu0 %v645
        %v1208 = vpop.f32.mrb[0].mxu0
        %v1209 = vadd.f32 %v398, %v1208
        %v1210 = vpop.f32.mrb[0].mxu0
        %1211 = vmatprep.mubr.f32.mxu0 0.0
        %1212 = vmatmul.mubr.f32.gmra.mrb[0].mxu0 %v648
        %v1213 = vpop.f32.mrb[0].mxu0
        %v1214 = vadd.f32 %v398, %v1213
        %v1215 = vpop.f32.mrb[0].mxu0
        %1216 = vmatprep.mubr.f32.mxu0 0.0
        %1217 = vmatmul.mubr.f32.gmra.mrb[0].mxu0 %v651
        %v1218 = vpop.f32.mrb[0].mxu0
        %v1219 = vadd.f32 %v398, %v1218
        %v1220 = vpop.f32.mrb[0].mxu0
        %1221 = vmatprep.mubr.f32.mxu0 0.0
        %1222 = vmatmul.mubr.f32.gmra.mrb[0].mxu0 %v654
        %v1223 = vpop.f32.mrb[0].mxu0
        %v1224 = vadd.f32 %v398, %v1223
        %v1225 = vpop.f32.mrb[0].mxu0
        %1226 = vmatprep.mubr.f32.mxu0 0.0
        %1227 = vmatmul.mubr.f32.gmra.mrb[0].mxu0 %v657
        %v1228 = vpop.f32.mrb[0].mxu0
        %v1229 = vadd.f32 %v398, %v1228
        %v1230 = vpop.f32.mrb[0].mxu0
        %1231 = vmatprep.mubr.f32.mxu0 0.0
        %1232 = vmatmul.mubr.f32.gmra.mrb[0].mxu0 %v660
        %v1233 = vpop.f32.mrb[0].mxu0
        %v1234 = vadd.f32 %v398, %v1233
        %v1235 = vpop.f32.mrb[0].mxu0
        %1236 = vmatprep.mubr.f32.mxu0 0.0
        %1237 = vmatmul.mubr.f32.gmra.mrb[0].mxu0 %v663
        %v1238 = vpop.f32.mrb[0].mxu0
        %v1239 = vadd.f32 %v398, %v1238
        %v1240 = vpop.f32.mrb[0].mxu0
        %1241 = vmatprep.mubr.f32.mxu0 0.0
        %1242 = vmatmul.mubr.f32.gmra.mrb[0].mxu0 %v666
        %v1243 = vpop.f32.mrb[0].mxu0
        %v1244 = vadd.f32 %v398, %v1243
        %v1245 = vpop.f32.mrb[0].mxu0
        %1246 = vmatprep.mubr.f32.mxu0 0.0
        %1247 = vmatmul.mubr.f32.gmra.mrb[0].mxu0 %v669
        %v1248 = vpop.f32.mrb[0].mxu0
        %v1249 = vadd.f32 %v398, %v1248
        %v1250 = vpop.f32.mrb[0].mxu0
        %1251 = vmatprep.mubr.f32.mxu0 0.0
        %1252 = vmatmul.mubr.f32.gmra.mrb[0].mxu0 %v672
        %v1253 = vpop.f32.mrb[0].mxu0
        %v1254 = vadd.f32 %v398, %v1253
        %v1255 = vpop.f32.mrb[0].mxu0
        %1256 = vmatprep.mubr.f32.mxu0 0.0
        %1257 = vmatmul.mubr.f32.gmra.mrb[0].mxu0 %v675
        %v1258 = vpop.f32.mrb[0].mxu0
        %v1259 = vadd.f32 %v398, %v1258
        %v1260 = vpop.f32.mrb[0].mxu0
        %1261 = vmatprep.mubr.f32.mxu0 0.0
        %1262 = vmatmul.mubr.f32.gmra.mrb[0].mxu0 %v678
        %v1263 = vpop.f32.mrb[0].mxu0
        %v1264 = vadd.f32 %v398, %v1263
        %v1265 = vpop.f32.mrb[0].mxu0
        %1266 = vmatprep.mubr.f32.mxu0 0.0
        %1267 = vmatmul.mubr.f32.gmra.mrb[0].mxu0 %v681
        %v1268 = vpop.f32.mrb[0].mxu0
        %v1269 = vadd.f32 %v398, %v1268
        %v1270 = vpop.f32.mrb[0].mxu0
        %1271 = vmatprep.mubr.f32.mxu0 0.0
        %1272 = vmatmul.mubr.f32.gmra.mrb[0].mxu0 %v684
        %v1273 = vpop.f32.mrb[0].mxu0
        %v1274 = vadd.f32 %v398, %v1273
        %v1275 = vpop.f32.mrb[0].mxu0
        %1276 = vmatprep.mubr.f32.mxu0 0.0
        %1277 = vmatmul.mubr.f32.gmra.mrb[0].mxu0 %v687
        %v1278 = vpop.f32.mrb[0].mxu0
        %v1279 = vadd.f32 %v398, %v1278
        %v1280 = vpop.f32.mrb[0].mxu0
        %1281 = vmatprep.mubr.f32.mxu0 0.0
        %1282 = vmatmul.mubr.f32.gmra.mrb[0].mxu0 %v690
        %v1283 = vpop.f32.mrb[0].mxu0
        %v1284 = vadd.f32 %v398, %v1283
        %v1285 = vpop.f32.mrb[0].mxu0
        %1286 = vmatprep.mubr.f32.mxu0 0.0
        %1287 = vmatmul.mubr.f32.gmra.mrb[0].mxu0 %v693
        %v1288 = vpop.f32.mrb[0].mxu0
        %v1289 = vadd.f32 %v398, %v1288
        %v1290 = vpop.f32.mrb[0].mxu0
        %1291 = vmatprep.mubr.f32.mxu0 0.0
        %1292 = vmatmul.mubr.f32.gmra.mrb[0].mxu0 %v696
        %v1293 = vpop.f32.mrb[0].mxu0
        %v1294 = vadd.f32 %v398, %v1293
        %v1295 = vpop.f32.mrb[0].mxu0
        %1296 = vmatprep.mubr.f32.mxu0 0.0
        %1297 = vmatmul.mubr.f32.gmra.mrb[0].mxu0 %v699
        %v1298 = vpop.f32.mrb[0].mxu0
        %v1299 = vadd.f32 %v398, %v1298
        %v1300 = vpop.f32.mrb[0].mxu0
        %1301 = vmatprep.mubr.f32.mxu0 0.0
        %1302 = vmatmul.mubr.f32.gmra.mrb[0].mxu0 %v702
        %v1303 = vpop.f32.mrb[0].mxu0
        %v1304 = vadd.f32 %v398, %v1303
        %v1305 = vpop.f32.mrb[0].mxu0
        %1306 = vmatprep.mubr.f32.mxu0 0.0
        %1307 = vmatmul.mubr.f32.gmra.mrb[0].mxu0 %v705
        %v1308 = vpop.f32.mrb[0].mxu0
        %v1309 = vadd.f32 %v398, %v1308
        %v1310 = vpop.f32.mrb[0].mxu0
        %1311 = vmatprep.mubr.f32.mxu0 0.0
        %1312 = vmatmul.mubr.f32.gmra.mrb[0].mxu0 %v708
        %v1313 = vpop.f32.mrb[0].mxu0
        %v1314 = vadd.f32 %v398, %v1313
        %v1315 = vpop.f32.mrb[0].mxu0
        %1316 = vmatprep.mubr.f32.mxu0 0.0
        %1317 = vmatmul.mubr.f32.gmra.mrb[0].mxu0 %v711
        %v1318 = vpop.f32.mrb[0].mxu0
        %v1319 = vadd.f32 %v398, %v1318
        %v1320 = vpop.f32.mrb[0].mxu0
        %1321 = vmatprep.mubr.f32.mxu0 0.0
        %1322 = vmatmul.mubr.f32.gmra.mrb[0].mxu0 %v714
        %v1323 = vpop.f32.mrb[0].mxu0
        %v1324 = vadd.f32 %v398, %v1323
        %v1325 = vpop.f32.mrb[0].mxu0
        %1326 = vmatprep.mubr.f32.mxu0 0.0
        %1327 = vmatmul.mubr.f32.gmra.mrb[0].mxu0 %v717
        %v1328 = vpop.f32.mrb[0].mxu0
        %v1329 = vadd.f32 %v398, %v1328
        %v1330 = vpop.f32.mrb[0].mxu0
        %1331 = vmatprep.mubr.f32.mxu0 0.0
        %1332 = vmatmul.mubr.f32.gmra.mrb[0].mxu0 %v720
        %v1333 = vpop.f32.mrb[0].mxu0
        %v1334 = vadd.f32 %v398, %v1333
        %v1335 = vpop.f32.mrb[0].mxu0
        %1336 = vmatprep.mubr.f32.mxu0 0.0
        %1337 = vmatmul.mubr.f32.gmra.mrb[0].mxu0 %v723
        %v1338 = vpop.f32.mrb[0].mxu0
        %v1339 = vadd.f32 %v398, %v1338
        %v1340 = vpop.f32.mrb[0].mxu0
        %1341 = vmatprep.mubr.f32.mxu0 0.0
        %1342 = vmatmul.mubr.f32.gmra.mrb[0].mxu0 %v726
        %v1343 = vpop.f32.mrb[0].mxu0
        %v1344 = vadd.f32 %v398, %v1343
        %v1345 = vpop.f32.mrb[0].mxu0
        %1346 = vmatprep.mubr.f32.mxu0 0.0
        %1347 = vmatmul.mubr.f32.gmra.mrb[0].mxu0 %v729
        %v1348 = vpop.f32.mrb[0].mxu0
        %v1349 = vadd.f32 %v398, %v1348
        %v1350 = vpop.f32.mrb[0].mxu0
        %1351 = vmatprep.mubr.f32.mxu0 0.0
        %1352 = vmatmul.mubr.f32.gmra.mrb[0].mxu0 %v732
        %v1353 = vpop.f32.mrb[0].mxu0
        %v1354 = vadd.f32 %v398, %v1353
        %v1355 = vpop.f32.mrb[0].mxu0
        %1356 = vmatprep.mubr.f32.mxu0 0.0
        %1357 = vmatmul.mubr.f32.gmra.mrb[0].mxu0 %v735
        %v1358 = vpop.f32.mrb[0].mxu0
        %v1359 = vadd.f32 %v398, %v1358
        %v1360 = vpop.f32.mrb[0].mxu0
        %1361 = vdwg.mxu0
        %v1362 = vmax.f32 %v804, 0.0
        %v1363 = vmax.f32 %v809, 0.0
        %v1364 = vmax.f32 %v814, 0.0
        %v1365 = vmax.f32 %v819, 0.0
        %v1366 = vmax.f32 %v824, 0.0
        %v1367 = vmax.f32 %v829, 0.0
        %v1368 = vmax.f32 %v834, 0.0
        %v1369 = vmax.f32 %v839, 0.0
        %v1370 = vmax.f32 %v844, 0.0
        %v1371 = vmax.f32 %v849, 0.0
        %v1372 = vmax.f32 %v854, 0.0
        %v1373 = vmax.f32 %v859, 0.0
        %v1374 = vmax.f32 %v864, 0.0
        %v1375 = vmax.f32 %v869, 0.0
        %v1376 = vmax.f32 %v874, 0.0
        %v1377 = vmax.f32 %v879, 0.0
        %v1378 = vmax.f32 %v884, 0.0
        %v1379 = vmax.f32 %v889, 0.0
        %v1380 = vmax.f32 %v894, 0.0
        %v1381 = vmax.f32 %v899, 0.0
        %v1382 = vmax.f32 %v904, 0.0
        %v1383 = vmax.f32 %v909, 0.0
        %v1384 = vmax.f32 %v914, 0.0
        %v1385 = vmax.f32 %v919, 0.0
        %v1386 = vmax.f32 %v924, 0.0
        %v1387 = vmax.f32 %v929, 0.0
        %v1388 = vmax.f32 %v934, 0.0
        %v1389 = vmax.f32 %v939, 0.0
        %v1390 = vmax.f32 %v944, 0.0
        %v1391 = vmax.f32 %v949, 0.0
        %v1392 = vmax.f32 %v954, 0.0
        %v1393 = vmax.f32 %v959, 0.0
        %v1394 = vmax.f32 %v964, 0.0
        %v1395 = vmax.f32 %v969, 0.0
        %v1396 = vmax.f32 %v974, 0.0
        %v1397 = vmax.f32 %v979, 0.0
        %v1398 = vmax.f32 %v984, 0.0
        %v1399 = vmax.f32 %v989, 0.0
        %v1400 = vmax.f32 %v994, 0.0
        %v1401 = vmax.f32 %v999, 0.0
        %v1402 = vmax.f32 %v1004, 0.0
        %v1403 = vmax.f32 %v1009, 0.0
        %v1404 = vmax.f32 %v1014, 0.0
        %v1405 = vmax.f32 %v1019, 0.0
        %v1406 = vmax.f32 %v1024, 0.0
        %v1407 = vmax.f32 %v1029, 0.0
        %v1408 = vmax.f32 %v1034, 0.0
        %v1409 = vmax.f32 %v1039, 0.0
        %v1410 = vmax.f32 %v1044, 0.0
        %v1411 = vmax.f32 %v1049, 0.0
        %v1412 = vmax.f32 %v1054, 0.0
        %v1413 = vmax.f32 %v1059, 0.0
        %v1414 = vmax.f32 %v1064, 0.0
        %v1415 = vmax.f32 %v1069, 0.0
        %v1416 = vmax.f32 %v1074, 0.0
        %v1417 = vmax.f32 %v1079, 0.0
        %v1418 = vmax.f32 %v1084, 0.0
        %v1419 = vmax.f32 %v1089, 0.0
        %v1420 = vmax.f32 %v1094, 0.0
        %v1421 = vmax.f32 %v1099, 0.0
        %v1422 = vmax.f32 %v1104, 0.0
        %v1423 = vmax.f32 %v1109, 0.0
        %v1424 = vmax.f32 %v1114, 0.0
        %v1425 = vmax.f32 %v1119, 0.0
        %v1426 = vmax.f32 %v1124, 0.0
        %v1427 = vmax.f32 %v1129, 0.0
        %v1428 = vmax.f32 %v1134, 0.0
        %v1429 = vmax.f32 %v1139, 0.0
        %v1430 = vmax.f32 %v1144, 0.0
        %v1431 = vmax.f32 %v1149, 0.0
        %v1432 = vmax.f32 %v1154, 0.0
        %v1433 = vmax.f32 %v1159, 0.0
        %v1434 = vmax.f32 %v1164, 0.0
        %v1435 = vmax.f32 %v1169, 0.0
        %v1436 = vmax.f32 %v1174, 0.0
        %v1437 = vmax.f32 %v1179, 0.0
        %v1438 = vmax.f32 %v1184, 0.0
        %v1439 = vmax.f32 %v1189, 0.0
        %v1440 = vmax.f32 %v1194, 0.0
        %v1441 = vmax.f32 %v1199, 0.0
        %v1442 = vmax.f32 %v1204, 0.0
        %v1443 = vmax.f32 %v1209, 0.0
        %v1444 = vmax.f32 %v1214, 0.0
        %v1445 = vmax.f32 %v1219, 0.0
        %v1446 = vmax.f32 %v1224, 0.0
        %v1447 = vmax.f32 %v1229, 0.0
        %v1448 = vmax.f32 %v1234, 0.0
        %v1449 = vmax.f32 %v1239, 0.0
        %v1450 = vmax.f32 %v1244, 0.0
        %v1451 = vmax.f32 %v1249, 0.0
        %v1452 = vmax.f32 %v1254, 0.0
        %v1453 = vmax.f32 %v1259, 0.0
        %v1454 = vmax.f32 %v1264, 0.0
        %v1455 = vmax.f32 %v1269, 0.0
        %v1456 = vmax.f32 %v1274, 0.0
        %v1457 = vmax.f32 %v1279, 0.0
        %v1458 = vmax.f32 %v1284, 0.0
        %v1459 = vmax.f32 %v1289, 0.0
        %v1460 = vmax.f32 %v1294, 0.0
        %v1461 = vmax.f32 %v1299, 0.0
        %v1462 = vmax.f32 %v1304, 0.0
        %v1463 = vmax.f32 %v1309, 0.0
        %v1464 = vmax.f32 %v1314, 0.0
        %v1465 = vmax.f32 %v1319, 0.0
        %v1466 = vmax.f32 %v1324, 0.0
        %v1467 = vmax.f32 %v1329, 0.0
        %v1468 = vmax.f32 %v1334, 0.0
        %v1469 = vmax.f32 %v1339, 0.0
        %v1470 = vmax.f32 %v1344, 0.0
        %v1471 = vmax.f32 %v1349, 0.0
        %v1472 = vmax.f32 %v1354, 0.0
        %v1473 = vmax.f32 %v1359, 0.0
        %1474 = vst.msk [vmem:[#allocation2] sm:$0xff] %vm400, %v1362
        %1475 = vst.msk [vmem:[#allocation2 + $0x8] sm:$0xff] %vm400, %v1363
        %1476 = vst.msk [vmem:[#allocation2 + $0x10] sm:$0xff] %vm400, %v1364
        %1477 = vst.msk [vmem:[#allocation2 + $0x18] sm:$0xff] %vm400, %v1365
        %1478 = vst.msk [vmem:[#allocation2 + $0x20] sm:$0xff] %vm400, %v1366
        %1479 = vst.msk [vmem:[#allocation2 + $0x28] sm:$0xff] %vm400, %v1367
        %1480 = vst.msk [vmem:[#allocation2 + $0x30] sm:$0xff] %vm400, %v1368
        %1481 = vst.msk [vmem:[#allocation2 + $0x38] sm:$0xff] %vm400, %v1369
        %1482 = vst.msk [vmem:[#allocation2 + $0x40] sm:$0xff] %vm400, %v1370
        %1483 = vst.msk [vmem:[#allocation2 + $0x48] sm:$0xff] %vm400, %v1371
        %1484 = vst.msk [vmem:[#allocation2 + $0x50] sm:$0xff] %vm400, %v1372
        %1485 = vst.msk [vmem:[#allocation2 + $0x58] sm:$0xff] %vm400, %v1373
        %1486 = vst.msk [vmem:[#allocation2 + $0x60] sm:$0xff] %vm400, %v1374
        %1487 = vst.msk [vmem:[#allocation2 + $0x68] sm:$0xff] %vm400, %v1375
        %1488 = vst.msk [vmem:[#allocation2 + $0x70] sm:$0xff] %vm400, %v1376
        %1489 = vst.msk [vmem:[#allocation2 + $0x78] sm:$0xff] %vm400, %v1377
        %1490 = vst.msk [vmem:[#allocation2 + $0x80] sm:$0xff] %vm400, %v1378
        %1491 = vst.msk [vmem:[#allocation2 + $0x88] sm:$0xff] %vm400, %v1379
        %1492 = vst.msk [vmem:[#allocation2 + $0x90] sm:$0xff] %vm400, %v1380
        %1493 = vst.msk [vmem:[#allocation2 + $0x98] sm:$0xff] %vm400, %v1381
        %1494 = vst.msk [vmem:[#allocation2 + $0xa0] sm:$0xff] %vm400, %v1382
        %1495 = vst.msk [vmem:[#allocation2 + $0xa8] sm:$0xff] %vm400, %v1383
        %1496 = vst.msk [vmem:[#allocation2 + $0xb0] sm:$0xff] %vm400, %v1384
        %1497 = vst.msk [vmem:[#allocation2 + $0xb8] sm:$0xff] %vm400, %v1385
        %1498 = vst.msk [vmem:[#allocation2 + $0xc0] sm:$0xff] %vm400, %v1386
        %1499 = vst.msk [vmem:[#allocation2 + $0xc8] sm:$0xff] %vm400, %v1387
        %1500 = vst.msk [vmem:[#allocation2 + $0xd0] sm:$0xff] %vm400, %v1388
        %1501 = vst.msk [vmem:[#allocation2 + $0xd8] sm:$0xff] %vm400, %v1389
        %1502 = vst.msk [vmem:[#allocation2 + $0xe0] sm:$0xff] %vm400, %v1390
        %1503 = vst.msk [vmem:[#allocation2 + $0xe8] sm:$0xff] %vm400, %v1391
        %1504 = vst.msk [vmem:[#allocation2 + $0xf0] sm:$0xff] %vm400, %v1392
        %1505 = vst.msk [vmem:[#allocation2 + $0xf8] sm:$0xff] %vm400, %v1393
        %1506 = vst.msk [vmem:[#allocation2 + $0x100] sm:$0xff] %vm400, %v1394
        %1507 = vst.msk [vmem:[#allocation2 + $0x108] sm:$0xff] %vm400, %v1395
        %1508 = vst.msk [vmem:[#allocation2 + $0x110] sm:$0xff] %vm400, %v1396
        %1509 = vst.msk [vmem:[#allocation2 + $0x118] sm:$0xff] %vm400, %v1397
        %1510 = vst.msk [vmem:[#allocation2 + $0x120] sm:$0xff] %vm400, %v1398
        %1511 = vst.msk [vmem:[#allocation2 + $0x128] sm:$0xff] %vm400, %v1399
        %1512 = vst.msk [vmem:[#allocation2 + $0x130] sm:$0xff] %vm400, %v1400
        %1513 = vst.msk [vmem:[#allocation2 + $0x138] sm:$0xff] %vm400, %v1401
        %1514 = vst.msk [vmem:[#allocation2 + $0x140] sm:$0xff] %vm400, %v1402
        %1515 = vst.msk [vmem:[#allocation2 + $0x148] sm:$0xff] %vm400, %v1403
        %1516 = vst.msk [vmem:[#allocation2 + $0x150] sm:$0xff] %vm400, %v1404
        %1517 = vst.msk [vmem:[#allocation2 + $0x158] sm:$0xff] %vm400, %v1405
        %1518 = vst.msk [vmem:[#allocation2 + $0x160] sm:$0xff] %vm400, %v1406
        %1519 = vst.msk [vmem:[#allocation2 + $0x168] sm:$0xff] %vm400, %v1407
        %1520 = vst.msk [vmem:[#allocation2 + $0x170] sm:$0xff] %vm400, %v1408
        %1521 = vst.msk [vmem:[#allocation2 + $0x178] sm:$0xff] %vm400, %v1409
        %1522 = vst.msk [vmem:[#allocation2 + $0x180] sm:$0xff] %vm400, %v1410
        %1523 = vst.msk [vmem:[#allocation2 + $0x188] sm:$0xff] %vm400, %v1411
        %1524 = vst.msk [vmem:[#allocation2 + $0x190] sm:$0xff] %vm400, %v1412
        %1525 = vst.msk [vmem:[#allocation2 + $0x198] sm:$0xff] %vm400, %v1413
        %1526 = vst.msk [vmem:[#allocation2 + $0x1a0] sm:$0xff] %vm400, %v1414
        %1527 = vst.msk [vmem:[#allocation2 + $0x1a8] sm:$0xff] %vm400, %v1415
        %1528 = vst.msk [vmem:[#allocation2 + $0x1b0] sm:$0xff] %vm400, %v1416
        %1529 = vst.msk [vmem:[#allocation2 + $0x1b8] sm:$0xff] %vm400, %v1417
        %1530 = vst.msk [vmem:[#allocation2 + $0x1c0] sm:$0xff] %vm400, %v1418
        %1531 = vst.msk [vmem:[#allocation2 + $0x1c8] sm:$0xff] %vm400, %v1419
        %1532 = vst.msk [vmem:[#allocation2 + $0x1d0] sm:$0xff] %vm400, %v1420
        %1533 = vst.msk [vmem:[#allocation2 + $0x1d8] sm:$0xff] %vm400, %v1421
        %1534 = vst.msk [vmem:[#allocation2 + $0x1e0] sm:$0xff] %vm400, %v1422
        %1535 = vst.msk [vmem:[#allocation2 + $0x1e8] sm:$0xff] %vm400, %v1423
        %1536 = vst.msk [vmem:[#allocation2 + $0x1f0] sm:$0xff] %vm400, %v1424
        %1537 = vst.msk [vmem:[#allocation2 + $0x1f8] sm:$0xff] %vm400, %v1425
        %1538 = vst.msk [vmem:[#allocation2 + $0x200] sm:$0xff] %vm400, %v1426
        %1539 = vst.msk [vmem:[#allocation2 + $0x208] sm:$0xff] %vm400, %v1427
        %1540 = vst.msk [vmem:[#allocation2 + $0x210] sm:$0xff] %vm400, %v1428
        %1541 = vst.msk [vmem:[#allocation2 + $0x218] sm:$0xff] %vm400, %v1429
        %1542 = vst.msk [vmem:[#allocation2 + $0x220] sm:$0xff] %vm400, %v1430
        %1543 = vst.msk [vmem:[#allocation2 + $0x228] sm:$0xff] %vm400, %v1431
        %1544 = vst.msk [vmem:[#allocation2 + $0x230] sm:$0xff] %vm400, %v1432
        %1545 = vst.msk [vmem:[#allocation2 + $0x238] sm:$0xff] %vm400, %v1433
        %1546 = vst.msk [vmem:[#allocation2 + $0x240] sm:$0xff] %vm400, %v1434
        %1547 = vst.msk [vmem:[#allocation2 + $0x248] sm:$0xff] %vm400, %v1435
        %1548 = vst.msk [vmem:[#allocation2 + $0x250] sm:$0xff] %vm400, %v1436
        %1549 = vst.msk [vmem:[#allocation2 + $0x258] sm:$0xff] %vm400, %v1437
        %1550 = vst.msk [vmem:[#allocation2 + $0x260] sm:$0xff] %vm400, %v1438
        %1551 = vst.msk [vmem:[#allocation2 + $0x268] sm:$0xff] %vm400, %v1439
        %1552 = vst.msk [vmem:[#allocation2 + $0x270] sm:$0xff] %vm400, %v1440
        %1553 = vst.msk [vmem:[#allocation2 + $0x278] sm:$0xff] %vm400, %v1441
        %1554 = vst.msk [vmem:[#allocation2 + $0x280] sm:$0xff] %vm400, %v1442
        %1555 = vst.msk [vmem:[#allocation2 + $0x288] sm:$0xff] %vm400, %v1443
        %1556 = vst.msk [vmem:[#allocation2 + $0x290] sm:$0xff] %vm400, %v1444
        %1557 = vst.msk [vmem:[#allocation2 + $0x298] sm:$0xff] %vm400, %v1445
        %1558 = vst.msk [vmem:[#allocation2 + $0x2a0] sm:$0xff] %vm400, %v1446
        %1559 = vst.msk [vmem:[#allocation2 + $0x2a8] sm:$0xff] %vm400, %v1447
        %1560 = vst.msk [vmem:[#allocation2 + $0x2b0] sm:$0xff] %vm400, %v1448
        %1561 = vst.msk [vmem:[#allocation2 + $0x2b8] sm:$0xff] %vm400, %v1449
        %1562 = vst.msk [vmem:[#allocation2 + $0x2c0] sm:$0xff] %vm400, %v1450
        %1563 = vst.msk [vmem:[#allocation2 + $0x2c8] sm:$0xff] %vm400, %v1451
        %1564 = vst.msk [vmem:[#allocation2 + $0x2d0] sm:$0xff] %vm400, %v1452
        %1565 = vst.msk [vmem:[#allocation2 + $0x2d8] sm:$0xff] %vm400, %v1453
        %1566 = vst.msk [vmem:[#allocation2 + $0x2e0] sm:$0xff] %vm400, %v1454
        %1567 = vst.msk [vmem:[#allocation2 + $0x2e8] sm:$0xff] %vm400, %v1455
        %1568 = vst.msk [vmem:[#allocation2 + $0x2f0] sm:$0xff] %vm400, %v1456
        %1569 = vst.msk [vmem:[#allocation2 + $0x2f8] sm:$0xff] %vm400, %v1457
        %1570 = vst.msk [vmem:[#allocation2 + $0x300] sm:$0xff] %vm400, %v1458
        %1571 = vst.msk [vmem:[#allocation2 + $0x308] sm:$0xff] %vm400, %v1459
        %1572 = vst.msk [vmem:[#allocation2 + $0x310] sm:$0xff] %vm400, %v1460
        %1573 = vst.msk [vmem:[#allocation2 + $0x318] sm:$0xff] %vm400, %v1461
        %1574 = vst.msk [vmem:[#allocation2 + $0x320] sm:$0xff] %vm400, %v1462
        %1575 = vst.msk [vmem:[#allocation2 + $0x328] sm:$0xff] %vm400, %v1463
        %1576 = vst.msk [vmem:[#allocation2 + $0x330] sm:$0xff] %vm400, %v1464
        %1577 = vst.msk [vmem:[#allocation2 + $0x338] sm:$0xff] %vm400, %v1465
        %1578 = vst.msk [vmem:[#allocation2 + $0x340] sm:$0xff] %vm400, %v1466
        %1579 = vst.msk [vmem:[#allocation2 + $0x348] sm:$0xff] %vm400, %v1467
        %1580 = vst.msk [vmem:[#allocation2 + $0x350] sm:$0xff] %vm400, %v1468
        %1581 = vst.msk [vmem:[#allocation2 + $0x358] sm:$0xff] %vm400, %v1469
        %1582 = vst.msk [vmem:[#allocation2 + $0x360] sm:$0xff] %vm400, %v1470
        %1583 = vst.msk [vmem:[#allocation2 + $0x368] sm:$0xff] %vm400, %v1471
        %1584 = vst.msk [vmem:[#allocation2 + $0x370] sm:$0xff] %vm400, %v1472
        %1585 = vst.msk [vmem:[#allocation2 + $0x378] sm:$0xff] %vm400, %v1473
        %1586 = vst.msk [vmem:[#allocation2 + $0x380] sm:$0xff] %vm400, 0.0
        %1587 = vst.msk [vmem:[#allocation2 + $0x388] sm:$0xff] %vm400, 0.0
        %1588 = vst.msk [vmem:[#allocation2 + $0x390] sm:$0xff] %vm400, 0.0
        %1589 = vst.msk [vmem:[#allocation2 + $0x398] sm:$0xff] %vm400, 0.0
        %v1590 = vld [vmem:[#allocation2] ss:$2 sm:$0xff]
        %s1591 = scalar_lea.vmem [#allocation2], 16
        %v1592 = vld [vmem:[%s1591] ss:$2 sm:$0xff]
        %s1593 = scalar_lea.vmem [#allocation2], 32
        %v1594 = vld [vmem:[%s1593] ss:$2 sm:$0xff]
        %s1595 = scalar_lea.vmem [#allocation2], 48
        %v1596 = vld [vmem:[%s1595] ss:$2 sm:$0xff]
        %s1597 = scalar_lea.vmem [#allocation2], 64
        %v1598 = vld [vmem:[%s1597] ss:$2 sm:$0xff]
        %s1599 = scalar_lea.vmem [#allocation2], 80
        %v1600 = vld [vmem:[%s1599] ss:$2 sm:$0xff]
        %s1601 = scalar_lea.vmem [#allocation2], 96
        %v1602 = vld [vmem:[%s1601] ss:$2 sm:$0xff]
        %s1603 = scalar_lea.vmem [#allocation2], 112
        %v1604 = vld [vmem:[%s1603] ss:$2 sm:$0xff]
        %s1605 = scalar_lea.vmem [#allocation2], 128
        %v1606 = vld [vmem:[%s1605] ss:$2 sm:$0xff]
        %s1607 = scalar_lea.vmem [#allocation2], 144
        %v1608 = vld [vmem:[%s1607] ss:$2 sm:$0xff]
        %s1609 = scalar_lea.vmem [#allocation2], 160
        %v1610 = vld [vmem:[%s1609] ss:$2 sm:$0xff]
        %s1611 = scalar_lea.vmem [#allocation2], 176
        %v1612 = vld [vmem:[%s1611] ss:$2 sm:$0xff]
        %s1613 = scalar_lea.vmem [#allocation2], 192
        %v1614 = vld [vmem:[%s1613] ss:$2 sm:$0xff]
        %s1615 = scalar_lea.vmem [#allocation2], 208
        %v1616 = vld [vmem:[%s1615] ss:$2 sm:$0xff]
        %s1617 = scalar_lea.vmem [#allocation2], 224
        %v1618 = vld [vmem:[%s1617] ss:$2 sm:$0xff]
        %s1619 = scalar_lea.vmem [#allocation2], 240
        %v1620 = vld [vmem:[%s1619] ss:$2 sm:$0xff]
        %s1621 = scalar_lea.vmem [#allocation2], 256
        %v1622 = vld [vmem:[%s1621] ss:$2 sm:$0xff]
        %s1623 = scalar_lea.vmem [#allocation2], 272
        %v1624 = vld [vmem:[%s1623] ss:$2 sm:$0xff]
        %s1625 = scalar_lea.vmem [#allocation2], 288
        %v1626 = vld [vmem:[%s1625] ss:$2 sm:$0xff]
        %s1627 = scalar_lea.vmem [#allocation2], 304
        %v1628 = vld [vmem:[%s1627] ss:$2 sm:$0xff]
        %s1629 = scalar_lea.vmem [#allocation2], 320
        %v1630 = vld [vmem:[%s1629] ss:$2 sm:$0xff]
        %s1631 = scalar_lea.vmem [#allocation2], 336
        %v1632 = vld [vmem:[%s1631] ss:$2 sm:$0xff]
        %s1633 = scalar_lea.vmem [#allocation2], 352
        %v1634 = vld [vmem:[%s1633] ss:$2 sm:$0xff]
        %s1635 = scalar_lea.vmem [#allocation2], 368
        %v1636 = vld [vmem:[%s1635] ss:$2 sm:$0xff]
        %s1637 = scalar_lea.vmem [#allocation2], 384
        %v1638 = vld [vmem:[%s1637] ss:$2 sm:$0xff]
        %s1639 = scalar_lea.vmem [#allocation2], 400
        %v1640 = vld [vmem:[%s1639] ss:$2 sm:$0xff]
        %s1641 = scalar_lea.vmem [#allocation2], 416
        %v1642 = vld [vmem:[%s1641] ss:$2 sm:$0xff]
        %s1643 = scalar_lea.vmem [#allocation2], 432
        %v1644 = vld [vmem:[%s1643] ss:$2 sm:$0xff]
        %s1645 = scalar_lea.vmem [#allocation2], 448
        %v1646 = vld [vmem:[%s1645] ss:$2 sm:$0xff]
        %s1647 = scalar_lea.vmem [#allocation2], 464
        %v1648 = vld [vmem:[%s1647] ss:$2 sm:$0xff]
        %s1649 = scalar_lea.vmem [#allocation2], 480
        %v1650 = vld [vmem:[%s1649] ss:$2 sm:$0xff]
        %s1651 = scalar_lea.vmem [#allocation2], 496
        %v1652 = vld [vmem:[%s1651] ss:$2 sm:$0xff]
        %s1653 = scalar_lea.vmem [#allocation2], 512
        %v1654 = vld [vmem:[%s1653] ss:$2 sm:$0xff]
        %s1655 = scalar_lea.vmem [#allocation2], 528
        %v1656 = vld [vmem:[%s1655] ss:$2 sm:$0xff]
        %s1657 = scalar_lea.vmem [#allocation2], 544
        %v1658 = vld [vmem:[%s1657] ss:$2 sm:$0xff]
        %s1659 = scalar_lea.vmem [#allocation2], 560
        %v1660 = vld [vmem:[%s1659] ss:$2 sm:$0xff]
        %s1661 = scalar_lea.vmem [#allocation2], 576
        %v1662 = vld [vmem:[%s1661] ss:$2 sm:$0xff]
        %s1663 = scalar_lea.vmem [#allocation2], 592
        %v1664 = vld [vmem:[%s1663] ss:$2 sm:$0xff]
        %s1665 = scalar_lea.vmem [#allocation2], 608
        %v1666 = vld [vmem:[%s1665] ss:$2 sm:$0xff]
        %s1667 = scalar_lea.vmem [#allocation2], 624
        %v1668 = vld [vmem:[%s1667] ss:$2 sm:$0xff]
        %s1669 = scalar_lea.vmem [#allocation2], 640
        %v1670 = vld [vmem:[%s1669] ss:$2 sm:$0xff]
        %s1671 = scalar_lea.vmem [#allocation2], 656
        %v1672 = vld [vmem:[%s1671] ss:$2 sm:$0xff]
        %s1673 = scalar_lea.vmem [#allocation2], 672
        %v1674 = vld [vmem:[%s1673] ss:$2 sm:$0xff]
        %s1675 = scalar_lea.vmem [#allocation2], 688
        %v1676 = vld [vmem:[%s1675] ss:$2 sm:$0xff]
        %s1677 = scalar_lea.vmem [#allocation2], 704
        %v1678 = vld [vmem:[%s1677] ss:$2 sm:$0xff]
        %s1679 = scalar_lea.vmem [#allocation2], 720
        %v1680 = vld [vmem:[%s1679] ss:$2 sm:$0xff]
        %s1681 = scalar_lea.vmem [#allocation2], 736
        %v1682 = vld [vmem:[%s1681] ss:$2 sm:$0xff]
        %s1683 = scalar_lea.vmem [#allocation2], 752
        %v1684 = vld [vmem:[%s1683] ss:$2 sm:$0xff]
        %s1685 = scalar_lea.vmem [#allocation2], 768
        %v1686 = vld [vmem:[%s1685] ss:$2 sm:$0xff]
        %s1687 = scalar_lea.vmem [#allocation2], 784
        %v1688 = vld [vmem:[%s1687] ss:$2 sm:$0xff]
        %s1689 = scalar_lea.vmem [#allocation2], 800
        %v1690 = vld [vmem:[%s1689] ss:$2 sm:$0xff]
        %s1691 = scalar_lea.vmem [#allocation2], 816
        %v1692 = vld [vmem:[%s1691] ss:$2 sm:$0xff]
        %s1693 = scalar_lea.vmem [#allocation2], 832
        %v1694 = vld [vmem:[%s1693] ss:$2 sm:$0xff]
        %s1695 = scalar_lea.vmem [#allocation2], 848
        %v1696 = vld [vmem:[%s1695] ss:$2 sm:$0xff]
        %s1697 = scalar_lea.vmem [#allocation2], 864
        %v1698 = vld [vmem:[%s1697] ss:$2 sm:$0xff]
        %s1699 = scalar_lea.vmem [#allocation2], 880
        %v1700 = vld [vmem:[%s1699] ss:$2 sm:$0xff]
        %s1701 = scalar_lea.vmem [#allocation2], 1
        %v1702 = vld [vmem:[%s1701] ss:$2 sm:$0xff]
        %s1703 = scalar_lea.vmem [#allocation2], 17
        %v1704 = vld [vmem:[%s1703] ss:$2 sm:$0xff]
        %s1705 = scalar_lea.vmem [#allocation2], 33
        %v1706 = vld [vmem:[%s1705] ss:$2 sm:$0xff]
        %s1707 = scalar_lea.vmem [#allocation2], 49
        %v1708 = vld [vmem:[%s1707] ss:$2 sm:$0xff]
        %s1709 = scalar_lea.vmem [#allocation2], 65
        %v1710 = vld [vmem:[%s1709] ss:$2 sm:$0xff]
        %s1711 = scalar_lea.vmem [#allocation2], 81
        %v1712 = vld [vmem:[%s1711] ss:$2 sm:$0xff]
        %s1713 = scalar_lea.vmem [#allocation2], 97
        %v1714 = vld [vmem:[%s1713] ss:$2 sm:$0xff]
        %s1715 = scalar_lea.vmem [#allocation2], 113
        %v1716 = vld [vmem:[%s1715] ss:$2 sm:$0xff]
        %s1717 = scalar_lea.vmem [#allocation2], 129
        %v1718 = vld [vmem:[%s1717] ss:$2 sm:$0xff]
        %s1719 = scalar_lea.vmem [#allocation2], 145
        %v1720 = vld [vmem:[%s1719] ss:$2 sm:$0xff]
        %s1721 = scalar_lea.vmem [#allocation2], 161
        %v1722 = vld [vmem:[%s1721] ss:$2 sm:$0xff]
        %s1723 = scalar_lea.vmem [#allocation2], 177
        %v1724 = vld [vmem:[%s1723] ss:$2 sm:$0xff]
        %s1725 = scalar_lea.vmem [#allocation2], 193
        %v1726 = vld [vmem:[%s1725] ss:$2 sm:$0xff]
        %s1727 = scalar_lea.vmem [#allocation2], 209
        %v1728 = vld [vmem:[%s1727] ss:$2 sm:$0xff]
        %s1729 = scalar_lea.vmem [#allocation2], 225
        %v1730 = vld [vmem:[%s1729] ss:$2 sm:$0xff]
        %s1731 = scalar_lea.vmem [#allocation2], 241
        %v1732 = vld [vmem:[%s1731] ss:$2 sm:$0xff]
        %s1733 = scalar_lea.vmem [#allocation2], 257
        %v1734 = vld [vmem:[%s1733] ss:$2 sm:$0xff]
        %s1735 = scalar_lea.vmem [#allocation2], 273
        %v1736 = vld [vmem:[%s1735] ss:$2 sm:$0xff]
        %s1737 = scalar_lea.vmem [#allocation2], 289
        %v1738 = vld [vmem:[%s1737] ss:$2 sm:$0xff]
        %s1739 = scalar_lea.vmem [#allocation2], 305
        %v1740 = vld [vmem:[%s1739] ss:$2 sm:$0xff]
        %s1741 = scalar_lea.vmem [#allocation2], 321
        %v1742 = vld [vmem:[%s1741] ss:$2 sm:$0xff]
        %s1743 = scalar_lea.vmem [#allocation2], 337
        %v1744 = vld [vmem:[%s1743] ss:$2 sm:$0xff]
        %s1745 = scalar_lea.vmem [#allocation2], 353
        %v1746 = vld [vmem:[%s1745] ss:$2 sm:$0xff]
        %s1747 = scalar_lea.vmem [#allocation2], 369
        %v1748 = vld [vmem:[%s1747] ss:$2 sm:$0xff]
        %s1749 = scalar_lea.vmem [#allocation2], 385
        %v1750 = vld [vmem:[%s1749] ss:$2 sm:$0xff]
        %s1751 = scalar_lea.vmem [#allocation2], 401
        %v1752 = vld [vmem:[%s1751] ss:$2 sm:$0xff]
        %s1753 = scalar_lea.vmem [#allocation2], 417
        %v1754 = vld [vmem:[%s1753] ss:$2 sm:$0xff]
        %s1755 = scalar_lea.vmem [#allocation2], 433
        %v1756 = vld [vmem:[%s1755] ss:$2 sm:$0xff]
        %s1757 = scalar_lea.vmem [#allocation2], 449
        %v1758 = vld [vmem:[%s1757] ss:$2 sm:$0xff]
        %s1759 = scalar_lea.vmem [#allocation2], 465
        %v1760 = vld [vmem:[%s1759] ss:$2 sm:$0xff]
        %s1761 = scalar_lea.vmem [#allocation2], 481
        %v1762 = vld [vmem:[%s1761] ss:$2 sm:$0xff]
        %s1763 = scalar_lea.vmem [#allocation2], 497
        %v1764 = vld [vmem:[%s1763] ss:$2 sm:$0xff]
        %s1765 = scalar_lea.vmem [#allocation2], 513
        %v1766 = vld [vmem:[%s1765] ss:$2 sm:$0xff]
        %s1767 = scalar_lea.vmem [#allocation2], 529
        %v1768 = vld [vmem:[%s1767] ss:$2 sm:$0xff]
        %s1769 = scalar_lea.vmem [#allocation2], 545
        %v1770 = vld [vmem:[%s1769] ss:$2 sm:$0xff]
        %s1771 = scalar_lea.vmem [#allocation2], 561
        %v1772 = vld [vmem:[%s1771] ss:$2 sm:$0xff]
        %s1773 = scalar_lea.vmem [#allocation2], 577
        %v1774 = vld [vmem:[%s1773] ss:$2 sm:$0xff]
        %s1775 = scalar_lea.vmem [#allocation2], 593
        %v1776 = vld [vmem:[%s1775] ss:$2 sm:$0xff]
        %s1777 = scalar_lea.vmem [#allocation2], 609
        %v1778 = vld [vmem:[%s1777] ss:$2 sm:$0xff]
        %s1779 = scalar_lea.vmem [#allocation2], 625
        %v1780 = vld [vmem:[%s1779] ss:$2 sm:$0xff]
        %s1781 = scalar_lea.vmem [#allocation2], 641
        %v1782 = vld [vmem:[%s1781] ss:$2 sm:$0xff]
        %s1783 = scalar_lea.vmem [#allocation2], 657
        %v1784 = vld [vmem:[%s1783] ss:$2 sm:$0xff]
        %s1785 = scalar_lea.vmem [#allocation2], 673
        %v1786 = vld [vmem:[%s1785] ss:$2 sm:$0xff]
        %s1787 = scalar_lea.vmem [#allocation2], 689
        %v1788 = vld [vmem:[%s1787] ss:$2 sm:$0xff]
        %s1789 = scalar_lea.vmem [#allocation2], 705
        %v1790 = vld [vmem:[%s1789] ss:$2 sm:$0xff]
        %s1791 = scalar_lea.vmem [#allocation2], 721
        %v1792 = vld [vmem:[%s1791] ss:$2 sm:$0xff]
        %s1793 = scalar_lea.vmem [#allocation2], 737
        %v1794 = vld [vmem:[%s1793] ss:$2 sm:$0xff]
        %s1795 = scalar_lea.vmem [#allocation2], 753
        %v1796 = vld [vmem:[%s1795] ss:$2 sm:$0xff]
        %s1797 = scalar_lea.vmem [#allocation2], 769
        %v1798 = vld [vmem:[%s1797] ss:$2 sm:$0xff]
        %s1799 = scalar_lea.vmem [#allocation2], 785
        %v1800 = vld [vmem:[%s1799] ss:$2 sm:$0xff]
        %s1801 = scalar_lea.vmem [#allocation2], 801
        %v1802 = vld [vmem:[%s1801] ss:$2 sm:$0xff]
        %s1803 = scalar_lea.vmem [#allocation2], 817
        %v1804 = vld [vmem:[%s1803] ss:$2 sm:$0xff]
        %s1805 = scalar_lea.vmem [#allocation2], 833
        %v1806 = vld [vmem:[%s1805] ss:$2 sm:$0xff]
        %s1807 = scalar_lea.vmem [#allocation2], 849
        %v1808 = vld [vmem:[%s1807] ss:$2 sm:$0xff]
        %s1809 = scalar_lea.vmem [#allocation2], 865
        %v1810 = vld [vmem:[%s1809] ss:$2 sm:$0xff]
        %s1811 = scalar_lea.vmem [#allocation2], 881
        %v1812 = vld [vmem:[%s1811] ss:$2 sm:$0xff]
        %s1813 = scalar_lea.vmem [#allocation2], 896
        %v1814 = vld [vmem:[%s1813] ss:$2 sm:$0xff]
        %s1815 = scalar_lea.vmem [#allocation2], 912
        %v1816 = vld [vmem:[%s1815] ss:$2 sm:$0xff]
        %s1817 = scalar_lea.vmem [#allocation2], 897
        %v1818 = vld [vmem:[%s1817] ss:$2 sm:$0xff]
        %s1819 = scalar_lea.vmem [#allocation2], 913
        %v1820 = vld [vmem:[%s1819] ss:$2 sm:$0xff]
        %v1821 = vmax.f32 %v1590, %v1702
        %v1822 = vmax.f32 %v1592, %v1704
        %v1823 = vmax.f32 %v1594, %v1706
        %v1824 = vmax.f32 %v1596, %v1708
        %v1825 = vmax.f32 %v1598, %v1710
        %v1826 = vmax.f32 %v1600, %v1712
        %v1827 = vmax.f32 %v1602, %v1714
        %v1828 = vmax.f32 %v1604, %v1716
        %v1829 = vmax.f32 %v1606, %v1718
        %v1830 = vmax.f32 %v1608, %v1720
        %v1831 = vmax.f32 %v1610, %v1722
        %v1832 = vmax.f32 %v1612, %v1724
        %v1833 = vmax.f32 %v1614, %v1726
        %v1834 = vmax.f32 %v1616, %v1728
        %v1835 = vmax.f32 %v1618, %v1730
        %v1836 = vmax.f32 %v1620, %v1732
        %v1837 = vmax.f32 %v1622, %v1734
        %v1838 = vmax.f32 %v1624, %v1736
        %v1839 = vmax.f32 %v1626, %v1738
        %v1840 = vmax.f32 %v1628, %v1740
        %v1841 = vmax.f32 %v1630, %v1742
        %v1842 = vmax.f32 %v1632, %v1744
        %v1843 = vmax.f32 %v1634, %v1746
        %v1844 = vmax.f32 %v1636, %v1748
        %v1845 = vmax.f32 %v1638, %v1750
        %v1846 = vmax.f32 %v1640, %v1752
        %v1847 = vmax.f32 %v1642, %v1754
        %v1848 = vmax.f32 %v1644, %v1756
        %v1849 = vmax.f32 %v1646, %v1758
        %v1850 = vmax.f32 %v1648, %v1760
        %v1851 = vmax.f32 %v1650, %v1762
        %v1852 = vmax.f32 %v1652, %v1764
        %v1853 = vmax.f32 %v1654, %v1766
        %v1854 = vmax.f32 %v1656, %v1768
        %v1855 = vmax.f32 %v1658, %v1770
        %v1856 = vmax.f32 %v1660, %v1772
        %v1857 = vmax.f32 %v1662, %v1774
        %v1858 = vmax.f32 %v1664, %v1776
        %v1859 = vmax.f32 %v1666, %v1778
        %v1860 = vmax.f32 %v1668, %v1780
        %v1861 = vmax.f32 %v1670, %v1782
        %v1862 = vmax.f32 %v1672, %v1784
        %v1863 = vmax.f32 %v1674, %v1786
        %v1864 = vmax.f32 %v1676, %v1788
        %v1865 = vmax.f32 %v1678, %v1790
        %v1866 = vmax.f32 %v1680, %v1792
        %v1867 = vmax.f32 %v1682, %v1794
        %v1868 = vmax.f32 %v1684, %v1796
        %v1869 = vmax.f32 %v1686, %v1798
        %v1870 = vmax.f32 %v1688, %v1800
        %v1871 = vmax.f32 %v1690, %v1802
        %v1872 = vmax.f32 %v1692, %v1804
        %v1873 = vmax.f32 %v1694, %v1806
        %v1874 = vmax.f32 %v1696, %v1808
        %v1875 = vmax.f32 %v1698, %v1810
        %v1876 = vmax.f32 %v1700, %v1812
        %v1877 = vmax.f32 %v1814, %v1818
        %v1878 = vmax.f32 %v1816, %v1820
        %v1879 = vmax.f32 %v1821, %v1823
        %v1880 = vmax.f32 %v1822, %v1824
        %v1881 = vmax.f32 %v1823, %v1825
        %v1882 = vmax.f32 %v1824, %v1826
        %v1883 = vmax.f32 %v1825, %v1827
        %v1884 = vmax.f32 %v1826, %v1828
        %v1885 = vmax.f32 %v1827, %v1829
        %v1886 = vmax.f32 %v1828, %v1830
        %v1887 = vmax.f32 %v1829, %v1831
        %v1888 = vmax.f32 %v1830, %v1832
        %v1889 = vmax.f32 %v1831, %v1833
        %v1890 = vmax.f32 %v1832, %v1834
        %v1891 = vmax.f32 %v1833, %v1835
        %v1892 = vmax.f32 %v1834, %v1836
        %v1893 = vmax.f32 %v1835, %v1837
        %v1894 = vmax.f32 %v1836, %v1838
        %v1895 = vmax.f32 %v1837, %v1839
        %v1896 = vmax.f32 %v1838, %v1840
        %v1897 = vmax.f32 %v1839, %v1841
        %v1898 = vmax.f32 %v1840, %v1842
        %v1899 = vmax.f32 %v1841, %v1843
        %v1900 = vmax.f32 %v1842, %v1844
        %v1901 = vmax.f32 %v1843, %v1845
        %v1902 = vmax.f32 %v1844, %v1846
        %v1903 = vmax.f32 %v1845, %v1847
        %v1904 = vmax.f32 %v1846, %v1848
        %v1905 = vmax.f32 %v1847, %v1849
        %v1906 = vmax.f32 %v1848, %v1850
        %v1907 = vmax.f32 %v1849, %v1851
        %v1908 = vmax.f32 %v1850, %v1852
        %v1909 = vmax.f32 %v1851, %v1853
        %v1910 = vmax.f32 %v1852, %v1854
        %v1911 = vmax.f32 %v1853, %v1855
        %v1912 = vmax.f32 %v1854, %v1856
        %v1913 = vmax.f32 %v1855, %v1857
        %v1914 = vmax.f32 %v1856, %v1858
        %v1915 = vmax.f32 %v1857, %v1859
        %v1916 = vmax.f32 %v1858, %v1860
        %v1917 = vmax.f32 %v1859, %v1861
        %v1918 = vmax.f32 %v1860, %v1862
        %v1919 = vmax.f32 %v1861, %v1863
        %v1920 = vmax.f32 %v1862, %v1864
        %v1921 = vmax.f32 %v1863, %v1865
        %v1922 = vmax.f32 %v1864, %v1866
        %v1923 = vmax.f32 %v1865, %v1867
        %v1924 = vmax.f32 %v1866, %v1868
        %v1925 = vmax.f32 %v1867, %v1869
        %v1926 = vmax.f32 %v1868, %v1870
        %v1927 = vmax.f32 %v1869, %v1871
        %v1928 = vmax.f32 %v1870, %v1872
        %v1929 = vmax.f32 %v1871, %v1873
        %v1930 = vmax.f32 %v1872, %v1874
        %v1931 = vmax.f32 %v1873, %v1875
        %v1932 = vmax.f32 %v1874, %v1876
        %v1933 = vmax.f32 %v1875, %v1877
        %v1934 = vmax.f32 %v1876, %v1878
        %1935 = vst.msk [vmem:[#allocation3] sm:$0xff] %vm400, %v1879
        %1936 = vst.msk [vmem:[#allocation3 + $0x8] sm:$0xff] %vm400, %v1880
        %1937 = vst.msk [vmem:[#allocation3 + $0x10] sm:$0xff] %vm400, %v1881
        %1938 = vst.msk [vmem:[#allocation3 + $0x18] sm:$0xff] %vm400, %v1882
        %1939 = vst.msk [vmem:[#allocation3 + $0x20] sm:$0xff] %vm400, %v1883
        %1940 = vst.msk [vmem:[#allocation3 + $0x28] sm:$0xff] %vm400, %v1884
        %1941 = vst.msk [vmem:[#allocation3 + $0x30] sm:$0xff] %vm400, %v1885
        %1942 = vst.msk [vmem:[#allocation3 + $0x38] sm:$0xff] %vm400, %v1886
        %1943 = vst.msk [vmem:[#allocation3 + $0x40] sm:$0xff] %vm400, %v1887
        %1944 = vst.msk [vmem:[#allocation3 + $0x48] sm:$0xff] %vm400, %v1888
        %1945 = vst.msk [vmem:[#allocation3 + $0x50] sm:$0xff] %vm400, %v1889
        %1946 = vst.msk [vmem:[#allocation3 + $0x58] sm:$0xff] %vm400, %v1890
        %1947 = vst.msk [vmem:[#allocation3 + $0x60] sm:$0xff] %vm400, %v1891
        %1948 = vst.msk [vmem:[#allocation3 + $0x68] sm:$0xff] %vm400, %v1892
        %1949 = vst.msk [vmem:[#allocation3 + $0x70] sm:$0xff] %vm400, %v1893
        %1950 = vst.msk [vmem:[#allocation3 + $0x78] sm:$0xff] %vm400, %v1894
        %1951 = vst.msk [vmem:[#allocation3 + $0x80] sm:$0xff] %vm400, %v1895
        %1952 = vst.msk [vmem:[#allocation3 + $0x88] sm:$0xff] %vm400, %v1896
        %1953 = vst.msk [vmem:[#allocation3 + $0x90] sm:$0xff] %vm400, %v1897
        %1954 = vst.msk [vmem:[#allocation3 + $0x98] sm:$0xff] %vm400, %v1898
        %1955 = vst.msk [vmem:[#allocation3 + $0xa0] sm:$0xff] %vm400, %v1899
        %1956 = vst.msk [vmem:[#allocation3 + $0xa8] sm:$0xff] %vm400, %v1900
        %1957 = vst.msk [vmem:[#allocation3 + $0xb0] sm:$0xff] %vm400, %v1901
        %1958 = vst.msk [vmem:[#allocation3 + $0xb8] sm:$0xff] %vm400, %v1902
        %1959 = vst.msk [vmem:[#allocation3 + $0xc0] sm:$0xff] %vm400, %v1903
        %1960 = vst.msk [vmem:[#allocation3 + $0xc8] sm:$0xff] %vm400, %v1904
        %1961 = vst.msk [vmem:[#allocation3 + $0xd0] sm:$0xff] %vm400, %v1905
        %1962 = vst.msk [vmem:[#allocation3 + $0xd8] sm:$0xff] %vm400, %v1906
        %1963 = vst.msk [vmem:[#allocation3 + $0xe0] sm:$0xff] %vm400, %v1907
        %1964 = vst.msk [vmem:[#allocation3 + $0xe8] sm:$0xff] %vm400, %v1908
        %1965 = vst.msk [vmem:[#allocation3 + $0xf0] sm:$0xff] %vm400, %v1909
        %1966 = vst.msk [vmem:[#allocation3 + $0xf8] sm:$0xff] %vm400, %v1910
        %1967 = vst.msk [vmem:[#allocation3 + $0x100] sm:$0xff] %vm400, %v1911
        %1968 = vst.msk [vmem:[#allocation3 + $0x108] sm:$0xff] %vm400, %v1912
        %1969 = vst.msk [vmem:[#allocation3 + $0x110] sm:$0xff] %vm400, %v1913
        %1970 = vst.msk [vmem:[#allocation3 + $0x118] sm:$0xff] %vm400, %v1914
        %1971 = vst.msk [vmem:[#allocation3 + $0x120] sm:$0xff] %vm400, %v1915
        %1972 = vst.msk [vmem:[#allocation3 + $0x128] sm:$0xff] %vm400, %v1916
        %1973 = vst.msk [vmem:[#allocation3 + $0x130] sm:$0xff] %vm400, %v1917
        %1974 = vst.msk [vmem:[#allocation3 + $0x138] sm:$0xff] %vm400, %v1918
        %1975 = vst.msk [vmem:[#allocation3 + $0x140] sm:$0xff] %vm400, %v1919
        %1976 = vst.msk [vmem:[#allocation3 + $0x148] sm:$0xff] %vm400, %v1920
        %1977 = vst.msk [vmem:[#allocation3 + $0x150] sm:$0xff] %vm400, %v1921
        %1978 = vst.msk [vmem:[#allocation3 + $0x158] sm:$0xff] %vm400, %v1922
        %1979 = vst.msk [vmem:[#allocation3 + $0x160] sm:$0xff] %vm400, %v1923
        %1980 = vst.msk [vmem:[#allocation3 + $0x168] sm:$0xff] %vm400, %v1924
        %1981 = vst.msk [vmem:[#allocation3 + $0x170] sm:$0xff] %vm400, %v1925
        %1982 = vst.msk [vmem:[#allocation3 + $0x178] sm:$0xff] %vm400, %v1926
        %1983 = vst.msk [vmem:[#allocation3 + $0x180] sm:$0xff] %vm400, %v1927
        %1984 = vst.msk [vmem:[#allocation3 + $0x188] sm:$0xff] %vm400, %v1928
        %1985 = vst.msk [vmem:[#allocation3 + $0x190] sm:$0xff] %vm400, %v1929
        %1986 = vst.msk [vmem:[#allocation3 + $0x198] sm:$0xff] %vm400, %v1930
        %1987 = vst.msk [vmem:[#allocation3 + $0x1a0] sm:$0xff] %vm400, %v1931
        %1988 = vst.msk [vmem:[#allocation3 + $0x1a8] sm:$0xff] %vm400, %v1932
        %1989 = vst.msk [vmem:[#allocation3 + $0x1b0] sm:$0xff] %vm400, %v1933
        %1990 = vst.msk [vmem:[#allocation3 + $0x1b8] sm:$0xff] %vm400, %v1934
        %v1991 = vld [vmem:[#allocation3] sm:$0xff]
        %v1992 = vld [vmem:[#allocation3 + $0x8] sm:$0xff]
        %v1993 = vld [vmem:[#allocation3 + $0x10] sm:$0xff]
        %v1994 = vld [vmem:[#allocation3 + $0x18] sm:$0xff]
        %v1995 = vld [vmem:[#allocation3 + $0x20] sm:$0xff]
        %v1996 = vld [vmem:[#allocation3 + $0x28] sm:$0xff]
        %v1997 = vld [vmem:[#allocation3 + $0x30] sm:$0xff]
        %v1998 = vld [vmem:[#allocation3 + $0x38] sm:$0xff]
        %v1999 = vld [vmem:[#allocation3 + $0x40] sm:$0xff]
        %v2000 = vld [vmem:[#allocation3 + $0x48] sm:$0xff]
        %v2001 = vld [vmem:[#allocation3 + $0x50] sm:$0xff]
        %v2002 = vld [vmem:[#allocation3 + $0x58] sm:$0xff]
        %v2003 = vld [vmem:[#allocation3 + $0x60] sm:$0xff]
        %v2004 = vld [vmem:[#allocation3 + $0x68] sm:$0xff]
        %v2005 = vld [vmem:[#allocation3 + $0x70] sm:$0xff]
        %v2006 = vld [vmem:[#allocation3 + $0x78] sm:$0xff]
        %v2007 = vld [vmem:[#allocation3 + $0x80] sm:$0xff]
        %v2008 = vld [vmem:[#allocation3 + $0x88] sm:$0xff]
        %v2009 = vld [vmem:[#allocation3 + $0x90] sm:$0xff]
        %v2010 = vld [vmem:[#allocation3 + $0x98] sm:$0xff]
        %v2011 = vld [vmem:[#allocation3 + $0xa0] sm:$0xff]
        %v2012 = vld [vmem:[#allocation3 + $0xa8] sm:$0xff]
        %v2013 = vld [vmem:[#allocation3 + $0xb0] sm:$0xff]
        %v2014 = vld [vmem:[#allocation3 + $0xb8] sm:$0xff]
        %v2015 = vld [vmem:[#allocation3 + $0xc0] sm:$0xff]
        %v2016 = vld [vmem:[#allocation3 + $0xc8] sm:$0xff]
        %v2017 = vld [vmem:[#allocation3 + $0xd0] sm:$0xff]
        %v2018 = vld [vmem:[#allocation3 + $0xd8] sm:$0xff]
        %v2019 = vld [vmem:[#allocation3 + $0xe0] sm:$0xff]
        %v2020 = vld [vmem:[#allocation3 + $0xe8] sm:$0xff]
        %v2021 = vld [vmem:[#allocation3 + $0xf0] sm:$0xff]
        %v2022 = vld [vmem:[#allocation3 + $0xf8] sm:$0xff]
        %v2023 = vld [vmem:[#allocation3 + $0x100] sm:$0xff]
        %v2024 = vld [vmem:[#allocation3 + $0x108] sm:$0xff]
        %v2025 = vld [vmem:[#allocation3 + $0x110] sm:$0xff]
        %v2026 = vld [vmem:[#allocation3 + $0x118] sm:$0xff]
        %v2027 = vld [vmem:[#allocation3 + $0x120] sm:$0xff]
        %v2028 = vld [vmem:[#allocation3 + $0x128] sm:$0xff]
        %v2029 = vld [vmem:[#allocation3 + $0x130] sm:$0xff]
        %v2030 = vld [vmem:[#allocation3 + $0x138] sm:$0xff]
        %v2031 = vld [vmem:[#allocation3 + $0x140] sm:$0xff]
        %v2032 = vld [vmem:[#allocation3 + $0x148] sm:$0xff]
        %v2033 = vld [vmem:[#allocation3 + $0x150] sm:$0xff]
        %v2034 = vld [vmem:[#allocation3 + $0x158] sm:$0xff]
        %v2035 = vld [vmem:[#allocation3 + $0x160] sm:$0xff]
        %v2036 = vld [vmem:[#allocation3 + $0x168] sm:$0xff]
        %v2037 = vld [vmem:[#allocation3 + $0x170] sm:$0xff]
        %v2038 = vld [vmem:[#allocation3 + $0x178] sm:$0xff]
        %v2039 = vld [vmem:[#allocation3 + $0x180] sm:$0xff]
        %v2040 = vld [vmem:[#allocation3 + $0x188] sm:$0xff]
        %v2041 = vld [vmem:[#allocation3 + $0x190] sm:$0xff]
        %v2042 = vld [vmem:[#allocation3 + $0x198] sm:$0xff]
        %v2043 = vld [vmem:[#allocation3 + $0x1a0] sm:$0xff]
        %v2044 = vld [vmem:[#allocation3 + $0x1a8] sm:$0xff]
        %v2045 = vld [vmem:[#allocation3 + $0x1] sm:$0xff]
        %v2046 = vld [vmem:[#allocation3 + $0x9] sm:$0xff]
        %v2047 = vld [vmem:[#allocation3 + $0x11] sm:$0xff]
        %v2048 = vld [vmem:[#allocation3 + $0x19] sm:$0xff]
        %v2049 = vld [vmem:[#allocation3 + $0x21] sm:$0xff]
        %v2050 = vld [vmem:[#allocation3 + $0x29] sm:$0xff]
        %v2051 = vld [vmem:[#allocation3 + $0x31] sm:$0xff]
        %v2052 = vld [vmem:[#allocation3 + $0x39] sm:$0xff]
        %v2053 = vld [vmem:[#allocation3 + $0x41] sm:$0xff]
        %v2054 = vld [vmem:[#allocation3 + $0x49] sm:$0xff]
        %v2055 = vld [vmem:[#allocation3 + $0x51] sm:$0xff]
        %v2056 = vld [vmem:[#allocation3 + $0x59] sm:$0xff]
        %v2057 = vld [vmem:[#allocation3 + $0x61] sm:$0xff]
        %v2058 = vld [vmem:[#allocation3 + $0x69] sm:$0xff]
        %v2059 = vld [vmem:[#allocation3 + $0x71] sm:$0xff]
        %v2060 = vld [vmem:[#allocation3 + $0x79] sm:$0xff]
        %v2061 = vld [vmem:[#allocation3 + $0x81] sm:$0xff]
        %v2062 = vld [vmem:[#allocation3 + $0x89] sm:$0xff]
        %v2063 = vld [vmem:[#allocation3 + $0x91] sm:$0xff]
        %v2064 = vld [vmem:[#allocation3 + $0x99] sm:$0xff]
        %v2065 = vld [vmem:[#allocation3 + $0xa1] sm:$0xff]
        %v2066 = vld [vmem:[#allocation3 + $0xa9] sm:$0xff]
        %v2067 = vld [vmem:[#allocation3 + $0xb1] sm:$0xff]
        %v2068 = vld [vmem:[#allocation3 + $0xb9] sm:$0xff]
        %v2069 = vld [vmem:[#allocation3 + $0xc1] sm:$0xff]
        %v2070 = vld [vmem:[#allocation3 + $0xc9] sm:$0xff]
        %v2071 = vld [vmem:[#allocation3 + $0xd1] sm:$0xff]
        %v2072 = vld [vmem:[#allocation3 + $0xd9] sm:$0xff]
        %v2073 = vld [vmem:[#allocation3 + $0xe1] sm:$0xff]
        %v2074 = vld [vmem:[#allocation3 + $0xe9] sm:$0xff]
        %v2075 = vld [vmem:[#allocation3 + $0xf1] sm:$0xff]
        %v2076 = vld [vmem:[#allocation3 + $0xf9] sm:$0xff]
        %v2077 = vld [vmem:[#allocation3 + $0x101] sm:$0xff]
        %v2078 = vld [vmem:[#allocation3 + $0x109] sm:$0xff]
        %v2079 = vld [vmem:[#allocation3 + $0x111] sm:$0xff]
        %v2080 = vld [vmem:[#allocation3 + $0x119] sm:$0xff]
        %v2081 = vld [vmem:[#allocation3 + $0x121] sm:$0xff]
        %v2082 = vld [vmem:[#allocation3 + $0x129] sm:$0xff]
        %v2083 = vld [vmem:[#allocation3 + $0x131] sm:$0xff]
        %v2084 = vld [vmem:[#allocation3 + $0x139] sm:$0xff]
        %v2085 = vld [vmem:[#allocation3 + $0x141] sm:$0xff]
        %v2086 = vld [vmem:[#allocation3 + $0x149] sm:$0xff]
        %v2087 = vld [vmem:[#allocation3 + $0x151] sm:$0xff]
        %v2088 = vld [vmem:[#allocation3 + $0x159] sm:$0xff]
        %v2089 = vld [vmem:[#allocation3 + $0x161] sm:$0xff]
        %v2090 = vld [vmem:[#allocation3 + $0x169] sm:$0xff]
        %v2091 = vld [vmem:[#allocation3 + $0x171] sm:$0xff]
        %v2092 = vld [vmem:[#allocation3 + $0x179] sm:$0xff]
        %v2093 = vld [vmem:[#allocation3 + $0x181] sm:$0xff]
        %v2094 = vld [vmem:[#allocation3 + $0x189] sm:$0xff]
        %v2095 = vld [vmem:[#allocation3 + $0x191] sm:$0xff]
        %v2096 = vld [vmem:[#allocation3 + $0x199] sm:$0xff]
        %v2097 = vld [vmem:[#allocation3 + $0x1a1] sm:$0xff]
        %v2098 = vld [vmem:[#allocation3 + $0x1a9] sm:$0xff]
        %v2099 = vld [vmem:[#allocation3 + $0x2] sm:$0xff]
        %v2100 = vld [vmem:[#allocation3 + $0xa] sm:$0xff]
        %v2101 = vld [vmem:[#allocation3 + $0x12] sm:$0xff]
        %v2102 = vld [vmem:[#allocation3 + $0x1a] sm:$0xff]
        %v2103 = vld [vmem:[#allocation3 + $0x22] sm:$0xff]
        %v2104 = vld [vmem:[#allocation3 + $0x2a] sm:$0xff]
        %v2105 = vld [vmem:[#allocation3 + $0x32] sm:$0xff]
        %v2106 = vld [vmem:[#allocation3 + $0x3a] sm:$0xff]
        %v2107 = vld [vmem:[#allocation3 + $0x42] sm:$0xff]
        %v2108 = vld [vmem:[#allocation3 + $0x4a] sm:$0xff]
        %v2109 = vld [vmem:[#allocation3 + $0x52] sm:$0xff]
        %v2110 = vld [vmem:[#allocation3 + $0x5a] sm:$0xff]
        %v2111 = vld [vmem:[#allocation3 + $0x62] sm:$0xff]
        %v2112 = vld [vmem:[#allocation3 + $0x6a] sm:$0xff]
        %v2113 = vld [vmem:[#allocation3 + $0x72] sm:$0xff]
        %v2114 = vld [vmem:[#allocation3 + $0x7a] sm:$0xff]
        %v2115 = vld [vmem:[#allocation3 + $0x82] sm:$0xff]
        %v2116 = vld [vmem:[#allocation3 + $0x8a] sm:$0xff]
        %v2117 = vld [vmem:[#allocation3 + $0x92] sm:$0xff]
        %v2118 = vld [vmem:[#allocation3 + $0x9a] sm:$0xff]
        %v2119 = vld [vmem:[#allocation3 + $0xa2] sm:$0xff]
        %v2120 = vld [vmem:[#allocation3 + $0xaa] sm:$0xff]
        %v2121 = vld [vmem:[#allocation3 + $0xb2] sm:$0xff]
        %v2122 = vld [vmem:[#allocation3 + $0xba] sm:$0xff]
        %v2123 = vld [vmem:[#allocation3 + $0xc2] sm:$0xff]
        %v2124 = vld [vmem:[#allocation3 + $0xca] sm:$0xff]
        %v2125 = vld [vmem:[#allocation3 + $0xd2] sm:$0xff]
        %v2126 = vld [vmem:[#allocation3 + $0xda] sm:$0xff]
        %v2127 = vld [vmem:[#allocation3 + $0xe2] sm:$0xff]
        %v2128 = vld [vmem:[#allocation3 + $0xea] sm:$0xff]
        %v2129 = vld [vmem:[#allocation3 + $0xf2] sm:$0xff]
        %v2130 = vld [vmem:[#allocation3 + $0xfa] sm:$0xff]
        %v2131 = vld [vmem:[#allocation3 + $0x102] sm:$0xff]
        %v2132 = vld [vmem:[#allocation3 + $0x10a] sm:$0xff]
        %v2133 = vld [vmem:[#allocation3 + $0x112] sm:$0xff]
        %v2134 = vld [vmem:[#allocation3 + $0x11a] sm:$0xff]
        %v2135 = vld [vmem:[#allocation3 + $0x122] sm:$0xff]
        %v2136 = vld [vmem:[#allocation3 + $0x12a] sm:$0xff]
        %v2137 = vld [vmem:[#allocation3 + $0x132] sm:$0xff]
        %v2138 = vld [vmem:[#allocation3 + $0x13a] sm:$0xff]
        %v2139 = vld [vmem:[#allocation3 + $0x142] sm:$0xff]
        %v2140 = vld [vmem:[#allocation3 + $0x14a] sm:$0xff]
        %v2141 = vld [vmem:[#allocation3 + $0x152] sm:$0xff]
        %v2142 = vld [vmem:[#allocation3 + $0x15a] sm:$0xff]
        %v2143 = vld [vmem:[#allocation3 + $0x162] sm:$0xff]
        %v2144 = vld [vmem:[#allocation3 + $0x16a] sm:$0xff]
        %v2145 = vld [vmem:[#allocation3 + $0x172] sm:$0xff]
        %v2146 = vld [vmem:[#allocation3 + $0x17a] sm:$0xff]
        %v2147 = vld [vmem:[#allocation3 + $0x182] sm:$0xff]
        %v2148 = vld [vmem:[#allocation3 + $0x18a] sm:$0xff]
        %v2149 = vld [vmem:[#allocation3 + $0x192] sm:$0xff]
        %v2150 = vld [vmem:[#allocation3 + $0x19a] sm:$0xff]
        %v2151 = vld [vmem:[#allocation3 + $0x1a2] sm:$0xff]
        %v2152 = vld [vmem:[#allocation3 + $0x1aa] sm:$0xff]
        %v2153 = vld [vmem:[#allocation3 + $0x3] sm:$0xff]
        %v2154 = vld [vmem:[#allocation3 + $0xb] sm:$0xff]
        %v2155 = vld [vmem:[#allocation3 + $0x13] sm:$0xff]
        %v2156 = vld [vmem:[#allocation3 + $0x1b] sm:$0xff]
        %v2157 = vld [vmem:[#allocation3 + $0x23] sm:$0xff]
        %v2158 = vld [vmem:[#allocation3 + $0x2b] sm:$0xff]
        %v2159 = vld [vmem:[#allocation3 + $0x33] sm:$0xff]
        %v2160 = vld [vmem:[#allocation3 + $0x3b] sm:$0xff]
        %v2161 = vld [vmem:[#allocation3 + $0x43] sm:$0xff]
        %v2162 = vld [vmem:[#allocation3 + $0x4b] sm:$0xff]
        %v2163 = vld [vmem:[#allocation3 + $0x53] sm:$0xff]
        %v2164 = vld [vmem:[#allocation3 + $0x5b] sm:$0xff]
        %v2165 = vld [vmem:[#allocation3 + $0x63] sm:$0xff]
        %v2166 = vld [vmem:[#allocation3 + $0x6b] sm:$0xff]
        %v2167 = vld [vmem:[#allocation3 + $0x73] sm:$0xff]
        %v2168 = vld [vmem:[#allocation3 + $0x7b] sm:$0xff]
        %v2169 = vld [vmem:[#allocation3 + $0x83] sm:$0xff]
        %v2170 = vld [vmem:[#allocation3 + $0x8b] sm:$0xff]
        %v2171 = vld [vmem:[#allocation3 + $0x93] sm:$0xff]
        %v2172 = vld [vmem:[#allocation3 + $0x9b] sm:$0xff]
        %v2173 = vld [vmem:[#allocation3 + $0xa3] sm:$0xff]
        %v2174 = vld [vmem:[#allocation3 + $0xab] sm:$0xff]
        %v2175 = vld [vmem:[#allocation3 + $0xb3] sm:$0xff]
        %v2176 = vld [vmem:[#allocation3 + $0xbb] sm:$0xff]
        %v2177 = vld [vmem:[#allocation3 + $0xc3] sm:$0xff]
        %v2178 = vld [vmem:[#allocation3 + $0xcb] sm:$0xff]
        %v2179 = vld [vmem:[#allocation3 + $0xd3] sm:$0xff]
        %v2180 = vld [vmem:[#allocation3 + $0xdb] sm:$0xff]
        %v2181 = vld [vmem:[#allocation3 + $0xe3] sm:$0xff]
        %v2182 = vld [vmem:[#allocation3 + $0xeb] sm:$0xff]
        %v2183 = vld [vmem:[#allocation3 + $0xf3] sm:$0xff]
        %v2184 = vld [vmem:[#allocation3 + $0xfb] sm:$0xff]
        %v2185 = vld [vmem:[#allocation3 + $0x103] sm:$0xff]
        %v2186 = vld [vmem:[#allocation3 + $0x10b] sm:$0xff]
        %v2187 = vld [vmem:[#allocation3 + $0x113] sm:$0xff]
        %v2188 = vld [vmem:[#allocation3 + $0x11b] sm:$0xff]
        %v2189 = vld [vmem:[#allocation3 + $0x123] sm:$0xff]
        %v2190 = vld [vmem:[#allocation3 + $0x12b] sm:$0xff]
        %v2191 = vld [vmem:[#allocation3 + $0x133] sm:$0xff]
        %v2192 = vld [vmem:[#allocation3 + $0x13b] sm:$0xff]
        %v2193 = vld [vmem:[#allocation3 + $0x143] sm:$0xff]
        %v2194 = vld [vmem:[#allocation3 + $0x14b] sm:$0xff]
        %v2195 = vld [vmem:[#allocation3 + $0x153] sm:$0xff]
        %v2196 = vld [vmem:[#allocation3 + $0x15b] sm:$0xff]
        %v2197 = vld [vmem:[#allocation3 + $0x163] sm:$0xff]
        %v2198 = vld [vmem:[#allocation3 + $0x16b] sm:$0xff]
        %v2199 = vld [vmem:[#allocation3 + $0x173] sm:$0xff]
        %v2200 = vld [vmem:[#allocation3 + $0x17b] sm:$0xff]
        %v2201 = vld [vmem:[#allocation3 + $0x183] sm:$0xff]
        %v2202 = vld [vmem:[#allocation3 + $0x18b] sm:$0xff]
        %v2203 = vld [vmem:[#allocation3 + $0x193] sm:$0xff]
        %v2204 = vld [vmem:[#allocation3 + $0x19b] sm:$0xff]
        %v2205 = vld [vmem:[#allocation3 + $0x1a3] sm:$0xff]
        %v2206 = vld [vmem:[#allocation3 + $0x1ab] sm:$0xff]
        %v2207 = vld [vmem:[#allocation3 + $0x4] sm:$0xff]
        %v2208 = vld [vmem:[#allocation3 + $0xc] sm:$0xff]
        %v2209 = vld [vmem:[#allocation3 + $0x14] sm:$0xff]
        %v2210 = vld [vmem:[#allocation3 + $0x1c] sm:$0xff]
        %v2211 = vld [vmem:[#allocation3 + $0x24] sm:$0xff]
        %v2212 = vld [vmem:[#allocation3 + $0x2c] sm:$0xff]
        %v2213 = vld [vmem:[#allocation3 + $0x34] sm:$0xff]
        %v2214 = vld [vmem:[#allocation3 + $0x3c] sm:$0xff]
        %v2215 = vld [vmem:[#allocation3 + $0x44] sm:$0xff]
        %v2216 = vld [vmem:[#allocation3 + $0x4c] sm:$0xff]
        %v2217 = vld [vmem:[#allocation3 + $0x54] sm:$0xff]
        %v2218 = vld [vmem:[#allocation3 + $0x5c] sm:$0xff]
        %v2219 = vld [vmem:[#allocation3 + $0x64] sm:$0xff]
        %v2220 = vld [vmem:[#allocation3 + $0x6c] sm:$0xff]
        %v2221 = vld [vmem:[#allocation3 + $0x74] sm:$0xff]
        %v2222 = vld [vmem:[#allocation3 + $0x7c] sm:$0xff]
        %v2223 = vld [vmem:[#allocation3 + $0x84] sm:$0xff]
        %v2224 = vld [vmem:[#allocation3 + $0x8c] sm:$0xff]
        %v2225 = vld [vmem:[#allocation3 + $0x94] sm:$0xff]
        %v2226 = vld [vmem:[#allocation3 + $0x9c] sm:$0xff]
        %v2227 = vld [vmem:[#allocation3 + $0xa4] sm:$0xff]
        %v2228 = vld [vmem:[#allocation3 + $0xac] sm:$0xff]
        %v2229 = vld [vmem:[#allocation3 + $0xb4] sm:$0xff]
        %v2230 = vld [vmem:[#allocation3 + $0xbc] sm:$0xff]
        %v2231 = vld [vmem:[#allocation3 + $0xc4] sm:$0xff]
        %v2232 = vld [vmem:[#allocation3 + $0xcc] sm:$0xff]
        %v2233 = vld [vmem:[#allocation3 + $0xd4] sm:$0xff]
        %v2234 = vld [vmem:[#allocation3 + $0xdc] sm:$0xff]
        %v2235 = vld [vmem:[#allocation3 + $0xe4] sm:$0xff]
        %v2236 = vld [vmem:[#allocation3 + $0xec] sm:$0xff]
        %v2237 = vld [vmem:[#allocation3 + $0xf4] sm:$0xff]
        %v2238 = vld [vmem:[#allocation3 + $0xfc] sm:$0xff]
        %v2239 = vld [vmem:[#allocation3 + $0x104] sm:$0xff]
        %v2240 = vld [vmem:[#allocation3 + $0x10c] sm:$0xff]
        %v2241 = vld [vmem:[#allocation3 + $0x114] sm:$0xff]
        %v2242 = vld [vmem:[#allocation3 + $0x11c] sm:$0xff]
        %v2243 = vld [vmem:[#allocation3 + $0x124] sm:$0xff]
        %v2244 = vld [vmem:[#allocation3 + $0x12c] sm:$0xff]
        %v2245 = vld [vmem:[#allocation3 + $0x134] sm:$0xff]
        %v2246 = vld [vmem:[#allocation3 + $0x13c] sm:$0xff]
        %v2247 = vld [vmem:[#allocation3 + $0x144] sm:$0xff]
        %v2248 = vld [vmem:[#allocation3 + $0x14c] sm:$0xff]
        %v2249 = vld [vmem:[#allocation3 + $0x154] sm:$0xff]
        %v2250 = vld [vmem:[#allocation3 + $0x15c] sm:$0xff]
        %v2251 = vld [vmem:[#allocation3 + $0x164] sm:$0xff]
        %v2252 = vld [vmem:[#allocation3 + $0x16c] sm:$0xff]
        %v2253 = vld [vmem:[#allocation3 + $0x174] sm:$0xff]
        %v2254 = vld [vmem:[#allocation3 + $0x17c] sm:$0xff]
        %v2255 = vld [vmem:[#allocation3 + $0x184] sm:$0xff]
        %v2256 = vld [vmem:[#allocation3 + $0x18c] sm:$0xff]
        %v2257 = vld [vmem:[#allocation3 + $0x194] sm:$0xff]
        %v2258 = vld [vmem:[#allocation3 + $0x19c] sm:$0xff]
        %v2259 = vld [vmem:[#allocation3 + $0x1a4] sm:$0xff]
        %v2260 = vld [vmem:[#allocation3 + $0x1ac] sm:$0xff]
        %2315 = vrot.lane.b32.xlu0 %v2045, 32
        %v2316 = vpop.permute.xlu0 %2315
        %2317 = vrot.lane.b32.xlu0 %v2046, 32
        %v2318 = vpop.permute.xlu0 %2317
        %2319 = vrot.lane.b32.xlu0 %v2047, 32
        %v2320 = vpop.permute.xlu0 %2319
        %2321 = vrot.lane.b32.xlu0 %v2048, 32
        %v2322 = vpop.permute.xlu0 %2321
        %2323 = vrot.lane.b32.xlu0 %v2049, 32
        %v2324 = vpop.permute.xlu0 %2323
        %2325 = vrot.lane.b32.xlu0 %v2050, 32
        %v2326 = vpop.permute.xlu0 %2325
        %2327 = vrot.lane.b32.xlu0 %v2051, 32
        %v2328 = vpop.permute.xlu0 %2327
        %2329 = vrot.lane.b32.xlu0 %v2052, 32
        %v2330 = vpop.permute.xlu0 %2329
        %2331 = vrot.lane.b32.xlu0 %v2053, 32
        %v2332 = vpop.permute.xlu0 %2331
        %2333 = vrot.lane.b32.xlu0 %v2054, 32
        %v2334 = vpop.permute.xlu0 %2333
        %2335 = vrot.lane.b32.xlu0 %v2055, 32
        %v2336 = vpop.permute.xlu0 %2335
        %2337 = vrot.lane.b32.xlu0 %v2056, 32
        %v2338 = vpop.permute.xlu0 %2337
        %2339 = vrot.lane.b32.xlu0 %v2057, 32
        %v2340 = vpop.permute.xlu0 %2339
        %2341 = vrot.lane.b32.xlu0 %v2058, 32
        %v2342 = vpop.permute.xlu0 %2341
        %2343 = vrot.lane.b32.xlu0 %v2059, 32
        %v2344 = vpop.permute.xlu0 %2343
        %2345 = vrot.lane.b32.xlu0 %v2060, 32
        %v2346 = vpop.permute.xlu0 %2345
        %2347 = vrot.lane.b32.xlu0 %v2061, 32
        %v2348 = vpop.permute.xlu0 %2347
        %2349 = vrot.lane.b32.xlu0 %v2062, 32
        %v2350 = vpop.permute.xlu0 %2349
        %2351 = vrot.lane.b32.xlu0 %v2063, 32
        %v2352 = vpop.permute.xlu0 %2351
        %2353 = vrot.lane.b32.xlu0 %v2064, 32
        %v2354 = vpop.permute.xlu0 %2353
        %2355 = vrot.lane.b32.xlu0 %v2065, 32
        %v2356 = vpop.permute.xlu0 %2355
        %2357 = vrot.lane.b32.xlu0 %v2066, 32
        %v2358 = vpop.permute.xlu0 %2357
        %2359 = vrot.lane.b32.xlu0 %v2067, 32
        %v2360 = vpop.permute.xlu0 %2359
        %2361 = vrot.lane.b32.xlu0 %v2068, 32
        %v2362 = vpop.permute.xlu0 %2361
        %2363 = vrot.lane.b32.xlu0 %v2069, 32
        %v2364 = vpop.permute.xlu0 %2363
        %2365 = vrot.lane.b32.xlu0 %v2070, 32
        %v2366 = vpop.permute.xlu0 %2365
        %2367 = vrot.lane.b32.xlu0 %v2071, 32
        %v2368 = vpop.permute.xlu0 %2367
        %2369 = vrot.lane.b32.xlu0 %v2072, 32
        %v2370 = vpop.permute.xlu0 %2369
        %2371 = vrot.lane.b32.xlu0 %v2073, 32
        %v2372 = vpop.permute.xlu0 %2371
        %2373 = vrot.lane.b32.xlu0 %v2074, 32
        %v2374 = vpop.permute.xlu0 %2373
        %2375 = vrot.lane.b32.xlu0 %v2075, 32
        %v2376 = vpop.permute.xlu0 %2375
        %2377 = vrot.lane.b32.xlu0 %v2076, 32
        %v2378 = vpop.permute.xlu0 %2377
        %2379 = vrot.lane.b32.xlu0 %v2077, 32
        %v2380 = vpop.permute.xlu0 %2379
        %2381 = vrot.lane.b32.xlu0 %v2078, 32
        %v2382 = vpop.permute.xlu0 %2381
        %2383 = vrot.lane.b32.xlu0 %v2079, 32
        %v2384 = vpop.permute.xlu0 %2383
        %2385 = vrot.lane.b32.xlu0 %v2080, 32
        %v2386 = vpop.permute.xlu0 %2385
        %2387 = vrot.lane.b32.xlu0 %v2081, 32
        %v2388 = vpop.permute.xlu0 %2387
        %2389 = vrot.lane.b32.xlu0 %v2082, 32
        %v2390 = vpop.permute.xlu0 %2389
        %2391 = vrot.lane.b32.xlu0 %v2083, 32
        %v2392 = vpop.permute.xlu0 %2391
        %2393 = vrot.lane.b32.xlu0 %v2084, 32
        %v2394 = vpop.permute.xlu0 %2393
        %2395 = vrot.lane.b32.xlu0 %v2085, 32
        %v2396 = vpop.permute.xlu0 %2395
        %2397 = vrot.lane.b32.xlu0 %v2086, 32
        %v2398 = vpop.permute.xlu0 %2397
        %2399 = vrot.lane.b32.xlu0 %v2087, 32
        %v2400 = vpop.permute.xlu0 %2399
        %2401 = vrot.lane.b32.xlu0 %v2088, 32
        %v2402 = vpop.permute.xlu0 %2401
        %2403 = vrot.lane.b32.xlu0 %v2089, 32
        %v2404 = vpop.permute.xlu0 %2403
        %2405 = vrot.lane.b32.xlu0 %v2090, 32
        %v2406 = vpop.permute.xlu0 %2405
        %2407 = vrot.lane.b32.xlu0 %v2091, 32
        %v2408 = vpop.permute.xlu0 %2407
        %2409 = vrot.lane.b32.xlu0 %v2092, 32
        %v2410 = vpop.permute.xlu0 %2409
        %2411 = vrot.lane.b32.xlu0 %v2093, 32
        %v2412 = vpop.permute.xlu0 %2411
        %2413 = vrot.lane.b32.xlu0 %v2094, 32
        %v2414 = vpop.permute.xlu0 %2413
        %2415 = vrot.lane.b32.xlu0 %v2095, 32
        %v2416 = vpop.permute.xlu0 %2415
        %2417 = vrot.lane.b32.xlu0 %v2096, 32
        %v2418 = vpop.permute.xlu0 %2417
        %2419 = vrot.lane.b32.xlu0 %v2097, 32
        %v2420 = vpop.permute.xlu0 %2419
        %2421 = vrot.lane.b32.xlu0 %v2098, 32
        %v2422 = vpop.permute.xlu0 %2421
        %2531 = vrot.lane.b32.xlu0 %v2099, 64
        %v2532 = vpop.permute.xlu0 %2531
        %2533 = vrot.lane.b32.xlu0 %v2100, 64
        %v2534 = vpop.permute.xlu0 %2533
        %2535 = vrot.lane.b32.xlu0 %v2101, 64
        %v2536 = vpop.permute.xlu0 %2535
        %2537 = vrot.lane.b32.xlu0 %v2102, 64
        %v2538 = vpop.permute.xlu0 %2537
        %2539 = vrot.lane.b32.xlu0 %v2103, 64
        %v2540 = vpop.permute.xlu0 %2539
        %2541 = vrot.lane.b32.xlu0 %v2104, 64
        %v2542 = vpop.permute.xlu0 %2541
        %2543 = vrot.lane.b32.xlu0 %v2105, 64
        %v2544 = vpop.permute.xlu0 %2543
        %2545 = vrot.lane.b32.xlu0 %v2106, 64
        %v2546 = vpop.permute.xlu0 %2545
        %2547 = vrot.lane.b32.xlu0 %v2107, 64
        %v2548 = vpop.permute.xlu0 %2547
        %2549 = vrot.lane.b32.xlu0 %v2108, 64
        %v2550 = vpop.permute.xlu0 %2549
        %2551 = vrot.lane.b32.xlu0 %v2109, 64
        %v2552 = vpop.permute.xlu0 %2551
        %2553 = vrot.lane.b32.xlu0 %v2110, 64
        %v2554 = vpop.permute.xlu0 %2553
        %2555 = vrot.lane.b32.xlu0 %v2111, 64
        %v2556 = vpop.permute.xlu0 %2555
        %2557 = vrot.lane.b32.xlu0 %v2112, 64
        %v2558 = vpop.permute.xlu0 %2557
        %2559 = vrot.lane.b32.xlu0 %v2113, 64
        %v2560 = vpop.permute.xlu0 %2559
        %2561 = vrot.lane.b32.xlu0 %v2114, 64
        %v2562 = vpop.permute.xlu0 %2561
        %2563 = vrot.lane.b32.xlu0 %v2115, 64
        %v2564 = vpop.permute.xlu0 %2563
        %2565 = vrot.lane.b32.xlu0 %v2116, 64
        %v2566 = vpop.permute.xlu0 %2565
        %2567 = vrot.lane.b32.xlu0 %v2117, 64
        %v2568 = vpop.permute.xlu0 %2567
        %2569 = vrot.lane.b32.xlu0 %v2118, 64
        %v2570 = vpop.permute.xlu0 %2569
        %2571 = vrot.lane.b32.xlu0 %v2119, 64
        %v2572 = vpop.permute.xlu0 %2571
        %2573 = vrot.lane.b32.xlu0 %v2120, 64
        %v2574 = vpop.permute.xlu0 %2573
        %2575 = vrot.lane.b32.xlu0 %v2121, 64
        %v2576 = vpop.permute.xlu0 %2575
        %2577 = vrot.lane.b32.xlu0 %v2122, 64
        %v2578 = vpop.permute.xlu0 %2577
        %2579 = vrot.lane.b32.xlu0 %v2123, 64
        %v2580 = vpop.permute.xlu0 %2579
        %2581 = vrot.lane.b32.xlu0 %v2124, 64
        %v2582 = vpop.permute.xlu0 %2581
        %2583 = vrot.lane.b32.xlu0 %v2125, 64
        %v2584 = vpop.permute.xlu0 %2583
        %2585 = vrot.lane.b32.xlu0 %v2126, 64
        %v2586 = vpop.permute.xlu0 %2585
        %2587 = vrot.lane.b32.xlu0 %v2127, 64
        %v2588 = vpop.permute.xlu0 %2587
        %2589 = vrot.lane.b32.xlu0 %v2128, 64
        %v2590 = vpop.permute.xlu0 %2589
        %2591 = vrot.lane.b32.xlu0 %v2129, 64
        %v2592 = vpop.permute.xlu0 %2591
        %2593 = vrot.lane.b32.xlu0 %v2130, 64
        %v2594 = vpop.permute.xlu0 %2593
        %2595 = vrot.lane.b32.xlu0 %v2131, 64
        %v2596 = vpop.permute.xlu0 %2595
        %2597 = vrot.lane.b32.xlu0 %v2132, 64
        %v2598 = vpop.permute.xlu0 %2597
        %2599 = vrot.lane.b32.xlu0 %v2133, 64
        %v2600 = vpop.permute.xlu0 %2599
        %2601 = vrot.lane.b32.xlu0 %v2134, 64
        %v2602 = vpop.permute.xlu0 %2601
        %2603 = vrot.lane.b32.xlu0 %v2135, 64
        %v2604 = vpop.permute.xlu0 %2603
        %2605 = vrot.lane.b32.xlu0 %v2136, 64
        %v2606 = vpop.permute.xlu0 %2605
        %2607 = vrot.lane.b32.xlu0 %v2137, 64
        %v2608 = vpop.permute.xlu0 %2607
        %2609 = vrot.lane.b32.xlu0 %v2138, 64
        %v2610 = vpop.permute.xlu0 %2609
        %2611 = vrot.lane.b32.xlu0 %v2139, 64
        %v2612 = vpop.permute.xlu0 %2611
        %2613 = vrot.lane.b32.xlu0 %v2140, 64
        %v2614 = vpop.permute.xlu0 %2613
        %2615 = vrot.lane.b32.xlu0 %v2141, 64
        %v2616 = vpop.permute.xlu0 %2615
        %2617 = vrot.lane.b32.xlu0 %v2142, 64
        %v2618 = vpop.permute.xlu0 %2617
        %2619 = vrot.lane.b32.xlu0 %v2143, 64
        %v2620 = vpop.permute.xlu0 %2619
        %2621 = vrot.lane.b32.xlu0 %v2144, 64
        %v2622 = vpop.permute.xlu0 %2621
        %2623 = vrot.lane.b32.xlu0 %v2145, 64
        %v2624 = vpop.permute.xlu0 %2623
        %2625 = vrot.lane.b32.xlu0 %v2146, 64
        %v2626 = vpop.permute.xlu0 %2625
        %2627 = vrot.lane.b32.xlu0 %v2147, 64
        %v2628 = vpop.permute.xlu0 %2627
        %2629 = vrot.lane.b32.xlu0 %v2148, 64
        %v2630 = vpop.permute.xlu0 %2629
        %2631 = vrot.lane.b32.xlu0 %v2149, 64
        %v2632 = vpop.permute.xlu0 %2631
        %2633 = vrot.lane.b32.xlu0 %v2150, 64
        %v2634 = vpop.permute.xlu0 %2633
        %2635 = vrot.lane.b32.xlu0 %v2151, 64
        %v2636 = vpop.permute.xlu0 %2635
        %2637 = vrot.lane.b32.xlu0 %v2152, 64
        %v2638 = vpop.permute.xlu0 %2637
        %2747 = vrot.lane.b32.xlu0 %v2153, 96
        %v2748 = vpop.permute.xlu0 %2747
        %2749 = vrot.lane.b32.xlu0 %v2154, 96
        %v2750 = vpop.permute.xlu0 %2749
        %2751 = vrot.lane.b32.xlu0 %v2155, 96
        %v2752 = vpop.permute.xlu0 %2751
        %2753 = vrot.lane.b32.xlu0 %v2156, 96
        %v2754 = vpop.permute.xlu0 %2753
        %2755 = vrot.lane.b32.xlu0 %v2157, 96
        %v2756 = vpop.permute.xlu0 %2755
        %2757 = vrot.lane.b32.xlu0 %v2158, 96
        %v2758 = vpop.permute.xlu0 %2757
        %2759 = vrot.lane.b32.xlu0 %v2159, 96
        %v2760 = vpop.permute.xlu0 %2759
        %2761 = vrot.lane.b32.xlu0 %v2160, 96
        %v2762 = vpop.permute.xlu0 %2761
        %2763 = vrot.lane.b32.xlu0 %v2161, 96
        %v2764 = vpop.permute.xlu0 %2763
        %2765 = vrot.lane.b32.xlu0 %v2162, 96
        %v2766 = vpop.permute.xlu0 %2765
        %2767 = vrot.lane.b32.xlu0 %v2163, 96
        %v2768 = vpop.permute.xlu0 %2767
        %2769 = vrot.lane.b32.xlu0 %v2164, 96
        %v2770 = vpop.permute.xlu0 %2769
        %2771 = vrot.lane.b32.xlu0 %v2165, 96
        %v2772 = vpop.permute.xlu0 %2771
        %2773 = vrot.lane.b32.xlu0 %v2166, 96
        %v2774 = vpop.permute.xlu0 %2773
        %2775 = vrot.lane.b32.xlu0 %v2167, 96
        %v2776 = vpop.permute.xlu0 %2775
        %2777 = vrot.lane.b32.xlu0 %v2168, 96
        %v2778 = vpop.permute.xlu0 %2777
        %2779 = vrot.lane.b32.xlu0 %v2169, 96
        %v2780 = vpop.permute.xlu0 %2779
        %2781 = vrot.lane.b32.xlu0 %v2170, 96
        %v2782 = vpop.permute.xlu0 %2781
        %2783 = vrot.lane.b32.xlu0 %v2171, 96
        %v2784 = vpop.permute.xlu0 %2783
        %2785 = vrot.lane.b32.xlu0 %v2172, 96
        %v2786 = vpop.permute.xlu0 %2785
        %2787 = vrot.lane.b32.xlu0 %v2173, 96
        %v2788 = vpop.permute.xlu0 %2787
        %2789 = vrot.lane.b32.xlu0 %v2174, 96
        %v2790 = vpop.permute.xlu0 %2789
        %2791 = vrot.lane.b32.xlu0 %v2175, 96
        %v2792 = vpop.permute.xlu0 %2791
        %2793 = vrot.lane.b32.xlu0 %v2176, 96
        %v2794 = vpop.permute.xlu0 %2793
        %2795 = vrot.lane.b32.xlu0 %v2177, 96
        %v2796 = vpop.permute.xlu0 %2795
        %2797 = vrot.lane.b32.xlu0 %v2178, 96
        %v2798 = vpop.permute.xlu0 %2797
        %2799 = vrot.lane.b32.xlu0 %v2179, 96
        %v2800 = vpop.permute.xlu0 %2799
        %2801 = vrot.lane.b32.xlu0 %v2180, 96
        %v2802 = vpop.permute.xlu0 %2801
        %2803 = vrot.lane.b32.xlu0 %v2181, 96
        %v2804 = vpop.permute.xlu0 %2803
        %2805 = vrot.lane.b32.xlu0 %v2182, 96
        %v2806 = vpop.permute.xlu0 %2805
        %2807 = vrot.lane.b32.xlu0 %v2183, 96
        %v2808 = vpop.permute.xlu0 %2807
        %2809 = vrot.lane.b32.xlu0 %v2184, 96
        %v2810 = vpop.permute.xlu0 %2809
        %2811 = vrot.lane.b32.xlu0 %v2185, 96
        %v2812 = vpop.permute.xlu0 %2811
        %2813 = vrot.lane.b32.xlu0 %v2186, 96
        %v2814 = vpop.permute.xlu0 %2813
        %2815 = vrot.lane.b32.xlu0 %v2187, 96
        %v2816 = vpop.permute.xlu0 %2815
        %2817 = vrot.lane.b32.xlu0 %v2188, 96
        %v2818 = vpop.permute.xlu0 %2817
        %2819 = vrot.lane.b32.xlu0 %v2189, 96
        %v2820 = vpop.permute.xlu0 %2819
        %2821 = vrot.lane.b32.xlu0 %v2190, 96
        %v2822 = vpop.permute.xlu0 %2821
        %2823 = vrot.lane.b32.xlu0 %v2191, 96
        %v2824 = vpop.permute.xlu0 %2823
        %2825 = vrot.lane.b32.xlu0 %v2192, 96
        %v2826 = vpop.permute.xlu0 %2825
        %2827 = vrot.lane.b32.xlu0 %v2193, 96
        %v2828 = vpop.permute.xlu0 %2827
        %2829 = vrot.lane.b32.xlu0 %v2194, 96
        %v2830 = vpop.permute.xlu0 %2829
        %2831 = vrot.lane.b32.xlu0 %v2195, 96
        %v2832 = vpop.permute.xlu0 %2831
        %2833 = vrot.lane.b32.xlu0 %v2196, 96
        %v2834 = vpop.permute.xlu0 %2833
        %2835 = vrot.lane.b32.xlu0 %v2197, 96
        %v2836 = vpop.permute.xlu0 %2835
        %2837 = vrot.lane.b32.xlu0 %v2198, 96
        %v2838 = vpop.permute.xlu0 %2837
        %2839 = vrot.lane.b32.xlu0 %v2199, 96
        %v2840 = vpop.permute.xlu0 %2839
        %2841 = vrot.lane.b32.xlu0 %v2200, 96
        %v2842 = vpop.permute.xlu0 %2841
        %2843 = vrot.lane.b32.xlu0 %v2201, 96
        %v2844 = vpop.permute.xlu0 %2843
        %2845 = vrot.lane.b32.xlu0 %v2202, 96
        %v2846 = vpop.permute.xlu0 %2845
        %2847 = vrot.lane.b32.xlu0 %v2203, 96
        %v2848 = vpop.permute.xlu0 %2847
        %2849 = vrot.lane.b32.xlu0 %v2204, 96
        %v2850 = vpop.permute.xlu0 %2849
        %2851 = vrot.lane.b32.xlu0 %v2205, 96
        %v2852 = vpop.permute.xlu0 %2851
        %2853 = vrot.lane.b32.xlu0 %v2206, 96
        %v2854 = vpop.permute.xlu0 %2853
        %v2909 = vsel %vm400, %v1991, %v2316
        %v2910 = vsel %vm400, %v1992, %v2318
        %v2911 = vsel %vm400, %v1993, %v2320
        %v2912 = vsel %vm400, %v1994, %v2322
        %v2913 = vsel %vm400, %v1995, %v2324
        %v2914 = vsel %vm400, %v1996, %v2326
        %v2915 = vsel %vm400, %v1997, %v2328
        %v2916 = vsel %vm400, %v1998, %v2330
        %v2917 = vsel %vm400, %v1999, %v2332
        %v2918 = vsel %vm400, %v2000, %v2334
        %v2919 = vsel %vm400, %v2001, %v2336
        %v2920 = vsel %vm400, %v2002, %v2338
        %v2921 = vsel %vm400, %v2003, %v2340
        %v2922 = vsel %vm400, %v2004, %v2342
        %v2923 = vsel %vm400, %v2005, %v2344
        %v2924 = vsel %vm400, %v2006, %v2346
        %v2925 = vsel %vm400, %v2007, %v2348
        %v2926 = vsel %vm400, %v2008, %v2350
        %v2927 = vsel %vm400, %v2009, %v2352
        %v2928 = vsel %vm400, %v2010, %v2354
        %v2929 = vsel %vm400, %v2011, %v2356
        %v2930 = vsel %vm400, %v2012, %v2358
        %v2931 = vsel %vm400, %v2013, %v2360
        %v2932 = vsel %vm400, %v2014, %v2362
        %v2933 = vsel %vm400, %v2015, %v2364
        %v2934 = vsel %vm400, %v2016, %v2366
        %v2935 = vsel %vm400, %v2017, %v2368
        %v2936 = vsel %vm400, %v2018, %v2370
        %v2937 = vsel %vm400, %v2019, %v2372
        %v2938 = vsel %vm400, %v2020, %v2374
        %v2939 = vsel %vm400, %v2021, %v2376
        %v2940 = vsel %vm400, %v2022, %v2378
        %v2941 = vsel %vm400, %v2023, %v2380
        %v2942 = vsel %vm400, %v2024, %v2382
        %v2943 = vsel %vm400, %v2025, %v2384
        %v2944 = vsel %vm400, %v2026, %v2386
        %v2945 = vsel %vm400, %v2027, %v2388
        %v2946 = vsel %vm400, %v2028, %v2390
        %v2947 = vsel %vm400, %v2029, %v2392
        %v2948 = vsel %vm400, %v2030, %v2394
        %v2949 = vsel %vm400, %v2031, %v2396
        %v2950 = vsel %vm400, %v2032, %v2398
        %v2951 = vsel %vm400, %v2033, %v2400
        %v2952 = vsel %vm400, %v2034, %v2402
        %v2953 = vsel %vm400, %v2035, %v2404
        %v2954 = vsel %vm400, %v2036, %v2406
        %v2955 = vsel %vm400, %v2037, %v2408
        %v2956 = vsel %vm400, %v2038, %v2410
        %v2957 = vsel %vm400, %v2039, %v2412
        %v2958 = vsel %vm400, %v2040, %v2414
        %v2959 = vsel %vm400, %v2041, %v2416
        %v2960 = vsel %vm400, %v2042, %v2418
        %v2961 = vsel %vm400, %v2043, %v2420
        %v2962 = vsel %vm400, %v2044, %v2422
        %vm2963 = vcmask 523264
        %v2964 = vsel %vm2963, %v2909, %v2532
        %v2965 = vsel %vm2963, %v2910, %v2534
        %v2966 = vsel %vm2963, %v2911, %v2536
        %v2967 = vsel %vm2963, %v2912, %v2538
        %v2968 = vsel %vm2963, %v2913, %v2540
        %v2969 = vsel %vm2963, %v2914, %v2542
        %v2970 = vsel %vm2963, %v2915, %v2544
        %v2971 = vsel %vm2963, %v2916, %v2546
        %v2972 = vsel %vm2963, %v2917, %v2548
        %v2973 = vsel %vm2963, %v2918, %v2550
        %v2974 = vsel %vm2963, %v2919, %v2552
        %v2975 = vsel %vm2963, %v2920, %v2554
        %v2976 = vsel %vm2963, %v2921, %v2556
        %v2977 = vsel %vm2963, %v2922, %v2558
        %v2978 = vsel %vm2963, %v2923, %v2560
        %v2979 = vsel %vm2963, %v2924, %v2562
        %v2980 = vsel %vm2963, %v2925, %v2564
        %v2981 = vsel %vm2963, %v2926, %v2566
        %v2982 = vsel %vm2963, %v2927, %v2568
        %v2983 = vsel %vm2963, %v2928, %v2570
        %v2984 = vsel %vm2963, %v2929, %v2572
        %v2985 = vsel %vm2963, %v2930, %v2574
        %v2986 = vsel %vm2963, %v2931, %v2576
        %v2987 = vsel %vm2963, %v2932, %v2578
        %v2988 = vsel %vm2963, %v2933, %v2580
        %v2989 = vsel %vm2963, %v2934, %v2582
        %v2990 = vsel %vm2963, %v2935, %v2584
        %v2991 = vsel %vm2963, %v2936, %v2586
        %v2992 = vsel %vm2963, %v2937, %v2588
        %v2993 = vsel %vm2963, %v2938, %v2590
        %v2994 = vsel %vm2963, %v2939, %v2592
        %v2995 = vsel %vm2963, %v2940, %v2594
        %v2996 = vsel %vm2963, %v2941, %v2596
        %v2997 = vsel %vm2963, %v2942, %v2598
        %v2998 = vsel %vm2963, %v2943, %v2600
        %v2999 = vsel %vm2963, %v2944, %v2602
        %v3000 = vsel %vm2963, %v2945, %v2604
        %v3001 = vsel %vm2963, %v2946, %v2606
        %v3002 = vsel %vm2963, %v2947, %v2608
        %v3003 = vsel %vm2963, %v2948, %v2610
        %v3004 = vsel %vm2963, %v2949, %v2612
        %v3005 = vsel %vm2963, %v2950, %v2614
        %v3006 = vsel %vm2963, %v2951, %v2616
        %v3007 = vsel %vm2963, %v2952, %v2618
        %v3008 = vsel %vm2963, %v2953, %v2620
        %v3009 = vsel %vm2963, %v2954, %v2622
        %v3010 = vsel %vm2963, %v2955, %v2624
        %v3011 = vsel %vm2963, %v2956, %v2626
        %v3012 = vsel %vm2963, %v2957, %v2628
        %v3013 = vsel %vm2963, %v2958, %v2630
        %v3014 = vsel %vm2963, %v2959, %v2632
        %v3015 = vsel %vm2963, %v2960, %v2634
        %v3016 = vsel %vm2963, %v2961, %v2636
        %v3017 = vsel %vm2963, %v2962, %v2638
        %vm3018 = vcmask 785408
        %v3019 = vsel %vm3018, %v2964, %v2748
        %v3020 = vsel %vm3018, %v2965, %v2750
        %v3021 = vsel %vm3018, %v2966, %v2752
        %v3022 = vsel %vm3018, %v2967, %v2754
        %v3023 = vsel %vm3018, %v2968, %v2756
        %v3024 = vsel %vm3018, %v2969, %v2758
        %v3025 = vsel %vm3018, %v2970, %v2760
        %v3026 = vsel %vm3018, %v2971, %v2762
        %v3027 = vsel %vm3018, %v2972, %v2764
        %v3028 = vsel %vm3018, %v2973, %v2766
        %v3029 = vsel %vm3018, %v2974, %v2768
        %v3030 = vsel %vm3018, %v2975, %v2770
        %v3031 = vsel %vm3018, %v2976, %v2772
        %v3032 = vsel %vm3018, %v2977, %v2774
        %v3033 = vsel %vm3018, %v2978, %v2776
        %v3034 = vsel %vm3018, %v2979, %v2778
        %v3035 = vsel %vm3018, %v2980, %v2780
        %v3036 = vsel %vm3018, %v2981, %v2782
        %v3037 = vsel %vm3018, %v2982, %v2784
        %v3038 = vsel %vm3018, %v2983, %v2786
        %v3039 = vsel %vm3018, %v2984, %v2788
        %v3040 = vsel %vm3018, %v2985, %v2790
        %v3041 = vsel %vm3018, %v2986, %v2792
        %v3042 = vsel %vm3018, %v2987, %v2794
        %v3043 = vsel %vm3018, %v2988, %v2796
        %v3044 = vsel %vm3018, %v2989, %v2798
        %v3045 = vsel %vm3018, %v2990, %v2800
        %v3046 = vsel %vm3018, %v2991, %v2802
        %v3047 = vsel %vm3018, %v2992, %v2804
        %v3048 = vsel %vm3018, %v2993, %v2806
        %v3049 = vsel %vm3018, %v2994, %v2808
        %v3050 = vsel %vm3018, %v2995, %v2810
        %v3051 = vsel %vm3018, %v2996, %v2812
        %v3052 = vsel %vm3018, %v2997, %v2814
        %v3053 = vsel %vm3018, %v2998, %v2816
        %v3054 = vsel %vm3018, %v2999, %v2818
        %v3055 = vsel %vm3018, %v3000, %v2820
        %v3056 = vsel %vm3018, %v3001, %v2822
        %v3057 = vsel %vm3018, %v3002, %v2824
        %v3058 = vsel %vm3018, %v3003, %v2826
        %v3059 = vsel %vm3018, %v3004, %v2828
        %v3060 = vsel %vm3018, %v3005, %v2830
        %v3061 = vsel %vm3018, %v3006, %v2832
        %v3062 = vsel %vm3018, %v3007, %v2834
        %v3063 = vsel %vm3018, %v3008, %v2836
        %v3064 = vsel %vm3018, %v3009, %v2838
        %v3065 = vsel %vm3018, %v3010, %v2840
        %v3066 = vsel %vm3018, %v3011, %v2842
        %v3067 = vsel %vm3018, %v3012, %v2844
        %v3068 = vsel %vm3018, %v3013, %v2846
        %v3069 = vsel %vm3018, %v3014, %v2848
        %v3070 = vsel %vm3018, %v3015, %v2850
        %v3071 = vsel %vm3018, %v3016, %v2852
        %v3072 = vsel %vm3018, %v3017, %v2854
        %v3073 = vpack.c.bf16 %v3020, %v3019
        %v3074 = vpack.c.bf16 %v2208, %v2207
        %v3075 = vpack.c.bf16 %v3022, %v3021
        %v3076 = vpack.c.bf16 %v2210, %v2209
        %v3077 = vpack.c.bf16 %v3024, %v3023
        %v3078 = vpack.c.bf16 %v2212, %v2211
        %v3079 = vpack.c.bf16 %v3026, %v3025
        %v3080 = vpack.c.bf16 %v2214, %v2213
        %v3081 = vpack.c.bf16 %v3028, %v3027
        %v3082 = vpack.c.bf16 %v2216, %v2215
        %v3083 = vpack.c.bf16 %v3030, %v3029
        %v3084 = vpack.c.bf16 %v2218, %v2217
        %v3085 = vpack.c.bf16 %v3032, %v3031
        %v3086 = vpack.c.bf16 %v2220, %v2219
        %v3087 = vpack.c.bf16 %v3034, %v3033
        %v3088 = vpack.c.bf16 %v2222, %v2221
        %v3089 = vpack.c.bf16 %v3036, %v3035
        %v3090 = vpack.c.bf16 %v2224, %v2223
        %v3091 = vpack.c.bf16 %v3038, %v3037
        %v3092 = vpack.c.bf16 %v2226, %v2225
        %v3093 = vpack.c.bf16 %v3040, %v3039
        %v3094 = vpack.c.bf16 %v2228, %v2227
        %v3095 = vpack.c.bf16 %v3042, %v3041
        %v3096 = vpack.c.bf16 %v2230, %v2229
        %v3097 = vpack.c.bf16 %v3044, %v3043
        %v3098 = vpack.c.bf16 %v2232, %v2231
        %v3099 = vpack.c.bf16 %v3046, %v3045
        %v3100 = vpack.c.bf16 %v2234, %v2233
        %v3101 = vpack.c.bf16 %v3048, %v3047
        %v3102 = vpack.c.bf16 %v2236, %v2235
        %v3103 = vpack.c.bf16 %v3050, %v3049
        %v3104 = vpack.c.bf16 %v2238, %v2237
        %v3105 = vpack.c.bf16 %v3052, %v3051
        %v3106 = vpack.c.bf16 %v2240, %v2239
        %v3107 = vpack.c.bf16 %v3054, %v3053
        %v3108 = vpack.c.bf16 %v2242, %v2241
        %v3109 = vpack.c.bf16 %v3056, %v3055
        %v3110 = vpack.c.bf16 %v2244, %v2243
        %v3111 = vpack.c.bf16 %v3058, %v3057
        %v3112 = vpack.c.bf16 %v2246, %v2245
        %v3113 = vpack.c.bf16 %v3060, %v3059
        %v3114 = vpack.c.bf16 %v2248, %v2247
        %v3115 = vpack.c.bf16 %v3062, %v3061
        %v3116 = vpack.c.bf16 %v2250, %v2249
        %v3117 = vpack.c.bf16 %v3064, %v3063
        %v3118 = vpack.c.bf16 %v2252, %v2251
        %v3119 = vpack.c.bf16 %v3066, %v3065
        %v3120 = vpack.c.bf16 %v2254, %v2253
        %v3121 = vpack.c.bf16 %v3068, %v3067
        %v3122 = vpack.c.bf16 %v2256, %v2255
        %v3123 = vpack.c.bf16 %v3070, %v3069
        %v3124 = vpack.c.bf16 %v2258, %v2257
        %v3125 = vpack.c.bf16 %v3072, %v3071
        %v3126 = vpack.c.bf16 %v2260, %v2259
        %3127 = vst [vmem:[#allocation4] sm:$0xff] %v3073
        %3128 = vst.msk [vmem:[#allocation4 + $0x8] sm:$0xff] %vm400, %v3074
        %3129 = vst [vmem:[#allocation4 + $0x10] sm:$0xff] %v3075
        %3130 = vst.msk [vmem:[#allocation4 + $0x18] sm:$0xff] %vm400, %v3076
        %3131 = vst [vmem:[#allocation4 + $0x20] sm:$0xff] %v3077
        %3132 = vst.msk [vmem:[#allocation4 + $0x28] sm:$0xff] %vm400, %v3078
        %3133 = vst [vmem:[#allocation4 + $0x30] sm:$0xff] %v3079
        %3134 = vst.msk [vmem:[#allocation4 + $0x38] sm:$0xff] %vm400, %v3080
        %3135 = vst [vmem:[#allocation4 + $0x40] sm:$0xff] %v3081
        %3136 = vst.msk [vmem:[#allocation4 + $0x48] sm:$0xff] %vm400, %v3082
        %3137 = vst [vmem:[#allocation4 + $0x50] sm:$0xff] %v3083
        %3138 = vst.msk [vmem:[#allocation4 + $0x58] sm:$0xff] %vm400, %v3084
        %3139 = vst [vmem:[#allocation4 + $0x60] sm:$0xff] %v3085
        %3140 = vst.msk [vmem:[#allocation4 + $0x68] sm:$0xff] %vm400, %v3086
        %3141 = vst [vmem:[#allocation4 + $0x70] sm:$0xff] %v3087
        %3142 = vst.msk [vmem:[#allocation4 + $0x78] sm:$0xff] %vm400, %v3088
        %3143 = vst [vmem:[#allocation4 + $0x80] sm:$0xff] %v3089
        %3144 = vst.msk [vmem:[#allocation4 + $0x88] sm:$0xff] %vm400, %v3090
        %3145 = vst [vmem:[#allocation4 + $0x90] sm:$0xff] %v3091
        %3146 = vst.msk [vmem:[#allocation4 + $0x98] sm:$0xff] %vm400, %v3092
        %3147 = vst [vmem:[#allocation4 + $0xa0] sm:$0xff] %v3093
        %3148 = vst.msk [vmem:[#allocation4 + $0xa8] sm:$0xff] %vm400, %v3094
        %3149 = vst [vmem:[#allocation4 + $0xb0] sm:$0xff] %v3095
        %3150 = vst.msk [vmem:[#allocation4 + $0xb8] sm:$0xff] %vm400, %v3096
        %3151 = vst [vmem:[#allocation4 + $0xc0] sm:$0xff] %v3097
        %3152 = vst.msk [vmem:[#allocation4 + $0xc8] sm:$0xff] %vm400, %v3098
        %3153 = vst [vmem:[#allocation4 + $0xd0] sm:$0xff] %v3099
        %3154 = vst.msk [vmem:[#allocation4 + $0xd8] sm:$0xff] %vm400, %v3100
        %3155 = vst [vmem:[#allocation4 + $0xe0] sm:$0xff] %v3101
        %3156 = vst.msk [vmem:[#allocation4 + $0xe8] sm:$0xff] %vm400, %v3102
        %3157 = vst [vmem:[#allocation4 + $0xf0] sm:$0xff] %v3103
        %3158 = vst.msk [vmem:[#allocation4 + $0xf8] sm:$0xff] %vm400, %v3104
        %3159 = vst [vmem:[#allocation4 + $0x100] sm:$0xff] %v3105
        %3160 = vst.msk [vmem:[#allocation4 + $0x108] sm:$0xff] %vm400, %v3106
        %3161 = vst [vmem:[#allocation4 + $0x110] sm:$0xff] %v3107
        %3162 = vst.msk [vmem:[#allocation4 + $0x118] sm:$0xff] %vm400, %v3108
        %3163 = vst [vmem:[#allocation4 + $0x120] sm:$0xff] %v3109
        %3164 = vst.msk [vmem:[#allocation4 + $0x128] sm:$0xff] %vm400, %v3110
        %3165 = vst [vmem:[#allocation4 + $0x130] sm:$0xff] %v3111
        %3166 = vst.msk [vmem:[#allocation4 + $0x138] sm:$0xff] %vm400, %v3112
        %3167 = vst [vmem:[#allocation4 + $0x140] sm:$0xff] %v3113
        %3168 = vst.msk [vmem:[#allocation4 + $0x148] sm:$0xff] %vm400, %v3114
        %3169 = vst [vmem:[#allocation4 + $0x150] sm:$0xff] %v3115
        %3170 = vst.msk [vmem:[#allocation4 + $0x158] sm:$0xff] %vm400, %v3116
        %3171 = vst [vmem:[#allocation4 + $0x160] sm:$0xff] %v3117
        %3172 = vst.msk [vmem:[#allocation4 + $0x168] sm:$0xff] %vm400, %v3118
        %3173 = vst [vmem:[#allocation4 + $0x170] sm:$0xff] %v3119
        %3174 = vst.msk [vmem:[#allocation4 + $0x178] sm:$0xff] %vm400, %v3120
        %3175 = vst [vmem:[#allocation4 + $0x180] sm:$0xff] %v3121
        %3176 = vst.msk [vmem:[#allocation4 + $0x188] sm:$0xff] %vm400, %v3122
        %3177 = vst [vmem:[#allocation4 + $0x190] sm:$0xff] %v3123
        %3178 = vst.msk [vmem:[#allocation4 + $0x198] sm:$0xff] %vm400, %v3124
        %3179 = vst [vmem:[#allocation4 + $0x1a0] sm:$0xff] %v3125
        %3180 = vst.msk [vmem:[#allocation4 + $0x1a8] sm:$0xff] %vm400, %v3126
        %v3181 = vld [vmem:[#allocation4] sm:$0xff]
        %v3182 = vld [vmem:[#allocation4 + $0x8] sm:$0xff]
        %v3183 = vld [vmem:[#allocation4 + $0x10] sm:$0xff]
        %v3184 = vld [vmem:[#allocation4 + $0x18] sm:$0xff]
        %v3185 = vld [vmem:[#allocation4 + $0x20] sm:$0xff]
        %v3186 = vld [vmem:[#allocation4 + $0x28] sm:$0xff]
        %v3187 = vld [vmem:[#allocation4 + $0x30] sm:$0xff]
        %v3188 = vld [vmem:[#allocation4 + $0x38] sm:$0xff]
        %v3189 = vld [vmem:[#allocation4 + $0x40] sm:$0xff]
        %v3190 = vld [vmem:[#allocation4 + $0x48] sm:$0xff]
        %v3191 = vld [vmem:[#allocation4 + $0x50] sm:$0xff]
        %v3192 = vld [vmem:[#allocation4 + $0x58] sm:$0xff]
        %v3193 = vld [vmem:[#allocation4 + $0x60] sm:$0xff]
        %v3194 = vld [vmem:[#allocation4 + $0x68] sm:$0xff]
        %v3195 = vld [vmem:[#allocation4 + $0x70] sm:$0xff]
        %v3196 = vld [vmem:[#allocation4 + $0x78] sm:$0xff]
        %v3197 = vld [vmem:[#allocation4 + $0x80] sm:$0xff]
        %v3198 = vld [vmem:[#allocation4 + $0x88] sm:$0xff]
        %v3199 = vld [vmem:[#allocation4 + $0x90] sm:$0xff]
        %v3200 = vld [vmem:[#allocation4 + $0x98] sm:$0xff]
        %v3201 = vld [vmem:[#allocation4 + $0xa0] sm:$0xff]
        %v3202 = vld [vmem:[#allocation4 + $0xa8] sm:$0xff]
        %v3203 = vld [vmem:[#allocation4 + $0xb0] sm:$0xff]
        %v3204 = vld [vmem:[#allocation4 + $0xb8] sm:$0xff]
        %v3205 = vld [vmem:[#allocation4 + $0xc0] sm:$0xff]
        %v3206 = vld [vmem:[#allocation4 + $0xc8] sm:$0xff]
        %v3207 = vld [vmem:[#allocation4 + $0xd0] sm:$0xff]
        %v3208 = vld [vmem:[#allocation4 + $0xd8] sm:$0xff]
        %v3209 = vld [vmem:[#allocation4 + $0xe0] sm:$0xff]
        %v3210 = vld [vmem:[#allocation4 + $0xe8] sm:$0xff]
        %v3211 = vld [vmem:[#allocation4 + $0xf0] sm:$0xff]
        %v3212 = vld [vmem:[#allocation4 + $0xf8] sm:$0xff]
        %v3213 = vld [vmem:[#allocation4 + $0x100] sm:$0xff]
        %v3214 = vld [vmem:[#allocation4 + $0x108] sm:$0xff]
        %v3215 = vld [vmem:[#allocation4 + $0x110] sm:$0xff]
        %v3216 = vld [vmem:[#allocation4 + $0x118] sm:$0xff]
        %v3217 = vld [vmem:[#allocation4 + $0x120] sm:$0xff]
        %v3218 = vld [vmem:[#allocation4 + $0x128] sm:$0xff]
        %v3219 = vld [vmem:[%s3] sm:$0xf]
        %v3220 = vld [vmem:[%s3 + $0x4] sm:$0xf]
        %v3221 = vld [vmem:[%s3 + $0x8] sm:$0xf]
        %v3222 = vld [vmem:[%s3 + $0xc] sm:$0xf]
        %v3223 = vld [vmem:[%s3 + $0x10] sm:$0xf]
        %v3224 = vld [vmem:[%s3 + $0x14] sm:$0xf]
        %v3225 = vld [vmem:[%s3 + $0x18] sm:$0xf]
        %v3226 = vld [vmem:[%s3 + $0x1c] sm:$0xf]
        %v3227 = vld [vmem:[%s3 + $0x20] sm:$0xf]
        %v3228 = vld [vmem:[%s3 + $0x24] sm:$0xf]
        %v3229 = vld [vmem:[%s3 + $0x28] sm:$0xf]
        %v3230 = vld [vmem:[%s3 + $0x2c] sm:$0xf]
        %v3231 = vld [vmem:[%s3 + $0x30] sm:$0xf]
        %v3232 = vld [vmem:[%s3 + $0x34] sm:$0xf]
        %v3233 = vld [vmem:[%s3 + $0x38] sm:$0xf]
        %v3234 = vld [vmem:[%s3 + $0x3c] sm:$0xf]
        %v3235 = vld [vmem:[%s3 + $0x40] sm:$0xf]
        %v3236 = vld [vmem:[%s3 + $0x44] sm:$0xf]
        %v3237 = vld [vmem:[%s3 + $0x48] sm:$0xf]
        %v3238 = vld [vmem:[%s3 + $0x4c] sm:$0xf]
        %v3239 = vld [vmem:[#allocation4 + $0x130] sm:$0xff]
        %v3240 = vld [vmem:[#allocation4 + $0x138] sm:$0xff]
        %v3241 = vld [vmem:[#allocation4 + $0x140] sm:$0xff]
        %v3242 = vld [vmem:[#allocation4 + $0x148] sm:$0xff]
        %s3243 = scalar_lea.vmem %s3, 80
        %v3244 = vld [vmem:[%s3243] sm:$0xf]
        %v3245 = vld [vmem:[%s3243 + $0x4] sm:$0xf]
        %v3246 = vld [vmem:[%s3243 + $0x8] sm:$0xf]
        %v3247 = vld [vmem:[%s3243 + $0xc] sm:$0xf]
        %v3248 = vld [vmem:[%s3243 + $0x10] sm:$0xf]
        %v3249 = vld [vmem:[%s3243 + $0x14] sm:$0xf]
        %v3250 = vld [vmem:[%s3243 + $0x18] sm:$0xf]
        %v3251 = vld [vmem:[%s3243 + $0x1c] sm:$0xf]
        %v3252 = vld [vmem:[%s3243 + $0x20] sm:$0xf]
        %v3253 = vld [vmem:[%s3243 + $0x24] sm:$0xf]
        %v3254 = vld [vmem:[%s3243 + $0x28] sm:$0xf]
        %v3255 = vld [vmem:[%s3243 + $0x2c] sm:$0xf]
        %v3256 = vld [vmem:[%s3243 + $0x30] sm:$0xf]
        %v3257 = vld [vmem:[%s3243 + $0x34] sm:$0xf]
        %v3258 = vld [vmem:[%s3243 + $0x38] sm:$0xf]
        %v3259 = vld [vmem:[%s3243 + $0x3c] sm:$0xf]
        %v3260 = vld [vmem:[%s3243 + $0x40] sm:$0xf]
        %v3261 = vld [vmem:[%s3243 + $0x44] sm:$0xf]
        %v3262 = vld [vmem:[%s3243 + $0x48] sm:$0xf]
        %v3263 = vld [vmem:[%s3243 + $0x4c] sm:$0xf]
        %v3284 = vunpack.c.l.b16 %v3244
        %v3285 = vunpack.c.l.b16 %v3245
        %v3286 = vunpack.c.l.b16 %v3246
        %v3287 = vunpack.c.l.b16 %v3247
        %v3288 = vunpack.c.l.b16 %v3248
        %v3289 = vunpack.c.l.b16 %v3249
        %v3290 = vunpack.c.l.b16 %v3250
        %v3291 = vunpack.c.l.b16 %v3251
        %v3292 = vunpack.c.l.b16 %v3252
        %v3293 = vunpack.c.l.b16 %v3253
        %v3294 = vunpack.c.l.b16 %v3254
        %v3295 = vunpack.c.l.b16 %v3255
        %v3296 = vunpack.c.l.b16 %v3256
        %v3297 = vunpack.c.l.b16 %v3257
        %v3298 = vunpack.c.l.b16 %v3258
        %v3299 = vunpack.c.l.b16 %v3259
        %v3300 = vunpack.c.l.b16 %v3260
        %v3301 = vunpack.c.l.b16 %v3261
        %v3302 = vunpack.c.l.b16 %v3262
        %v3303 = vunpack.c.l.b16 %v3263
        %v3304 = vpack.c.b16 %v3285, %v3284
        %v3305 = vpack.c.b16 %v3287, %v3286
        %v3306 = vpack.c.b16 %v3289, %v3288
        %v3307 = vpack.c.b16 %v3291, %v3290
        %v3308 = vpack.c.b16 %v3293, %v3292
        %v3309 = vpack.c.b16 %v3295, %v3294
        %v3310 = vpack.c.b16 %v3297, %v3296
        %v3311 = vpack.c.b16 %v3299, %v3298
        %v3312 = vpack.c.b16 %v3301, %v3300
        %v3313 = vpack.c.b16 %v3303, %v3302
        %v3325 = vsel %vm400, %v3186, 0
        %v3328 = vsel %vm400, %v3188, 0
        %v3331 = vsel %vm400, %v3190, 0
        %v3334 = vsel %vm400, %v3192, 0
        %v3337 = vsel %vm400, %v3194, 0
        %v3340 = vsel %vm400, %v3196, 0
        %v3343 = vsel %vm400, %v3198, 0
        %v3346 = vsel %vm400, %v3200, 0
        %v3349 = vsel %vm400, %v3202, 0
        %v3352 = vsel %vm400, %v3204, 0
        %v3355 = vsel %vm400, %v3206, 0
        %v3358 = vsel %vm400, %v3208, 0
        %v3361 = vsel %vm400, %v3210, 0
        %v3364 = vsel %vm400, %v3212, 0
        %v3367 = vsel %vm400, %v3214, 0
        %v3370 = vsel %vm400, %v3216, 0
        %v3373 = vsel %vm400, %v3218, 0
        %v3376 = vsel %vm400, %v3240, 0
        %v3379 = vsel %vm400, %v3242, 0
        %3381 = vmatprep.subr.bf16.mxu0 0
        %3382 = vmatpush1.bf16.msra.mxu0 %v3304
        %3383 = vmatprep.subr.bf16.mxu0 0
        %3384 = vmatpush1.bf16.msra.mxu0 %v3305
        %3385 = vmatprep.subr.bf16.mxu0 0
        %3386 = vmatpush1.bf16.msra.mxu0 %v3306
        %3387 = vmatprep.subr.bf16.mxu0 0
        %3388 = vmatpush1.bf16.msra.mxu0 %v3307
        %3389 = vmatprep.subr.bf16.mxu0 0
        %3390 = vmatpush1.bf16.msra.mxu0 %v3308
        %3391 = vmatprep.subr.bf16.mxu0 0
        %3392 = vmatpush1.bf16.msra.mxu0 %v3309
        %3393 = vmatprep.subr.bf16.mxu0 0
        %3394 = vmatpush1.bf16.msra.mxu0 %v3310
        %3395 = vmatprep.subr.bf16.mxu0 0
        %3396 = vmatpush1.bf16.msra.mxu0 %v3311
        %3397 = vmatprep.subr.bf16.mxu0 0
        %3398 = vmatpush1.bf16.msra.mxu0 %v3312
        %3399 = vmatprep.subr.bf16.mxu0 0
        %3400 = vmatpush1.bf16.msra.mxu0 %v3313
        %3401 = vmatprep.subr.bf16.mxu0 0
        %3402 = vmatpush1.bf16.msra.mxu0 0
        %3403 = vmatprep.subr.bf16.mxu0 0
        %3404 = vmatpush1.bf16.msra.mxu0 0
        %3405 = vmatprep.subr.bf16.mxu0 0
        %3406 = vmatpush1.bf16.msra.mxu0 0
        %3407 = vmatprep.subr.bf16.mxu0 0
        %3408 = vmatpush1.bf16.msra.mxu0 0
        %3409 = vmatprep.subr.bf16.mxu0 0
        %3410 = vmatpush1.bf16.msra.mxu0 0
        %3411 = vmatprep.subr.bf16.mxu0 0
        %3412 = vmatpush1.bf16.msra.mxu0 0
        %3413 = vmatprep.mubr.bf16.mxu0 %v3325
        %3414 = vmatmul.mubr.bf16.gmra.mrb[0].mxu0 %v3185
        %v3415 = vpop.f32.mrb[0].mxu0
        %v3416 = vadd.f32 0.0, %v3415
        %v3417 = vpop.f32.mrb[0].mxu0
        %v3418 = vpop.f32.mrb[0].mxu0
        %v3419 = vadd.f32 0.0, %v3418
        %v3420 = vpop.f32.mrb[0].mxu0
        %3421 = vmatprep.mubr.bf16.mxu0 %v3328
        %3422 = vmatmul.mubr.bf16.gmra.mrb[0].mxu0 %v3187
        %v3423 = vpop.f32.mrb[0].mxu0
        %v3424 = vadd.f32 0.0, %v3423
        %v3425 = vpop.f32.mrb[0].mxu0
        %v3426 = vpop.f32.mrb[0].mxu0
        %v3427 = vadd.f32 0.0, %v3426
        %v3428 = vpop.f32.mrb[0].mxu0
        %3429 = vmatprep.mubr.bf16.mxu0 %v3331
        %3430 = vmatmul.mubr.bf16.gmra.mrb[0].mxu0 %v3189
        %v3431 = vpop.f32.mrb[0].mxu0
        %v3432 = vadd.f32 0.0, %v3431
        %v3433 = vpop.f32.mrb[0].mxu0
        %v3434 = vpop.f32.mrb[0].mxu0
        %v3435 = vadd.f32 0.0, %v3434
        %v3436 = vpop.f32.mrb[0].mxu0
        %3437 = vmatprep.mubr.bf16.mxu0 %v3334
        %3438 = vmatmul.mubr.bf16.gmra.mrb[0].mxu0 %v3191
        %v3439 = vpop.f32.mrb[0].mxu0
        %v3440 = vadd.f32 0.0, %v3439
        %v3441 = vpop.f32.mrb[0].mxu0
        %v3442 = vpop.f32.mrb[0].mxu0
        %v3443 = vadd.f32 0.0, %v3442
        %v3444 = vpop.f32.mrb[0].mxu0
        %3445 = vmatprep.mubr.bf16.mxu0 %v3337
        %3446 = vmatmul.mubr.bf16.gmra.mrb[0].mxu0 %v3193
        %v3447 = vpop.f32.mrb[0].mxu0
        %v3448 = vadd.f32 0.0, %v3447
        %v3449 = vpop.f32.mrb[0].mxu0
        %v3450 = vpop.f32.mrb[0].mxu0
        %v3451 = vadd.f32 0.0, %v3450
        %v3452 = vpop.f32.mrb[0].mxu0
        %3453 = vmatprep.mubr.bf16.mxu0 %v3340
        %3454 = vmatmul.mubr.bf16.gmra.mrb[0].mxu0 %v3195
        %v3455 = vpop.f32.mrb[0].mxu0
        %v3456 = vadd.f32 0.0, %v3455
        %v3457 = vpop.f32.mrb[0].mxu0
        %v3458 = vpop.f32.mrb[0].mxu0
        %v3459 = vadd.f32 0.0, %v3458
        %v3460 = vpop.f32.mrb[0].mxu0
        %3461 = vmatprep.mubr.bf16.mxu0 %v3343
        %3462 = vmatmul.mubr.bf16.gmra.mrb[0].mxu0 %v3197
        %v3463 = vpop.f32.mrb[0].mxu0
        %v3464 = vadd.f32 0.0, %v3463
        %v3465 = vpop.f32.mrb[0].mxu0
        %v3466 = vpop.f32.mrb[0].mxu0
        %v3467 = vadd.f32 0.0, %v3466
        %v3468 = vpop.f32.mrb[0].mxu0
        %3469 = vmatprep.mubr.bf16.mxu0 %v3346
        %3470 = vmatmul.mubr.bf16.gmra.mrb[0].mxu0 %v3199
        %v3471 = vpop.f32.mrb[0].mxu0
        %v3472 = vadd.f32 0.0, %v3471
        %v3473 = vpop.f32.mrb[0].mxu0
        %v3474 = vpop.f32.mrb[0].mxu0
        %v3475 = vadd.f32 0.0, %v3474
        %v3476 = vpop.f32.mrb[0].mxu0
        %3477 = vmatprep.mubr.bf16.mxu0 %v3349
        %3478 = vmatmul.mubr.bf16.gmra.mrb[0].mxu0 %v3201
        %v3479 = vpop.f32.mrb[0].mxu0
        %v3480 = vadd.f32 0.0, %v3479
        %v3481 = vpop.f32.mrb[0].mxu0
        %v3482 = vpop.f32.mrb[0].mxu0
        %v3483 = vadd.f32 0.0, %v3482
        %v3484 = vpop.f32.mrb[0].mxu0
        %3485 = vmatprep.mubr.bf16.mxu0 %v3352
        %3486 = vmatmul.mubr.bf16.gmra.mrb[0].mxu0 %v3203
        %v3487 = vpop.f32.mrb[0].mxu0
        %v3488 = vadd.f32 0.0, %v3487
        %v3489 = vpop.f32.mrb[0].mxu0
        %v3490 = vpop.f32.mrb[0].mxu0
        %v3491 = vadd.f32 0.0, %v3490
        %v3492 = vpop.f32.mrb[0].mxu0
        %3493 = vmatprep.mubr.bf16.mxu0 %v3355
        %3494 = vmatmul.mubr.bf16.gmra.mrb[0].mxu0 %v3205
        %v3495 = vpop.f32.mrb[0].mxu0
        %v3496 = vadd.f32 0.0, %v3495
        %v3497 = vpop.f32.mrb[0].mxu0
        %v3498 = vpop.f32.mrb[0].mxu0
        %v3499 = vadd.f32 0.0, %v3498
        %v3500 = vpop.f32.mrb[0].mxu0
        %3501 = vmatprep.mubr.bf16.mxu0 %v3358
        %3502 = vmatmul.mubr.bf16.gmra.mrb[0].mxu0 %v3207
        %v3503 = vpop.f32.mrb[0].mxu0
        %v3504 = vadd.f32 0.0, %v3503
        %v3505 = vpop.f32.mrb[0].mxu0
        %v3506 = vpop.f32.mrb[0].mxu0
        %v3507 = vadd.f32 0.0, %v3506
        %v3508 = vpop.f32.mrb[0].mxu0
        %3509 = vmatprep.mubr.bf16.mxu0 %v3361
        %3510 = vmatmul.mubr.bf16.gmra.mrb[0].mxu0 %v3209
        %v3511 = vpop.f32.mrb[0].mxu0
        %v3512 = vadd.f32 0.0, %v3511
        %v3513 = vpop.f32.mrb[0].mxu0
        %v3514 = vpop.f32.mrb[0].mxu0
        %v3515 = vadd.f32 0.0, %v3514
        %v3516 = vpop.f32.mrb[0].mxu0
        %3517 = vmatprep.mubr.bf16.mxu0 %v3364
        %3518 = vmatmul.mubr.bf16.gmra.mrb[0].mxu0 %v3211
        %v3519 = vpop.f32.mrb[0].mxu0
        %v3520 = vadd.f32 0.0, %v3519
        %v3521 = vpop.f32.mrb[0].mxu0
        %v3522 = vpop.f32.mrb[0].mxu0
        %v3523 = vadd.f32 0.0, %v3522
        %v3524 = vpop.f32.mrb[0].mxu0
        %3525 = vmatprep.mubr.bf16.mxu0 %v3367
        %3526 = vmatmul.mubr.bf16.gmra.mrb[0].mxu0 %v3213
        %v3527 = vpop.f32.mrb[0].mxu0
        %v3528 = vadd.f32 0.0, %v3527
        %v3529 = vpop.f32.mrb[0].mxu0
        %v3530 = vpop.f32.mrb[0].mxu0
        %v3531 = vadd.f32 0.0, %v3530
        %v3532 = vpop.f32.mrb[0].mxu0
        %3533 = vmatprep.mubr.bf16.mxu0 %v3370
        %3534 = vmatmul.mubr.bf16.gmra.mrb[0].mxu0 %v3215
        %v3535 = vpop.f32.mrb[0].mxu0
        %v3536 = vadd.f32 0.0, %v3535
        %v3537 = vpop.f32.mrb[0].mxu0
        %v3538 = vpop.f32.mrb[0].mxu0
        %v3539 = vadd.f32 0.0, %v3538
        %v3540 = vpop.f32.mrb[0].mxu0
        %3541 = vmatprep.mubr.bf16.mxu0 %v3373
        %3542 = vmatmul.mubr.bf16.gmra.mrb[0].mxu0 %v3217
        %v3543 = vpop.f32.mrb[0].mxu0
        %v3544 = vadd.f32 0.0, %v3543
        %v3545 = vpop.f32.mrb[0].mxu0
        %v3546 = vpop.f32.mrb[0].mxu0
        %v3547 = vadd.f32 0.0, %v3546
        %v3548 = vpop.f32.mrb[0].mxu0
        %3549 = vmatprep.mubr.bf16.mxu0 %v3376
        %3550 = vmatmul.mubr.bf16.gmra.mrb[0].mxu0 %v3239
        %v3551 = vpop.f32.mrb[0].mxu0
        %v3552 = vadd.f32 0.0, %v3551
        %v3553 = vpop.f32.mrb[0].mxu0
        %v3554 = vpop.f32.mrb[0].mxu0
        %v3555 = vadd.f32 0.0, %v3554
        %v3556 = vpop.f32.mrb[0].mxu0
        %3557 = vmatprep.mubr.bf16.mxu0 %v3379
        %3558 = vmatmul.mubr.bf16.gmra.mrb[0].mxu0 %v3241
        %v3559 = vpop.f32.mrb[0].mxu0
        %v3560 = vadd.f32 0.0, %v3559
        %v3561 = vpop.f32.mrb[0].mxu0
        %v3562 = vpop.f32.mrb[0].mxu0
        %v3563 = vadd.f32 0.0, %v3562
        %v3564 = vpop.f32.mrb[0].mxu0
        %3565 = vdwg.mxu0
        %v3586 = vunpack.c.l.b16 %v3219
        %v3587 = vunpack.c.l.b16 %v3220
        %v3588 = vunpack.c.l.b16 %v3221
        %v3589 = vunpack.c.l.b16 %v3222
        %v3590 = vunpack.c.l.b16 %v3223
        %v3591 = vunpack.c.l.b16 %v3224
        %v3592 = vunpack.c.l.b16 %v3225
        %v3593 = vunpack.c.l.b16 %v3226
        %v3594 = vunpack.c.l.b16 %v3227
        %v3595 = vunpack.c.l.b16 %v3228
        %v3596 = vunpack.c.l.b16 %v3229
        %v3597 = vunpack.c.l.b16 %v3230
        %v3598 = vunpack.c.l.b16 %v3231
        %v3599 = vunpack.c.l.b16 %v3232
        %v3600 = vunpack.c.l.b16 %v3233
        %v3601 = vunpack.c.l.b16 %v3234
        %v3602 = vunpack.c.l.b16 %v3235
        %v3603 = vunpack.c.l.b16 %v3236
        %v3604 = vunpack.c.l.b16 %v3237
        %v3605 = vunpack.c.l.b16 %v3238
        %v3606 = vpack.c.b16 %v3587, %v3586
        %v3607 = vpack.c.b16 %v3589, %v3588
        %v3608 = vpack.c.b16 %v3591, %v3590
        %v3609 = vpack.c.b16 %v3593, %v3592
        %v3610 = vpack.c.b16 %v3595, %v3594
        %v3611 = vpack.c.b16 %v3597, %v3596
        %v3612 = vpack.c.b16 %v3599, %v3598
        %v3613 = vpack.c.b16 %v3601, %v3600
        %v3614 = vpack.c.b16 %v3603, %v3602
        %v3615 = vpack.c.b16 %v3605, %v3604
        %v3627 = vsel %vm400, %v3182, 0
        %v3630 = vsel %vm400, %v3184, 0
        %3632 = vmatprep.subr.bf16.mxu0 0
        %3633 = vmatpush1.bf16.msra.mxu0 %v3606
        %3634 = vmatprep.subr.bf16.mxu0 0
        %3635 = vmatpush1.bf16.msra.mxu0 %v3607
        %3636 = vmatprep.subr.bf16.mxu0 0
        %3637 = vmatpush1.bf16.msra.mxu0 %v3608
        %3638 = vmatprep.subr.bf16.mxu0 0
        %3639 = vmatpush1.bf16.msra.mxu0 %v3609
        %3640 = vmatprep.subr.bf16.mxu0 0
        %3641 = vmatpush1.bf16.msra.mxu0 %v3610
        %3642 = vmatprep.subr.bf16.mxu0 0
        %3643 = vmatpush1.bf16.msra.mxu0 %v3611
        %3644 = vmatprep.subr.bf16.mxu0 0
        %3645 = vmatpush1.bf16.msra.mxu0 %v3612
        %3646 = vmatprep.subr.bf16.mxu0 0
        %3647 = vmatpush1.bf16.msra.mxu0 %v3613
        %3648 = vmatprep.subr.bf16.mxu0 0
        %3649 = vmatpush1.bf16.msra.mxu0 %v3614
        %3650 = vmatprep.subr.bf16.mxu0 0
        %3651 = vmatpush1.bf16.msra.mxu0 %v3615
        %3652 = vmatprep.subr.bf16.mxu0 0
        %3653 = vmatpush1.bf16.msra.mxu0 0
        %3654 = vmatprep.subr.bf16.mxu0 0
        %3655 = vmatpush1.bf16.msra.mxu0 0
        %3656 = vmatprep.subr.bf16.mxu0 0
        %3657 = vmatpush1.bf16.msra.mxu0 0
        %3658 = vmatprep.subr.bf16.mxu0 0
        %3659 = vmatpush1.bf16.msra.mxu0 0
        %3660 = vmatprep.subr.bf16.mxu0 0
        %3661 = vmatpush1.bf16.msra.mxu0 0
        %3662 = vmatprep.subr.bf16.mxu0 0
        %3663 = vmatpush1.bf16.msra.mxu0 0
        %3664 = vmatprep.mubr.bf16.mxu0 %v3627
        %3665 = vmatmul.mubr.bf16.gmra.mrb[0].mxu0 %v3181
        %v3666 = vpop.f32.mrb[0].mxu0
        %v3667 = vadd.f32 %v3416, %v3666
        %v3668 = vpop.f32.mrb[0].mxu0
        %v3669 = vpop.f32.mrb[0].mxu0
        %v3670 = vadd.f32 %v3419, %v3669
        %v3671 = vpop.f32.mrb[0].mxu0
        %3672 = vmatprep.mubr.bf16.mxu0 %v3630
        %3673 = vmatmul.mubr.bf16.gmra.mrb[0].mxu0 %v3183
        %v3674 = vpop.f32.mrb[0].mxu0
        %v3675 = vadd.f32 %v3424, %v3674
        %v3676 = vpop.f32.mrb[0].mxu0
        %v3677 = vpop.f32.mrb[0].mxu0
        %v3678 = vadd.f32 %v3427, %v3677
        %v3679 = vpop.f32.mrb[0].mxu0
        %3680 = vmatprep.mubr.bf16.mxu0 %v3325
        %3681 = vmatmul.mubr.bf16.gmra.mrb[0].mxu0 %v3185
        %v3682 = vpop.f32.mrb[0].mxu0
        %v3683 = vadd.f32 %v3432, %v3682
        %v3684 = vpop.f32.mrb[0].mxu0
        %v3685 = vpop.f32.mrb[0].mxu0
        %v3686 = vadd.f32 %v3435, %v3685
        %v3687 = vpop.f32.mrb[0].mxu0
        %3688 = vmatprep.mubr.bf16.mxu0 %v3328
        %3689 = vmatmul.mubr.bf16.gmra.mrb[0].mxu0 %v3187
        %v3690 = vpop.f32.mrb[0].mxu0
        %v3691 = vadd.f32 %v3440, %v3690
        %v3692 = vpop.f32.mrb[0].mxu0
        %v3693 = vpop.f32.mrb[0].mxu0
        %v3694 = vadd.f32 %v3443, %v3693
        %v3695 = vpop.f32.mrb[0].mxu0
        %3696 = vmatprep.mubr.bf16.mxu0 %v3331
        %3697 = vmatmul.mubr.bf16.gmra.mrb[0].mxu0 %v3189
        %v3698 = vpop.f32.mrb[0].mxu0
        %v3699 = vadd.f32 %v3448, %v3698
        %v3700 = vpop.f32.mrb[0].mxu0
        %v3701 = vpop.f32.mrb[0].mxu0
        %v3702 = vadd.f32 %v3451, %v3701
        %v3703 = vpop.f32.mrb[0].mxu0
        %3704 = vmatprep.mubr.bf16.mxu0 %v3334
        %3705 = vmatmul.mubr.bf16.gmra.mrb[0].mxu0 %v3191
        %v3706 = vpop.f32.mrb[0].mxu0
        %v3707 = vadd.f32 %v3456, %v3706
        %v3708 = vpop.f32.mrb[0].mxu0
        %v3709 = vpop.f32.mrb[0].mxu0
        %v3710 = vadd.f32 %v3459, %v3709
        %v3711 = vpop.f32.mrb[0].mxu0
        %3712 = vmatprep.mubr.bf16.mxu0 %v3337
        %3713 = vmatmul.mubr.bf16.gmra.mrb[0].mxu0 %v3193
        %v3714 = vpop.f32.mrb[0].mxu0
        %v3715 = vadd.f32 %v3464, %v3714
        %v3716 = vpop.f32.mrb[0].mxu0
        %v3717 = vpop.f32.mrb[0].mxu0
        %v3718 = vadd.f32 %v3467, %v3717
        %v3719 = vpop.f32.mrb[0].mxu0
        %3720 = vmatprep.mubr.bf16.mxu0 %v3340
        %3721 = vmatmul.mubr.bf16.gmra.mrb[0].mxu0 %v3195
        %v3722 = vpop.f32.mrb[0].mxu0
        %v3723 = vadd.f32 %v3472, %v3722
        %v3724 = vpop.f32.mrb[0].mxu0
        %v3725 = vpop.f32.mrb[0].mxu0
        %v3726 = vadd.f32 %v3475, %v3725
        %v3727 = vpop.f32.mrb[0].mxu0
        %3728 = vmatprep.mubr.bf16.mxu0 %v3343
        %3729 = vmatmul.mubr.bf16.gmra.mrb[0].mxu0 %v3197
        %v3730 = vpop.f32.mrb[0].mxu0
        %v3731 = vadd.f32 %v3480, %v3730
        %v3732 = vpop.f32.mrb[0].mxu0
        %v3733 = vpop.f32.mrb[0].mxu0
        %v3734 = vadd.f32 %v3483, %v3733
        %v3735 = vpop.f32.mrb[0].mxu0
        %3736 = vmatprep.mubr.bf16.mxu0 %v3346
        %3737 = vmatmul.mubr.bf16.gmra.mrb[0].mxu0 %v3199
        %v3738 = vpop.f32.mrb[0].mxu0
        %v3739 = vadd.f32 %v3488, %v3738
        %v3740 = vpop.f32.mrb[0].mxu0
        %v3741 = vpop.f32.mrb[0].mxu0
        %v3742 = vadd.f32 %v3491, %v3741
        %v3743 = vpop.f32.mrb[0].mxu0
        %3744 = vmatprep.mubr.bf16.mxu0 %v3349
        %3745 = vmatmul.mubr.bf16.gmra.mrb[0].mxu0 %v3201
        %v3746 = vpop.f32.mrb[0].mxu0
        %v3747 = vadd.f32 %v3496, %v3746
        %v3748 = vpop.f32.mrb[0].mxu0
        %v3749 = vpop.f32.mrb[0].mxu0
        %v3750 = vadd.f32 %v3499, %v3749
        %v3751 = vpop.f32.mrb[0].mxu0
        %3752 = vmatprep.mubr.bf16.mxu0 %v3352
        %3753 = vmatmul.mubr.bf16.gmra.mrb[0].mxu0 %v3203
        %v3754 = vpop.f32.mrb[0].mxu0
        %v3755 = vadd.f32 %v3504, %v3754
        %v3756 = vpop.f32.mrb[0].mxu0
        %v3757 = vpop.f32.mrb[0].mxu0
        %v3758 = vadd.f32 %v3507, %v3757
        %v3759 = vpop.f32.mrb[0].mxu0
        %3760 = vmatprep.mubr.bf16.mxu0 %v3355
        %3761 = vmatmul.mubr.bf16.gmra.mrb[0].mxu0 %v3205
        %v3762 = vpop.f32.mrb[0].mxu0
        %v3763 = vadd.f32 %v3512, %v3762
        %v3764 = vpop.f32.mrb[0].mxu0
        %v3765 = vpop.f32.mrb[0].mxu0
        %v3766 = vadd.f32 %v3515, %v3765
        %v3767 = vpop.f32.mrb[0].mxu0
        %3768 = vmatprep.mubr.bf16.mxu0 %v3358
        %3769 = vmatmul.mubr.bf16.gmra.mrb[0].mxu0 %v3207
        %v3770 = vpop.f32.mrb[0].mxu0
        %v3771 = vadd.f32 %v3520, %v3770
        %v3772 = vpop.f32.mrb[0].mxu0
        %v3773 = vpop.f32.mrb[0].mxu0
        %v3774 = vadd.f32 %v3523, %v3773
        %v3775 = vpop.f32.mrb[0].mxu0
        %3776 = vmatprep.mubr.bf16.mxu0 %v3361
        %3777 = vmatmul.mubr.bf16.gmra.mrb[0].mxu0 %v3209
        %v3778 = vpop.f32.mrb[0].mxu0
        %v3779 = vadd.f32 %v3528, %v3778
        %v3780 = vpop.f32.mrb[0].mxu0
        %v3781 = vpop.f32.mrb[0].mxu0
        %v3782 = vadd.f32 %v3531, %v3781
        %v3783 = vpop.f32.mrb[0].mxu0
        %3784 = vmatprep.mubr.bf16.mxu0 %v3364
        %3785 = vmatmul.mubr.bf16.gmra.mrb[0].mxu0 %v3211
        %v3786 = vpop.f32.mrb[0].mxu0
        %v3787 = vadd.f32 %v3536, %v3786
        %v3788 = vpop.f32.mrb[0].mxu0
        %v3789 = vpop.f32.mrb[0].mxu0
        %v3790 = vadd.f32 %v3539, %v3789
        %v3791 = vpop.f32.mrb[0].mxu0
        %3792 = vmatprep.mubr.bf16.mxu0 %v3367
        %3793 = vmatmul.mubr.bf16.gmra.mrb[0].mxu0 %v3213
        %v3794 = vpop.f32.mrb[0].mxu0
        %v3795 = vadd.f32 %v3544, %v3794
        %v3796 = vpop.f32.mrb[0].mxu0
        %v3797 = vpop.f32.mrb[0].mxu0
        %v3798 = vadd.f32 %v3547, %v3797
        %v3799 = vpop.f32.mrb[0].mxu0
        %3800 = vmatprep.mubr.bf16.mxu0 %v3370
        %3801 = vmatmul.mubr.bf16.gmra.mrb[0].mxu0 %v3215
        %v3802 = vpop.f32.mrb[0].mxu0
        %v3803 = vadd.f32 %v3552, %v3802
        %v3804 = vpop.f32.mrb[0].mxu0
        %v3805 = vpop.f32.mrb[0].mxu0
        %v3806 = vadd.f32 %v3555, %v3805
        %v3807 = vpop.f32.mrb[0].mxu0
        %3808 = vmatprep.mubr.bf16.mxu0 %v3373
        %3809 = vmatmul.mubr.bf16.gmra.mrb[0].mxu0 %v3217
        %v3810 = vpop.f32.mrb[0].mxu0
        %v3811 = vadd.f32 %v3560, %v3810
        %v3812 = vpop.f32.mrb[0].mxu0
        %v3813 = vpop.f32.mrb[0].mxu0
        %v3814 = vadd.f32 %v3563, %v3813
        %v3815 = vpop.f32.mrb[0].mxu0
        %3816 = vdwg.mxu0
        %v3817 = vld [vmem:[#allocation4 + $0x40] sm:$0xff]
        %v3818 = vld [vmem:[#allocation4 + $0x48] sm:$0xff]
        %v3819 = vld [vmem:[#allocation4 + $0x50] sm:$0xff]
        %v3820 = vld [vmem:[#allocation4 + $0x58] sm:$0xff]
        %v3821 = vld [vmem:[#allocation4 + $0x60] sm:$0xff]
        %v3822 = vld [vmem:[#allocation4 + $0x68] sm:$0xff]
        %v3823 = vld [vmem:[#allocation4 + $0x70] sm:$0xff]
        %v3824 = vld [vmem:[#allocation4 + $0x78] sm:$0xff]
        %v3825 = vld [vmem:[#allocation4 + $0x80] sm:$0xff]
        %v3826 = vld [vmem:[#allocation4 + $0x88] sm:$0xff]
        %v3827 = vld [vmem:[#allocation4 + $0x90] sm:$0xff]
        %v3828 = vld [vmem:[#allocation4 + $0x98] sm:$0xff]
        %v3829 = vld [vmem:[#allocation4 + $0xa0] sm:$0xff]
        %v3830 = vld [vmem:[#allocation4 + $0xa8] sm:$0xff]
        %v3831 = vld [vmem:[#allocation4 + $0xb0] sm:$0xff]
        %v3832 = vld [vmem:[#allocation4 + $0xb8] sm:$0xff]
        %v3833 = vld [vmem:[#allocation4 + $0xc0] sm:$0xff]
        %v3834 = vld [vmem:[#allocation4 + $0xc8] sm:$0xff]
        %v3835 = vld [vmem:[#allocation4 + $0xd0] sm:$0xff]
        %v3836 = vld [vmem:[#allocation4 + $0xd8] sm:$0xff]
        %v3837 = vld [vmem:[#allocation4 + $0xe0] sm:$0xff]
        %v3838 = vld [vmem:[#allocation4 + $0xe8] sm:$0xff]
        %v3839 = vld [vmem:[#allocation4 + $0xf0] sm:$0xff]
        %v3840 = vld [vmem:[#allocation4 + $0xf8] sm:$0xff]
        %v3841 = vld [vmem:[#allocation4 + $0x100] sm:$0xff]
        %v3842 = vld [vmem:[#allocation4 + $0x108] sm:$0xff]
        %v3843 = vld [vmem:[#allocation4 + $0x110] sm:$0xff]
        %v3844 = vld [vmem:[#allocation4 + $0x118] sm:$0xff]
        %v3845 = vld [vmem:[#allocation4 + $0x120] sm:$0xff]
        %v3846 = vld [vmem:[#allocation4 + $0x128] sm:$0xff]
        %v3847 = vld [vmem:[#allocation4 + $0x130] sm:$0xff]
        %v3848 = vld [vmem:[#allocation4 + $0x138] sm:$0xff]
        %v3849 = vld [vmem:[#allocation4 + $0x140] sm:$0xff]
        %v3850 = vld [vmem:[#allocation4 + $0x148] sm:$0xff]
        %v3851 = vld [vmem:[#allocation4 + $0x150] sm:$0xff]
        %v3852 = vld [vmem:[#allocation4 + $0x158] sm:$0xff]
        %v3853 = vld [vmem:[#allocation4 + $0x160] sm:$0xff]
        %v3854 = vld [vmem:[#allocation4 + $0x168] sm:$0xff]
        %s3855 = scalar_lea.vmem %s3, 160
        %v3856 = vld [vmem:[%s3855] sm:$0xf]
        %v3857 = vld [vmem:[%s3855 + $0x4] sm:$0xf]
        %v3858 = vld [vmem:[%s3855 + $0x8] sm:$0xf]
        %v3859 = vld [vmem:[%s3855 + $0xc] sm:$0xf]
        %v3860 = vld [vmem:[%s3855 + $0x10] sm:$0xf]
        %v3861 = vld [vmem:[%s3855 + $0x14] sm:$0xf]
        %v3862 = vld [vmem:[%s3855 + $0x18] sm:$0xf]
        %v3863 = vld [vmem:[%s3855 + $0x1c] sm:$0xf]
        %v3864 = vld [vmem:[%s3855 + $0x20] sm:$0xf]
        %v3865 = vld [vmem:[%s3855 + $0x24] sm:$0xf]
        %v3866 = vld [vmem:[%s3855 + $0x28] sm:$0xf]
        %v3867 = vld [vmem:[%s3855 + $0x2c] sm:$0xf]
        %v3868 = vld [vmem:[%s3855 + $0x30] sm:$0xf]
        %v3869 = vld [vmem:[%s3855 + $0x34] sm:$0xf]
        %v3870 = vld [vmem:[%s3855 + $0x38] sm:$0xf]
        %v3871 = vld [vmem:[%s3855 + $0x3c] sm:$0xf]
        %v3872 = vld [vmem:[%s3855 + $0x40] sm:$0xf]
        %v3873 = vld [vmem:[%s3855 + $0x44] sm:$0xf]
        %v3874 = vld [vmem:[%s3855 + $0x48] sm:$0xf]
        %v3875 = vld [vmem:[%s3855 + $0x4c] sm:$0xf]
        %v3896 = vunpack.c.l.b16 %v3856
        %v3897 = vunpack.c.l.b16 %v3857
        %v3898 = vunpack.c.l.b16 %v3858
        %v3899 = vunpack.c.l.b16 %v3859
        %v3900 = vunpack.c.l.b16 %v3860
        %v3901 = vunpack.c.l.b16 %v3861
        %v3902 = vunpack.c.l.b16 %v3862
        %v3903 = vunpack.c.l.b16 %v3863
        %v3904 = vunpack.c.l.b16 %v3864
        %v3905 = vunpack.c.l.b16 %v3865
        %v3906 = vunpack.c.l.b16 %v3866
        %v3907 = vunpack.c.l.b16 %v3867
        %v3908 = vunpack.c.l.b16 %v3868
        %v3909 = vunpack.c.l.b16 %v3869
        %v3910 = vunpack.c.l.b16 %v3870
        %v3911 = vunpack.c.l.b16 %v3871
        %v3912 = vunpack.c.l.b16 %v3872
        %v3913 = vunpack.c.l.b16 %v3873
        %v3914 = vunpack.c.l.b16 %v3874
        %v3915 = vunpack.c.l.b16 %v3875
        %v3916 = vpack.c.b16 %v3897, %v3896
        %v3917 = vpack.c.b16 %v3899, %v3898
        %v3918 = vpack.c.b16 %v3901, %v3900
        %v3919 = vpack.c.b16 %v3903, %v3902
        %v3920 = vpack.c.b16 %v3905, %v3904
        %v3921 = vpack.c.b16 %v3907, %v3906
        %v3922 = vpack.c.b16 %v3909, %v3908
        %v3923 = vpack.c.b16 %v3911, %v3910
        %v3924 = vpack.c.b16 %v3913, %v3912
        %v3925 = vpack.c.b16 %v3915, %v3914
        %v3937 = vsel %vm400, %v3818, 0
        %v3940 = vsel %vm400, %v3820, 0
        %v3943 = vsel %vm400, %v3822, 0
        %v3946 = vsel %vm400, %v3824, 0
        %v3949 = vsel %vm400, %v3826, 0
        %v3952 = vsel %vm400, %v3828, 0
        %v3955 = vsel %vm400, %v3830, 0
        %v3958 = vsel %vm400, %v3832, 0
        %v3961 = vsel %vm400, %v3834, 0
        %v3964 = vsel %vm400, %v3836, 0
        %v3967 = vsel %vm400, %v3838, 0
        %v3970 = vsel %vm400, %v3840, 0
        %v3973 = vsel %vm400, %v3842, 0
        %v3976 = vsel %vm400, %v3844, 0
        %v3979 = vsel %vm400, %v3846, 0
        %v3982 = vsel %vm400, %v3848, 0
        %v3985 = vsel %vm400, %v3850, 0
        %v3988 = vsel %vm400, %v3852, 0
        %v3991 = vsel %vm400, %v3854, 0
        %3993 = vmatprep.subr.bf16.mxu0 0
        %3994 = vmatpush1.bf16.msra.mxu0 %v3916
        %3995 = vmatprep.subr.bf16.mxu0 0
        %3996 = vmatpush1.bf16.msra.mxu0 %v3917
        %3997 = vmatprep.subr.bf16.mxu0 0
        %3998 = vmatpush1.bf16.msra.mxu0 %v3918
        %3999 = vmatprep.subr.bf16.mxu0 0
        %4000 = vmatpush1.bf16.msra.mxu0 %v3919
        %4001 = vmatprep.subr.bf16.mxu0 0
        %4002 = vmatpush1.bf16.msra.mxu0 %v3920
        %4003 = vmatprep.subr.bf16.mxu0 0
        %4004 = vmatpush1.bf16.msra.mxu0 %v3921
        %4005 = vmatprep.subr.bf16.mxu0 0
        %4006 = vmatpush1.bf16.msra.mxu0 %v3922
        %4007 = vmatprep.subr.bf16.mxu0 0
        %4008 = vmatpush1.bf16.msra.mxu0 %v3923
        %4009 = vmatprep.subr.bf16.mxu0 0
        %4010 = vmatpush1.bf16.msra.mxu0 %v3924
        %4011 = vmatprep.subr.bf16.mxu0 0
        %4012 = vmatpush1.bf16.msra.mxu0 %v3925
        %4013 = vmatprep.subr.bf16.mxu0 0
        %4014 = vmatpush1.bf16.msra.mxu0 0
        %4015 = vmatprep.subr.bf16.mxu0 0
        %4016 = vmatpush1.bf16.msra.mxu0 0
        %4017 = vmatprep.subr.bf16.mxu0 0
        %4018 = vmatpush1.bf16.msra.mxu0 0
        %4019 = vmatprep.subr.bf16.mxu0 0
        %4020 = vmatpush1.bf16.msra.mxu0 0
        %4021 = vmatprep.subr.bf16.mxu0 0
        %4022 = vmatpush1.bf16.msra.mxu0 0
        %4023 = vmatprep.subr.bf16.mxu0 0
        %4024 = vmatpush1.bf16.msra.mxu0 0
        %4025 = vmatprep.mubr.bf16.mxu0 %v3937
        %4026 = vmatmul.mubr.bf16.gmra.mrb[0].mxu0 %v3817
        %v4027 = vpop.f32.mrb[0].mxu0
        %v4028 = vadd.f32 0.0, %v4027
        %v4029 = vpop.f32.mrb[0].mxu0
        %v4030 = vpop.f32.mrb[0].mxu0
        %v4031 = vadd.f32 0.0, %v4030
        %v4032 = vpop.f32.mrb[0].mxu0
        %4033 = vmatprep.mubr.bf16.mxu0 %v3940
        %4034 = vmatmul.mubr.bf16.gmra.mrb[0].mxu0 %v3819
        %v4035 = vpop.f32.mrb[0].mxu0
        %v4036 = vadd.f32 0.0, %v4035
        %v4037 = vpop.f32.mrb[0].mxu0
        %v4038 = vpop.f32.mrb[0].mxu0
        %v4039 = vadd.f32 0.0, %v4038
        %v4040 = vpop.f32.mrb[0].mxu0
        %4041 = vmatprep.mubr.bf16.mxu0 %v3943
        %4042 = vmatmul.mubr.bf16.gmra.mrb[0].mxu0 %v3821
        %v4043 = vpop.f32.mrb[0].mxu0
        %v4044 = vadd.f32 0.0, %v4043
        %v4045 = vpop.f32.mrb[0].mxu0
        %v4046 = vpop.f32.mrb[0].mxu0
        %v4047 = vadd.f32 0.0, %v4046
        %v4048 = vpop.f32.mrb[0].mxu0
        %4049 = vmatprep.mubr.bf16.mxu0 %v3946
        %4050 = vmatmul.mubr.bf16.gmra.mrb[0].mxu0 %v3823
        %v4051 = vpop.f32.mrb[0].mxu0
        %v4052 = vadd.f32 0.0, %v4051
        %v4053 = vpop.f32.mrb[0].mxu0
        %v4054 = vpop.f32.mrb[0].mxu0
        %v4055 = vadd.f32 0.0, %v4054
        %v4056 = vpop.f32.mrb[0].mxu0
        %4057 = vmatprep.mubr.bf16.mxu0 %v3949
        %4058 = vmatmul.mubr.bf16.gmra.mrb[0].mxu0 %v3825
        %v4059 = vpop.f32.mrb[0].mxu0
        %v4060 = vadd.f32 0.0, %v4059
        %v4061 = vpop.f32.mrb[0].mxu0
        %v4062 = vpop.f32.mrb[0].mxu0
        %v4063 = vadd.f32 0.0, %v4062
        %v4064 = vpop.f32.mrb[0].mxu0
        %4065 = vmatprep.mubr.bf16.mxu0 %v3952
        %4066 = vmatmul.mubr.bf16.gmra.mrb[0].mxu0 %v3827
        %v4067 = vpop.f32.mrb[0].mxu0
        %v4068 = vadd.f32 0.0, %v4067
        %v4069 = vpop.f32.mrb[0].mxu0
        %v4070 = vpop.f32.mrb[0].mxu0
        %v4071 = vadd.f32 0.0, %v4070
        %v4072 = vpop.f32.mrb[0].mxu0
        %4073 = vmatprep.mubr.bf16.mxu0 %v3955
        %4074 = vmatmul.mubr.bf16.gmra.mrb[0].mxu0 %v3829
        %v4075 = vpop.f32.mrb[0].mxu0
        %v4076 = vadd.f32 0.0, %v4075
        %v4077 = vpop.f32.mrb[0].mxu0
        %v4078 = vpop.f32.mrb[0].mxu0
        %v4079 = vadd.f32 0.0, %v4078
        %v4080 = vpop.f32.mrb[0].mxu0
        %4081 = vmatprep.mubr.bf16.mxu0 %v3958
        %4082 = vmatmul.mubr.bf16.gmra.mrb[0].mxu0 %v3831
        %v4083 = vpop.f32.mrb[0].mxu0
        %v4084 = vadd.f32 0.0, %v4083
        %v4085 = vpop.f32.mrb[0].mxu0
        %v4086 = vpop.f32.mrb[0].mxu0
        %v4087 = vadd.f32 0.0, %v4086
        %v4088 = vpop.f32.mrb[0].mxu0
        %4089 = vmatprep.mubr.bf16.mxu0 %v3961
        %4090 = vmatmul.mubr.bf16.gmra.mrb[0].mxu0 %v3833
        %v4091 = vpop.f32.mrb[0].mxu0
        %v4092 = vadd.f32 0.0, %v4091
        %v4093 = vpop.f32.mrb[0].mxu0
        %v4094 = vpop.f32.mrb[0].mxu0
        %v4095 = vadd.f32 0.0, %v4094
        %v4096 = vpop.f32.mrb[0].mxu0
        %4097 = vmatprep.mubr.bf16.mxu0 %v3964
        %4098 = vmatmul.mubr.bf16.gmra.mrb[0].mxu0 %v3835
        %v4099 = vpop.f32.mrb[0].mxu0
        %v4100 = vadd.f32 0.0, %v4099
        %v4101 = vpop.f32.mrb[0].mxu0
        %v4102 = vpop.f32.mrb[0].mxu0
        %v4103 = vadd.f32 0.0, %v4102
        %v4104 = vpop.f32.mrb[0].mxu0
        %4105 = vmatprep.mubr.bf16.mxu0 %v3967
        %4106 = vmatmul.mubr.bf16.gmra.mrb[0].mxu0 %v3837
        %v4107 = vpop.f32.mrb[0].mxu0
        %v4108 = vadd.f32 0.0, %v4107
        %v4109 = vpop.f32.mrb[0].mxu0
        %v4110 = vpop.f32.mrb[0].mxu0
        %v4111 = vadd.f32 0.0, %v4110
        %v4112 = vpop.f32.mrb[0].mxu0
        %4113 = vmatprep.mubr.bf16.mxu0 %v3970
        %4114 = vmatmul.mubr.bf16.gmra.mrb[0].mxu0 %v3839
        %v4115 = vpop.f32.mrb[0].mxu0
        %v4116 = vadd.f32 0.0, %v4115
        %v4117 = vpop.f32.mrb[0].mxu0
        %v4118 = vpop.f32.mrb[0].mxu0
        %v4119 = vadd.f32 0.0, %v4118
        %v4120 = vpop.f32.mrb[0].mxu0
        %4121 = vmatprep.mubr.bf16.mxu0 %v3973
        %4122 = vmatmul.mubr.bf16.gmra.mrb[0].mxu0 %v3841
        %v4123 = vpop.f32.mrb[0].mxu0
        %v4124 = vadd.f32 0.0, %v4123
        %v4125 = vpop.f32.mrb[0].mxu0
        %v4126 = vpop.f32.mrb[0].mxu0
        %v4127 = vadd.f32 0.0, %v4126
        %v4128 = vpop.f32.mrb[0].mxu0
        %4129 = vmatprep.mubr.bf16.mxu0 %v3976
        %4130 = vmatmul.mubr.bf16.gmra.mrb[0].mxu0 %v3843
        %v4131 = vpop.f32.mrb[0].mxu0
        %v4132 = vadd.f32 0.0, %v4131
        %v4133 = vpop.f32.mrb[0].mxu0
        %v4134 = vpop.f32.mrb[0].mxu0
        %v4135 = vadd.f32 0.0, %v4134
        %v4136 = vpop.f32.mrb[0].mxu0
        %4137 = vmatprep.mubr.bf16.mxu0 %v3979
        %4138 = vmatmul.mubr.bf16.gmra.mrb[0].mxu0 %v3845
        %v4139 = vpop.f32.mrb[0].mxu0
        %v4140 = vadd.f32 0.0, %v4139
        %v4141 = vpop.f32.mrb[0].mxu0
        %v4142 = vpop.f32.mrb[0].mxu0
        %v4143 = vadd.f32 0.0, %v4142
        %v4144 = vpop.f32.mrb[0].mxu0
        %4145 = vmatprep.mubr.bf16.mxu0 %v3982
        %4146 = vmatmul.mubr.bf16.gmra.mrb[0].mxu0 %v3847
        %v4147 = vpop.f32.mrb[0].mxu0
        %v4148 = vadd.f32 0.0, %v4147
        %v4149 = vpop.f32.mrb[0].mxu0
        %v4150 = vpop.f32.mrb[0].mxu0
        %v4151 = vadd.f32 0.0, %v4150
        %v4152 = vpop.f32.mrb[0].mxu0
        %4153 = vmatprep.mubr.bf16.mxu0 %v3985
        %4154 = vmatmul.mubr.bf16.gmra.mrb[0].mxu0 %v3849
        %v4155 = vpop.f32.mrb[0].mxu0
        %v4156 = vadd.f32 0.0, %v4155
        %v4157 = vpop.f32.mrb[0].mxu0
        %v4158 = vpop.f32.mrb[0].mxu0
        %v4159 = vadd.f32 0.0, %v4158
        %v4160 = vpop.f32.mrb[0].mxu0
        %4161 = vmatprep.mubr.bf16.mxu0 %v3988
        %4162 = vmatmul.mubr.bf16.gmra.mrb[0].mxu0 %v3851
        %v4163 = vpop.f32.mrb[0].mxu0
        %v4164 = vadd.f32 0.0, %v4163
        %v4165 = vpop.f32.mrb[0].mxu0
        %v4166 = vpop.f32.mrb[0].mxu0
        %v4167 = vadd.f32 0.0, %v4166
        %v4168 = vpop.f32.mrb[0].mxu0
        %4169 = vmatprep.mubr.bf16.mxu0 %v3991
        %4170 = vmatmul.mubr.bf16.gmra.mrb[0].mxu0 %v3853
        %v4171 = vpop.f32.mrb[0].mxu0
        %v4172 = vadd.f32 0.0, %v4171
        %v4173 = vpop.f32.mrb[0].mxu0
        %v4174 = vpop.f32.mrb[0].mxu0
        %v4175 = vadd.f32 0.0, %v4174
        %v4176 = vpop.f32.mrb[0].mxu0
        %4177 = vdwg.mxu0
        %v4178 = vadd.f32 %v3667, %v4028
        %v4179 = vadd.f32 %v3670, %v4031
        %v4180 = vadd.f32 %v3675, %v4036
        %v4181 = vadd.f32 %v3678, %v4039
        %v4182 = vadd.f32 %v3683, %v4044
        %v4183 = vadd.f32 %v3686, %v4047
        %v4184 = vadd.f32 %v3691, %v4052
        %v4185 = vadd.f32 %v3694, %v4055
        %v4186 = vadd.f32 %v3699, %v4060
        %v4187 = vadd.f32 %v3702, %v4063
        %v4188 = vadd.f32 %v3707, %v4068
        %v4189 = vadd.f32 %v3710, %v4071
        %v4190 = vadd.f32 %v3715, %v4076
        %v4191 = vadd.f32 %v3718, %v4079
        %v4192 = vadd.f32 %v3723, %v4084
        %v4193 = vadd.f32 %v3726, %v4087
        %v4194 = vadd.f32 %v3731, %v4092
        %v4195 = vadd.f32 %v3734, %v4095
        %v4196 = vadd.f32 %v3739, %v4100
        %v4197 = vadd.f32 %v3742, %v4103
        %v4198 = vadd.f32 %v3747, %v4108
        %v4199 = vadd.f32 %v3750, %v4111
        %v4200 = vadd.f32 %v3755, %v4116
        %v4201 = vadd.f32 %v3758, %v4119
        %v4202 = vadd.f32 %v3763, %v4124
        %v4203 = vadd.f32 %v3766, %v4127
        %v4204 = vadd.f32 %v3771, %v4132
        %v4205 = vadd.f32 %v3774, %v4135
        %v4206 = vadd.f32 %v3779, %v4140
        %v4207 = vadd.f32 %v3782, %v4143
        %v4208 = vadd.f32 %v3787, %v4148
        %v4209 = vadd.f32 %v3790, %v4151
        %v4210 = vadd.f32 %v3795, %v4156
        %v4211 = vadd.f32 %v3798, %v4159
        %v4212 = vadd.f32 %v3803, %v4164
        %v4213 = vadd.f32 %v3806, %v4167
        %v4214 = vadd.f32 %v3811, %v4172
        %v4215 = vadd.f32 %v3814, %v4175
        %v4216 = vld [vmem:[#allocation4 + $0x60] sm:$0xff]
        %v4217 = vld [vmem:[#allocation4 + $0x68] sm:$0xff]
        %v4218 = vld [vmem:[#allocation4 + $0x70] sm:$0xff]
        %v4219 = vld [vmem:[#allocation4 + $0x78] sm:$0xff]
        %v4220 = vld [vmem:[#allocation4 + $0x80] sm:$0xff]
        %v4221 = vld [vmem:[#allocation4 + $0x88] sm:$0xff]
        %v4222 = vld [vmem:[#allocation4 + $0x90] sm:$0xff]
        %v4223 = vld [vmem:[#allocation4 + $0x98] sm:$0xff]
        %v4224 = vld [vmem:[#allocation4 + $0xa0] sm:$0xff]
        %v4225 = vld [vmem:[#allocation4 + $0xa8] sm:$0xff]
        %v4226 = vld [vmem:[#allocation4 + $0xb0] sm:$0xff]
        %v4227 = vld [vmem:[#allocation4 + $0xb8] sm:$0xff]
        %v4228 = vld [vmem:[#allocation4 + $0xc0] sm:$0xff]
        %v4229 = vld [vmem:[#allocation4 + $0xc8] sm:$0xff]
        %v4230 = vld [vmem:[#allocation4 + $0xd0] sm:$0xff]
        %v4231 = vld [vmem:[#allocation4 + $0xd8] sm:$0xff]
        %v4232 = vld [vmem:[#allocation4 + $0xe0] sm:$0xff]
        %v4233 = vld [vmem:[#allocation4 + $0xe8] sm:$0xff]
        %v4234 = vld [vmem:[#allocation4 + $0xf0] sm:$0xff]
        %v4235 = vld [vmem:[#allocation4 + $0xf8] sm:$0xff]
        %v4236 = vld [vmem:[#allocation4 + $0x100] sm:$0xff]
        %v4237 = vld [vmem:[#allocation4 + $0x108] sm:$0xff]
        %v4238 = vld [vmem:[#allocation4 + $0x110] sm:$0xff]
        %v4239 = vld [vmem:[#allocation4 + $0x118] sm:$0xff]
        %v4240 = vld [vmem:[#allocation4 + $0x120] sm:$0xff]
        %v4241 = vld [vmem:[#allocation4 + $0x128] sm:$0xff]
        %v4242 = vld [vmem:[#allocation4 + $0x130] sm:$0xff]
        %v4243 = vld [vmem:[#allocation4 + $0x138] sm:$0xff]
        %v4244 = vld [vmem:[#allocation4 + $0x140] sm:$0xff]
        %v4245 = vld [vmem:[#allocation4 + $0x148] sm:$0xff]
        %v4246 = vld [vmem:[#allocation4 + $0x150] sm:$0xff]
        %v4247 = vld [vmem:[#allocation4 + $0x158] sm:$0xff]
        %v4248 = vld [vmem:[#allocation4 + $0x160] sm:$0xff]
        %v4249 = vld [vmem:[#allocation4 + $0x168] sm:$0xff]
        %v4250 = vld [vmem:[#allocation4 + $0x170] sm:$0xff]
        %v4251 = vld [vmem:[#allocation4 + $0x178] sm:$0xff]
        %v4252 = vld [vmem:[#allocation4 + $0x180] sm:$0xff]
        %v4253 = vld [vmem:[#allocation4 + $0x188] sm:$0xff]
        %s4254 = scalar_lea.vmem %s3, 240
        %v4255 = vld [vmem:[%s4254] sm:$0xf]
        %v4256 = vld [vmem:[%s4254 + $0x4] sm:$0xf]
        %v4257 = vld [vmem:[%s4254 + $0x8] sm:$0xf]
        %v4258 = vld [vmem:[%s4254 + $0xc] sm:$0xf]
        %v4259 = vld [vmem:[%s4254 + $0x10] sm:$0xf]
        %v4260 = vld [vmem:[%s4254 + $0x14] sm:$0xf]
        %v4261 = vld [vmem:[%s4254 + $0x18] sm:$0xf]
        %v4262 = vld [vmem:[%s4254 + $0x1c] sm:$0xf]
        %v4263 = vld [vmem:[%s4254 + $0x20] sm:$0xf]
        %v4264 = vld [vmem:[%s4254 + $0x24] sm:$0xf]
        %v4265 = vld [vmem:[%s4254 + $0x28] sm:$0xf]
        %v4266 = vld [vmem:[%s4254 + $0x2c] sm:$0xf]
        %v4267 = vld [vmem:[%s4254 + $0x30] sm:$0xf]
        %v4268 = vld [vmem:[%s4254 + $0x34] sm:$0xf]
        %v4269 = vld [vmem:[%s4254 + $0x38] sm:$0xf]
        %v4270 = vld [vmem:[%s4254 + $0x3c] sm:$0xf]
        %v4271 = vld [vmem:[%s4254 + $0x40] sm:$0xf]
        %v4272 = vld [vmem:[%s4254 + $0x44] sm:$0xf]
        %v4273 = vld [vmem:[%s4254 + $0x48] sm:$0xf]
        %v4274 = vld [vmem:[%s4254 + $0x4c] sm:$0xf]
        %v4295 = vunpack.c.l.b16 %v4255
        %v4296 = vunpack.c.l.b16 %v4256
        %v4297 = vunpack.c.l.b16 %v4257
        %v4298 = vunpack.c.l.b16 %v4258
        %v4299 = vunpack.c.l.b16 %v4259
        %v4300 = vunpack.c.l.b16 %v4260
        %v4301 = vunpack.c.l.b16 %v4261
        %v4302 = vunpack.c.l.b16 %v4262
        %v4303 = vunpack.c.l.b16 %v4263
        %v4304 = vunpack.c.l.b16 %v4264
        %v4305 = vunpack.c.l.b16 %v4265
        %v4306 = vunpack.c.l.b16 %v4266
        %v4307 = vunpack.c.l.b16 %v4267
        %v4308 = vunpack.c.l.b16 %v4268
        %v4309 = vunpack.c.l.b16 %v4269
        %v4310 = vunpack.c.l.b16 %v4270
        %v4311 = vunpack.c.l.b16 %v4271
        %v4312 = vunpack.c.l.b16 %v4272
        %v4313 = vunpack.c.l.b16 %v4273
        %v4314 = vunpack.c.l.b16 %v4274
        %v4315 = vpack.c.b16 %v4296, %v4295
        %v4316 = vpack.c.b16 %v4298, %v4297
        %v4317 = vpack.c.b16 %v4300, %v4299
        %v4318 = vpack.c.b16 %v4302, %v4301
        %v4319 = vpack.c.b16 %v4304, %v4303
        %v4320 = vpack.c.b16 %v4306, %v4305
        %v4321 = vpack.c.b16 %v4308, %v4307
        %v4322 = vpack.c.b16 %v4310, %v4309
        %v4323 = vpack.c.b16 %v4312, %v4311
        %v4324 = vpack.c.b16 %v4314, %v4313
        %v4336 = vsel %vm400, %v4217, 0
        %v4339 = vsel %vm400, %v4219, 0
        %v4342 = vsel %vm400, %v4221, 0
        %v4345 = vsel %vm400, %v4223, 0
        %v4348 = vsel %vm400, %v4225, 0
        %v4351 = vsel %vm400, %v4227, 0
        %v4354 = vsel %vm400, %v4229, 0
        %v4357 = vsel %vm400, %v4231, 0
        %v4360 = vsel %vm400, %v4233, 0
        %v4363 = vsel %vm400, %v4235, 0
        %v4366 = vsel %vm400, %v4237, 0
        %v4369 = vsel %vm400, %v4239, 0
        %v4372 = vsel %vm400, %v4241, 0
        %v4375 = vsel %vm400, %v4243, 0
        %v4378 = vsel %vm400, %v4245, 0
        %v4381 = vsel %vm400, %v4247, 0
        %v4384 = vsel %vm400, %v4249, 0
        %v4387 = vsel %vm400, %v4251, 0
        %v4390 = vsel %vm400, %v4253, 0
        %4392 = vmatprep.subr.bf16.mxu0 0
        %4393 = vmatpush1.bf16.msra.mxu0 %v4315
        %4394 = vmatprep.subr.bf16.mxu0 0
        %4395 = vmatpush1.bf16.msra.mxu0 %v4316
        %4396 = vmatprep.subr.bf16.mxu0 0
        %4397 = vmatpush1.bf16.msra.mxu0 %v4317
        %4398 = vmatprep.subr.bf16.mxu0 0
        %4399 = vmatpush1.bf16.msra.mxu0 %v4318
        %4400 = vmatprep.subr.bf16.mxu0 0
        %4401 = vmatpush1.bf16.msra.mxu0 %v4319
        %4402 = vmatprep.subr.bf16.mxu0 0
        %4403 = vmatpush1.bf16.msra.mxu0 %v4320
        %4404 = vmatprep.subr.bf16.mxu0 0
        %4405 = vmatpush1.bf16.msra.mxu0 %v4321
        %4406 = vmatprep.subr.bf16.mxu0 0
        %4407 = vmatpush1.bf16.msra.mxu0 %v4322
        %4408 = vmatprep.subr.bf16.mxu0 0
        %4409 = vmatpush1.bf16.msra.mxu0 %v4323
        %4410 = vmatprep.subr.bf16.mxu0 0
        %4411 = vmatpush1.bf16.msra.mxu0 %v4324
        %4412 = vmatprep.subr.bf16.mxu0 0
        %4413 = vmatpush1.bf16.msra.mxu0 0
        %4414 = vmatprep.subr.bf16.mxu0 0
        %4415 = vmatpush1.bf16.msra.mxu0 0
        %4416 = vmatprep.subr.bf16.mxu0 0
        %4417 = vmatpush1.bf16.msra.mxu0 0
        %4418 = vmatprep.subr.bf16.mxu0 0
        %4419 = vmatpush1.bf16.msra.mxu0 0
        %4420 = vmatprep.subr.bf16.mxu0 0
        %4421 = vmatpush1.bf16.msra.mxu0 0
        %4422 = vmatprep.subr.bf16.mxu0 0
        %4423 = vmatpush1.bf16.msra.mxu0 0
        %4424 = vmatprep.mubr.bf16.mxu0 %v4336
        %4425 = vmatmul.mubr.bf16.gmra.mrb[0].mxu0 %v4216
        %v4426 = vpop.f32.mrb[0].mxu0
        %v4427 = vadd.f32 0.0, %v4426
        %v4428 = vpop.f32.mrb[0].mxu0
        %v4429 = vpop.f32.mrb[0].mxu0
        %v4430 = vadd.f32 0.0, %v4429
        %v4431 = vpop.f32.mrb[0].mxu0
        %4432 = vmatprep.mubr.bf16.mxu0 %v4339
        %4433 = vmatmul.mubr.bf16.gmra.mrb[0].mxu0 %v4218
        %v4434 = vpop.f32.mrb[0].mxu0
        %v4435 = vadd.f32 0.0, %v4434
        %v4436 = vpop.f32.mrb[0].mxu0
        %v4437 = vpop.f32.mrb[0].mxu0
        %v4438 = vadd.f32 0.0, %v4437
        %v4439 = vpop.f32.mrb[0].mxu0
        %4440 = vmatprep.mubr.bf16.mxu0 %v4342
        %4441 = vmatmul.mubr.bf16.gmra.mrb[0].mxu0 %v4220
        %v4442 = vpop.f32.mrb[0].mxu0
        %v4443 = vadd.f32 0.0, %v4442
        %v4444 = vpop.f32.mrb[0].mxu0
        %v4445 = vpop.f32.mrb[0].mxu0
        %v4446 = vadd.f32 0.0, %v4445
        %v4447 = vpop.f32.mrb[0].mxu0
        %4448 = vmatprep.mubr.bf16.mxu0 %v4345
        %4449 = vmatmul.mubr.bf16.gmra.mrb[0].mxu0 %v4222
        %v4450 = vpop.f32.mrb[0].mxu0
        %v4451 = vadd.f32 0.0, %v4450
        %v4452 = vpop.f32.mrb[0].mxu0
        %v4453 = vpop.f32.mrb[0].mxu0
        %v4454 = vadd.f32 0.0, %v4453
        %v4455 = vpop.f32.mrb[0].mxu0
        %4456 = vmatprep.mubr.bf16.mxu0 %v4348
        %4457 = vmatmul.mubr.bf16.gmra.mrb[0].mxu0 %v4224
        %v4458 = vpop.f32.mrb[0].mxu0
        %v4459 = vadd.f32 0.0, %v4458
        %v4460 = vpop.f32.mrb[0].mxu0
        %v4461 = vpop.f32.mrb[0].mxu0
        %v4462 = vadd.f32 0.0, %v4461
        %v4463 = vpop.f32.mrb[0].mxu0
        %4464 = vmatprep.mubr.bf16.mxu0 %v4351
        %4465 = vmatmul.mubr.bf16.gmra.mrb[0].mxu0 %v4226
        %v4466 = vpop.f32.mrb[0].mxu0
        %v4467 = vadd.f32 0.0, %v4466
        %v4468 = vpop.f32.mrb[0].mxu0
        %v4469 = vpop.f32.mrb[0].mxu0
        %v4470 = vadd.f32 0.0, %v4469
        %v4471 = vpop.f32.mrb[0].mxu0
        %4472 = vmatprep.mubr.bf16.mxu0 %v4354
        %4473 = vmatmul.mubr.bf16.gmra.mrb[0].mxu0 %v4228
        %v4474 = vpop.f32.mrb[0].mxu0
        %v4475 = vadd.f32 0.0, %v4474
        %v4476 = vpop.f32.mrb[0].mxu0
        %v4477 = vpop.f32.mrb[0].mxu0
        %v4478 = vadd.f32 0.0, %v4477
        %v4479 = vpop.f32.mrb[0].mxu0
        %4480 = vmatprep.mubr.bf16.mxu0 %v4357
        %4481 = vmatmul.mubr.bf16.gmra.mrb[0].mxu0 %v4230
        %v4482 = vpop.f32.mrb[0].mxu0
        %v4483 = vadd.f32 0.0, %v4482
        %v4484 = vpop.f32.mrb[0].mxu0
        %v4485 = vpop.f32.mrb[0].mxu0
        %v4486 = vadd.f32 0.0, %v4485
        %v4487 = vpop.f32.mrb[0].mxu0
        %4488 = vmatprep.mubr.bf16.mxu0 %v4360
        %4489 = vmatmul.mubr.bf16.gmra.mrb[0].mxu0 %v4232
        %v4490 = vpop.f32.mrb[0].mxu0
        %v4491 = vadd.f32 0.0, %v4490
        %v4492 = vpop.f32.mrb[0].mxu0
        %v4493 = vpop.f32.mrb[0].mxu0
        %v4494 = vadd.f32 0.0, %v4493
        %v4495 = vpop.f32.mrb[0].mxu0
        %4496 = vmatprep.mubr.bf16.mxu0 %v4363
        %4497 = vmatmul.mubr.bf16.gmra.mrb[0].mxu0 %v4234
        %v4498 = vpop.f32.mrb[0].mxu0
        %v4499 = vadd.f32 0.0, %v4498
        %v4500 = vpop.f32.mrb[0].mxu0
        %v4501 = vpop.f32.mrb[0].mxu0
        %v4502 = vadd.f32 0.0, %v4501
        %v4503 = vpop.f32.mrb[0].mxu0
        %4504 = vmatprep.mubr.bf16.mxu0 %v4366
        %4505 = vmatmul.mubr.bf16.gmra.mrb[0].mxu0 %v4236
        %v4506 = vpop.f32.mrb[0].mxu0
        %v4507 = vadd.f32 0.0, %v4506
        %v4508 = vpop.f32.mrb[0].mxu0
        %v4509 = vpop.f32.mrb[0].mxu0
        %v4510 = vadd.f32 0.0, %v4509
        %v4511 = vpop.f32.mrb[0].mxu0
        %4512 = vmatprep.mubr.bf16.mxu0 %v4369
        %4513 = vmatmul.mubr.bf16.gmra.mrb[0].mxu0 %v4238
        %v4514 = vpop.f32.mrb[0].mxu0
        %v4515 = vadd.f32 0.0, %v4514
        %v4516 = vpop.f32.mrb[0].mxu0
        %v4517 = vpop.f32.mrb[0].mxu0
        %v4518 = vadd.f32 0.0, %v4517
        %v4519 = vpop.f32.mrb[0].mxu0
        %4520 = vmatprep.mubr.bf16.mxu0 %v4372
        %4521 = vmatmul.mubr.bf16.gmra.mrb[0].mxu0 %v4240
        %v4522 = vpop.f32.mrb[0].mxu0
        %v4523 = vadd.f32 0.0, %v4522
        %v4524 = vpop.f32.mrb[0].mxu0
        %v4525 = vpop.f32.mrb[0].mxu0
        %v4526 = vadd.f32 0.0, %v4525
        %v4527 = vpop.f32.mrb[0].mxu0
        %4528 = vmatprep.mubr.bf16.mxu0 %v4375
        %4529 = vmatmul.mubr.bf16.gmra.mrb[0].mxu0 %v4242
        %v4530 = vpop.f32.mrb[0].mxu0
        %v4531 = vadd.f32 0.0, %v4530
        %v4532 = vpop.f32.mrb[0].mxu0
        %v4533 = vpop.f32.mrb[0].mxu0
        %v4534 = vadd.f32 0.0, %v4533
        %v4535 = vpop.f32.mrb[0].mxu0
        %4536 = vmatprep.mubr.bf16.mxu0 %v4378
        %4537 = vmatmul.mubr.bf16.gmra.mrb[0].mxu0 %v4244
        %v4538 = vpop.f32.mrb[0].mxu0
        %v4539 = vadd.f32 0.0, %v4538
        %v4540 = vpop.f32.mrb[0].mxu0
        %v4541 = vpop.f32.mrb[0].mxu0
        %v4542 = vadd.f32 0.0, %v4541
        %v4543 = vpop.f32.mrb[0].mxu0
        %4544 = vmatprep.mubr.bf16.mxu0 %v4381
        %4545 = vmatmul.mubr.bf16.gmra.mrb[0].mxu0 %v4246
        %v4546 = vpop.f32.mrb[0].mxu0
        %v4547 = vadd.f32 0.0, %v4546
        %v4548 = vpop.f32.mrb[0].mxu0
        %v4549 = vpop.f32.mrb[0].mxu0
        %v4550 = vadd.f32 0.0, %v4549
        %v4551 = vpop.f32.mrb[0].mxu0
        %4552 = vmatprep.mubr.bf16.mxu0 %v4384
        %4553 = vmatmul.mubr.bf16.gmra.mrb[0].mxu0 %v4248
        %v4554 = vpop.f32.mrb[0].mxu0
        %v4555 = vadd.f32 0.0, %v4554
        %v4556 = vpop.f32.mrb[0].mxu0
        %v4557 = vpop.f32.mrb[0].mxu0
        %v4558 = vadd.f32 0.0, %v4557
        %v4559 = vpop.f32.mrb[0].mxu0
        %4560 = vmatprep.mubr.bf16.mxu0 %v4387
        %4561 = vmatmul.mubr.bf16.gmra.mrb[0].mxu0 %v4250
        %v4562 = vpop.f32.mrb[0].mxu0
        %v4563 = vadd.f32 0.0, %v4562
        %v4564 = vpop.f32.mrb[0].mxu0
        %v4565 = vpop.f32.mrb[0].mxu0
        %v4566 = vadd.f32 0.0, %v4565
        %v4567 = vpop.f32.mrb[0].mxu0
        %4568 = vmatprep.mubr.bf16.mxu0 %v4390
        %4569 = vmatmul.mubr.bf16.gmra.mrb[0].mxu0 %v4252
        %v4570 = vpop.f32.mrb[0].mxu0
        %v4571 = vadd.f32 0.0, %v4570
        %v4572 = vpop.f32.mrb[0].mxu0
        %v4573 = vpop.f32.mrb[0].mxu0
        %v4574 = vadd.f32 0.0, %v4573
        %v4575 = vpop.f32.mrb[0].mxu0
        %4576 = vdwg.mxu0
        %v4577 = vadd.f32 %v4178, %v4427
        %v4578 = vadd.f32 %v4179, %v4430
        %v4579 = vadd.f32 %v4180, %v4435
        %v4580 = vadd.f32 %v4181, %v4438
        %v4581 = vadd.f32 %v4182, %v4443
        %v4582 = vadd.f32 %v4183, %v4446
        %v4583 = vadd.f32 %v4184, %v4451
        %v4584 = vadd.f32 %v4185, %v4454
        %v4585 = vadd.f32 %v4186, %v4459
        %v4586 = vadd.f32 %v4187, %v4462
        %v4587 = vadd.f32 %v4188, %v4467
        %v4588 = vadd.f32 %v4189, %v4470
        %v4589 = vadd.f32 %v4190, %v4475
        %v4590 = vadd.f32 %v4191, %v4478
        %v4591 = vadd.f32 %v4192, %v4483
        %v4592 = vadd.f32 %v4193, %v4486
        %v4593 = vadd.f32 %v4194, %v4491
        %v4594 = vadd.f32 %v4195, %v4494
        %v4595 = vadd.f32 %v4196, %v4499
        %v4596 = vadd.f32 %v4197, %v4502
        %v4597 = vadd.f32 %v4198, %v4507
        %v4598 = vadd.f32 %v4199, %v4510
        %v4599 = vadd.f32 %v4200, %v4515
        %v4600 = vadd.f32 %v4201, %v4518
        %v4601 = vadd.f32 %v4202, %v4523
        %v4602 = vadd.f32 %v4203, %v4526
        %v4603 = vadd.f32 %v4204, %v4531
        %v4604 = vadd.f32 %v4205, %v4534
        %v4605 = vadd.f32 %v4206, %v4539
        %v4606 = vadd.f32 %v4207, %v4542
        %v4607 = vadd.f32 %v4208, %v4547
        %v4608 = vadd.f32 %v4209, %v4550
        %v4609 = vadd.f32 %v4210, %v4555
        %v4610 = vadd.f32 %v4211, %v4558
        %v4611 = vadd.f32 %v4212, %v4563
        %v4612 = vadd.f32 %v4213, %v4566
        %v4613 = vadd.f32 %v4214, %v4571
        %v4614 = vadd.f32 %v4215, %v4574
        %v4615 = vld [vmem:[#allocation4 + $0x80] sm:$0xff]
        %v4616 = vld [vmem:[#allocation4 + $0x88] sm:$0xff]
        %v4617 = vld [vmem:[#allocation4 + $0x90] sm:$0xff]
        %v4618 = vld [vmem:[#allocation4 + $0x98] sm:$0xff]
        %v4619 = vld [vmem:[#allocation4 + $0xa0] sm:$0xff]
        %v4620 = vld [vmem:[#allocation4 + $0xa8] sm:$0xff]
        %v4621 = vld [vmem:[#allocation4 + $0xb0] sm:$0xff]
        %v4622 = vld [vmem:[#allocation4 + $0xb8] sm:$0xff]
        %v4623 = vld [vmem:[#allocation4 + $0xc0] sm:$0xff]
        %v4624 = vld [vmem:[#allocation4 + $0xc8] sm:$0xff]
        %v4625 = vld [vmem:[#allocation4 + $0xd0] sm:$0xff]
        %v4626 = vld [vmem:[#allocation4 + $0xd8] sm:$0xff]
        %v4627 = vld [vmem:[#allocation4 + $0xe0] sm:$0xff]
        %v4628 = vld [vmem:[#allocation4 + $0xe8] sm:$0xff]
        %v4629 = vld [vmem:[#allocation4 + $0xf0] sm:$0xff]
        %v4630 = vld [vmem:[#allocation4 + $0xf8] sm:$0xff]
        %v4631 = vld [vmem:[#allocation4 + $0x100] sm:$0xff]
        %v4632 = vld [vmem:[#allocation4 + $0x108] sm:$0xff]
        %v4633 = vld [vmem:[#allocation4 + $0x110] sm:$0xff]
        %v4634 = vld [vmem:[#allocation4 + $0x118] sm:$0xff]
        %v4635 = vld [vmem:[#allocation4 + $0x120] sm:$0xff]
        %v4636 = vld [vmem:[#allocation4 + $0x128] sm:$0xff]
        %v4637 = vld [vmem:[#allocation4 + $0x130] sm:$0xff]
        %v4638 = vld [vmem:[#allocation4 + $0x138] sm:$0xff]
        %v4639 = vld [vmem:[#allocation4 + $0x140] sm:$0xff]
        %v4640 = vld [vmem:[#allocation4 + $0x148] sm:$0xff]
        %v4641 = vld [vmem:[#allocation4 + $0x150] sm:$0xff]
        %v4642 = vld [vmem:[#allocation4 + $0x158] sm:$0xff]
        %v4643 = vld [vmem:[#allocation4 + $0x160] sm:$0xff]
        %v4644 = vld [vmem:[#allocation4 + $0x168] sm:$0xff]
        %v4645 = vld [vmem:[#allocation4 + $0x170] sm:$0xff]
        %v4646 = vld [vmem:[#allocation4 + $0x178] sm:$0xff]
        %v4647 = vld [vmem:[#allocation4 + $0x180] sm:$0xff]
        %v4648 = vld [vmem:[#allocation4 + $0x188] sm:$0xff]
        %v4649 = vld [vmem:[#allocation4 + $0x190] sm:$0xff]
        %v4650 = vld [vmem:[#allocation4 + $0x198] sm:$0xff]
        %v4651 = vld [vmem:[#allocation4 + $0x1a0] sm:$0xff]
        %v4652 = vld [vmem:[#allocation4 + $0x1a8] sm:$0xff]
        %s4653 = scalar_lea.vmem %s3, 320
        %v4654 = vld [vmem:[%s4653] sm:$0xf]
        %v4655 = vld [vmem:[%s4653 + $0x4] sm:$0xf]
        %v4656 = vld [vmem:[%s4653 + $0x8] sm:$0xf]
        %v4657 = vld [vmem:[%s4653 + $0xc] sm:$0xf]
        %v4658 = vld [vmem:[%s4653 + $0x10] sm:$0xf]
        %v4659 = vld [vmem:[%s4653 + $0x14] sm:$0xf]
        %v4660 = vld [vmem:[%s4653 + $0x18] sm:$0xf]
        %v4661 = vld [vmem:[%s4653 + $0x1c] sm:$0xf]
        %v4662 = vld [vmem:[%s4653 + $0x20] sm:$0xf]
        %v4663 = vld [vmem:[%s4653 + $0x24] sm:$0xf]
        %v4664 = vld [vmem:[%s4653 + $0x28] sm:$0xf]
        %v4665 = vld [vmem:[%s4653 + $0x2c] sm:$0xf]
        %v4666 = vld [vmem:[%s4653 + $0x30] sm:$0xf]
        %v4667 = vld [vmem:[%s4653 + $0x34] sm:$0xf]
        %v4668 = vld [vmem:[%s4653 + $0x38] sm:$0xf]
        %v4669 = vld [vmem:[%s4653 + $0x3c] sm:$0xf]
        %v4670 = vld [vmem:[%s4653 + $0x40] sm:$0xf]
        %v4671 = vld [vmem:[%s4653 + $0x44] sm:$0xf]
        %v4672 = vld [vmem:[%s4653 + $0x48] sm:$0xf]
        %v4673 = vld [vmem:[%s4653 + $0x4c] sm:$0xf]
        %v4694 = vunpack.c.l.b16 %v4654
        %v4695 = vunpack.c.l.b16 %v4655
        %v4696 = vunpack.c.l.b16 %v4656
        %v4697 = vunpack.c.l.b16 %v4657
        %v4698 = vunpack.c.l.b16 %v4658
        %v4699 = vunpack.c.l.b16 %v4659
        %v4700 = vunpack.c.l.b16 %v4660
        %v4701 = vunpack.c.l.b16 %v4661
        %v4702 = vunpack.c.l.b16 %v4662
        %v4703 = vunpack.c.l.b16 %v4663
        %v4704 = vunpack.c.l.b16 %v4664
        %v4705 = vunpack.c.l.b16 %v4665
        %v4706 = vunpack.c.l.b16 %v4666
        %v4707 = vunpack.c.l.b16 %v4667
        %v4708 = vunpack.c.l.b16 %v4668
        %v4709 = vunpack.c.l.b16 %v4669
        %v4710 = vunpack.c.l.b16 %v4670
        %v4711 = vunpack.c.l.b16 %v4671
        %v4712 = vunpack.c.l.b16 %v4672
        %v4713 = vunpack.c.l.b16 %v4673
        %v4714 = vpack.c.b16 %v4695, %v4694
        %v4715 = vpack.c.b16 %v4697, %v4696
        %v4716 = vpack.c.b16 %v4699, %v4698
        %v4717 = vpack.c.b16 %v4701, %v4700
        %v4718 = vpack.c.b16 %v4703, %v4702
        %v4719 = vpack.c.b16 %v4705, %v4704
        %v4720 = vpack.c.b16 %v4707, %v4706
        %v4721 = vpack.c.b16 %v4709, %v4708
        %v4722 = vpack.c.b16 %v4711, %v4710
        %v4723 = vpack.c.b16 %v4713, %v4712
        %v4735 = vsel %vm400, %v4616, 0
        %v4738 = vsel %vm400, %v4618, 0
        %v4741 = vsel %vm400, %v4620, 0
        %v4744 = vsel %vm400, %v4622, 0
        %v4747 = vsel %vm400, %v4624, 0
        %v4750 = vsel %vm400, %v4626, 0
        %v4753 = vsel %vm400, %v4628, 0
        %v4756 = vsel %vm400, %v4630, 0
        %v4759 = vsel %vm400, %v4632, 0
        %v4762 = vsel %vm400, %v4634, 0
        %v4765 = vsel %vm400, %v4636, 0
        %v4768 = vsel %vm400, %v4638, 0
        %v4771 = vsel %vm400, %v4640, 0
        %v4774 = vsel %vm400, %v4642, 0
        %v4777 = vsel %vm400, %v4644, 0
        %v4780 = vsel %vm400, %v4646, 0
        %v4783 = vsel %vm400, %v4648, 0
        %v4786 = vsel %vm400, %v4650, 0
        %v4789 = vsel %vm400, %v4652, 0
        %4791 = vmatprep.subr.bf16.mxu0 0
        %4792 = vmatpush1.bf16.msra.mxu0 %v4714
        %4793 = vmatprep.subr.bf16.mxu0 0
        %4794 = vmatpush1.bf16.msra.mxu0 %v4715
        %4795 = vmatprep.subr.bf16.mxu0 0
        %4796 = vmatpush1.bf16.msra.mxu0 %v4716
        %4797 = vmatprep.subr.bf16.mxu0 0
        %4798 = vmatpush1.bf16.msra.mxu0 %v4717
        %4799 = vmatprep.subr.bf16.mxu0 0
        %4800 = vmatpush1.bf16.msra.mxu0 %v4718
        %4801 = vmatprep.subr.bf16.mxu0 0
        %4802 = vmatpush1.bf16.msra.mxu0 %v4719
        %4803 = vmatprep.subr.bf16.mxu0 0
        %4804 = vmatpush1.bf16.msra.mxu0 %v4720
        %4805 = vmatprep.subr.bf16.mxu0 0
        %4806 = vmatpush1.bf16.msra.mxu0 %v4721
        %4807 = vmatprep.subr.bf16.mxu0 0
        %4808 = vmatpush1.bf16.msra.mxu0 %v4722
        %4809 = vmatprep.subr.bf16.mxu0 0
        %4810 = vmatpush1.bf16.msra.mxu0 %v4723
        %4811 = vmatprep.subr.bf16.mxu0 0
        %4812 = vmatpush1.bf16.msra.mxu0 0
        %4813 = vmatprep.subr.bf16.mxu0 0
        %4814 = vmatpush1.bf16.msra.mxu0 0
        %4815 = vmatprep.subr.bf16.mxu0 0
        %4816 = vmatpush1.bf16.msra.mxu0 0
        %4817 = vmatprep.subr.bf16.mxu0 0
        %4818 = vmatpush1.bf16.msra.mxu0 0
        %4819 = vmatprep.subr.bf16.mxu0 0
        %4820 = vmatpush1.bf16.msra.mxu0 0
        %4821 = vmatprep.subr.bf16.mxu0 0
        %4822 = vmatpush1.bf16.msra.mxu0 0
        %4823 = vmatprep.mubr.bf16.mxu0 %v4735
        %4824 = vmatmul.mubr.bf16.gmra.mrb[0].mxu0 %v4615
        %v4825 = vpop.f32.mrb[0].mxu0
        %v4826 = vadd.f32 0.0, %v4825
        %v4827 = vpop.f32.mrb[0].mxu0
        %v4828 = vpop.f32.mrb[0].mxu0
        %v4829 = vadd.f32 0.0, %v4828
        %v4830 = vpop.f32.mrb[0].mxu0
        %4831 = vmatprep.mubr.bf16.mxu0 %v4738
        %4832 = vmatmul.mubr.bf16.gmra.mrb[0].mxu0 %v4617
        %v4833 = vpop.f32.mrb[0].mxu0
        %v4834 = vadd.f32 0.0, %v4833
        %v4835 = vpop.f32.mrb[0].mxu0
        %v4836 = vpop.f32.mrb[0].mxu0
        %v4837 = vadd.f32 0.0, %v4836
        %v4838 = vpop.f32.mrb[0].mxu0
        %4839 = vmatprep.mubr.bf16.mxu0 %v4741
        %4840 = vmatmul.mubr.bf16.gmra.mrb[0].mxu0 %v4619
        %v4841 = vpop.f32.mrb[0].mxu0
        %v4842 = vadd.f32 0.0, %v4841
        %v4843 = vpop.f32.mrb[0].mxu0
        %v4844 = vpop.f32.mrb[0].mxu0
        %v4845 = vadd.f32 0.0, %v4844
        %v4846 = vpop.f32.mrb[0].mxu0
        %4847 = vmatprep.mubr.bf16.mxu0 %v4744
        %4848 = vmatmul.mubr.bf16.gmra.mrb[0].mxu0 %v4621
        %v4849 = vpop.f32.mrb[0].mxu0
        %v4850 = vadd.f32 0.0, %v4849
        %v4851 = vpop.f32.mrb[0].mxu0
        %v4852 = vpop.f32.mrb[0].mxu0
        %v4853 = vadd.f32 0.0, %v4852
        %v4854 = vpop.f32.mrb[0].mxu0
        %4855 = vmatprep.mubr.bf16.mxu0 %v4747
        %4856 = vmatmul.mubr.bf16.gmra.mrb[0].mxu0 %v4623
        %v4857 = vpop.f32.mrb[0].mxu0
        %v4858 = vadd.f32 0.0, %v4857
        %v4859 = vpop.f32.mrb[0].mxu0
        %v4860 = vpop.f32.mrb[0].mxu0
        %v4861 = vadd.f32 0.0, %v4860
        %v4862 = vpop.f32.mrb[0].mxu0
        %4863 = vmatprep.mubr.bf16.mxu0 %v4750
        %4864 = vmatmul.mubr.bf16.gmra.mrb[0].mxu0 %v4625
        %v4865 = vpop.f32.mrb[0].mxu0
        %v4866 = vadd.f32 0.0, %v4865
        %v4867 = vpop.f32.mrb[0].mxu0
        %v4868 = vpop.f32.mrb[0].mxu0
        %v4869 = vadd.f32 0.0, %v4868
        %v4870 = vpop.f32.mrb[0].mxu0
        %4871 = vmatprep.mubr.bf16.mxu0 %v4753
        %4872 = vmatmul.mubr.bf16.gmra.mrb[0].mxu0 %v4627
        %v4873 = vpop.f32.mrb[0].mxu0
        %v4874 = vadd.f32 0.0, %v4873
        %v4875 = vpop.f32.mrb[0].mxu0
        %v4876 = vpop.f32.mrb[0].mxu0
        %v4877 = vadd.f32 0.0, %v4876
        %v4878 = vpop.f32.mrb[0].mxu0
        %4879 = vmatprep.mubr.bf16.mxu0 %v4756
        %4880 = vmatmul.mubr.bf16.gmra.mrb[0].mxu0 %v4629
        %v4881 = vpop.f32.mrb[0].mxu0
        %v4882 = vadd.f32 0.0, %v4881
        %v4883 = vpop.f32.mrb[0].mxu0
        %v4884 = vpop.f32.mrb[0].mxu0
        %v4885 = vadd.f32 0.0, %v4884
        %v4886 = vpop.f32.mrb[0].mxu0
        %4887 = vmatprep.mubr.bf16.mxu0 %v4759
        %4888 = vmatmul.mubr.bf16.gmra.mrb[0].mxu0 %v4631
        %v4889 = vpop.f32.mrb[0].mxu0
        %v4890 = vadd.f32 0.0, %v4889
        %v4891 = vpop.f32.mrb[0].mxu0
        %v4892 = vpop.f32.mrb[0].mxu0
        %v4893 = vadd.f32 0.0, %v4892
        %v4894 = vpop.f32.mrb[0].mxu0
        %4895 = vmatprep.mubr.bf16.mxu0 %v4762
        %4896 = vmatmul.mubr.bf16.gmra.mrb[0].mxu0 %v4633
        %v4897 = vpop.f32.mrb[0].mxu0
        %v4898 = vadd.f32 0.0, %v4897
        %v4899 = vpop.f32.mrb[0].mxu0
        %v4900 = vpop.f32.mrb[0].mxu0
        %v4901 = vadd.f32 0.0, %v4900
        %v4902 = vpop.f32.mrb[0].mxu0
        %4903 = vmatprep.mubr.bf16.mxu0 %v4765
        %4904 = vmatmul.mubr.bf16.gmra.mrb[0].mxu0 %v4635
        %v4905 = vpop.f32.mrb[0].mxu0
        %v4906 = vadd.f32 0.0, %v4905
        %v4907 = vpop.f32.mrb[0].mxu0
        %v4908 = vpop.f32.mrb[0].mxu0
        %v4909 = vadd.f32 0.0, %v4908
        %v4910 = vpop.f32.mrb[0].mxu0
        %4911 = vmatprep.mubr.bf16.mxu0 %v4768
        %4912 = vmatmul.mubr.bf16.gmra.mrb[0].mxu0 %v4637
        %v4913 = vpop.f32.mrb[0].mxu0
        %v4914 = vadd.f32 0.0, %v4913
        %v4915 = vpop.f32.mrb[0].mxu0
        %v4916 = vpop.f32.mrb[0].mxu0
        %v4917 = vadd.f32 0.0, %v4916
        %v4918 = vpop.f32.mrb[0].mxu0
        %4919 = vmatprep.mubr.bf16.mxu0 %v4771
        %4920 = vmatmul.mubr.bf16.gmra.mrb[0].mxu0 %v4639
        %v4921 = vpop.f32.mrb[0].mxu0
        %v4922 = vadd.f32 0.0, %v4921
        %v4923 = vpop.f32.mrb[0].mxu0
        %v4924 = vpop.f32.mrb[0].mxu0
        %v4925 = vadd.f32 0.0, %v4924
        %v4926 = vpop.f32.mrb[0].mxu0
        %4927 = vmatprep.mubr.bf16.mxu0 %v4774
        %4928 = vmatmul.mubr.bf16.gmra.mrb[0].mxu0 %v4641
        %v4929 = vpop.f32.mrb[0].mxu0
        %v4930 = vadd.f32 0.0, %v4929
        %v4931 = vpop.f32.mrb[0].mxu0
        %v4932 = vpop.f32.mrb[0].mxu0
        %v4933 = vadd.f32 0.0, %v4932
        %v4934 = vpop.f32.mrb[0].mxu0
        %4935 = vmatprep.mubr.bf16.mxu0 %v4777
        %4936 = vmatmul.mubr.bf16.gmra.mrb[0].mxu0 %v4643
        %v4937 = vpop.f32.mrb[0].mxu0
        %v4938 = vadd.f32 0.0, %v4937
        %v4939 = vpop.f32.mrb[0].mxu0
        %v4940 = vpop.f32.mrb[0].mxu0
        %v4941 = vadd.f32 0.0, %v4940
        %v4942 = vpop.f32.mrb[0].mxu0
        %4943 = vmatprep.mubr.bf16.mxu0 %v4780
        %4944 = vmatmul.mubr.bf16.gmra.mrb[0].mxu0 %v4645
        %v4945 = vpop.f32.mrb[0].mxu0
        %v4946 = vadd.f32 0.0, %v4945
        %v4947 = vpop.f32.mrb[0].mxu0
        %v4948 = vpop.f32.mrb[0].mxu0
        %v4949 = vadd.f32 0.0, %v4948
        %v4950 = vpop.f32.mrb[0].mxu0
        %4951 = vmatprep.mubr.bf16.mxu0 %v4783
        %4952 = vmatmul.mubr.bf16.gmra.mrb[0].mxu0 %v4647
        %v4953 = vpop.f32.mrb[0].mxu0
        %v4954 = vadd.f32 0.0, %v4953
        %v4955 = vpop.f32.mrb[0].mxu0
        %v4956 = vpop.f32.mrb[0].mxu0
        %v4957 = vadd.f32 0.0, %v4956
        %v4958 = vpop.f32.mrb[0].mxu0
        %4959 = vmatprep.mubr.bf16.mxu0 %v4786
        %4960 = vmatmul.mubr.bf16.gmra.mrb[0].mxu0 %v4649
        %v4961 = vpop.f32.mrb[0].mxu0
        %v4962 = vadd.f32 0.0, %v4961
        %v4963 = vpop.f32.mrb[0].mxu0
        %v4964 = vpop.f32.mrb[0].mxu0
        %v4965 = vadd.f32 0.0, %v4964
        %v4966 = vpop.f32.mrb[0].mxu0
        %4967 = vmatprep.mubr.bf16.mxu0 %v4789
        %4968 = vmatmul.mubr.bf16.gmra.mrb[0].mxu0 %v4651
        %v4969 = vpop.f32.mrb[0].mxu0
        %v4970 = vadd.f32 0.0, %v4969
        %v4971 = vpop.f32.mrb[0].mxu0
        %v4972 = vpop.f32.mrb[0].mxu0
        %v4973 = vadd.f32 0.0, %v4972
        %v4974 = vpop.f32.mrb[0].mxu0
        %4975 = vdwg.mxu0
        %v4976 = vadd.f32 %v4577, %v4826
        %v4977 = vadd.f32 %v4578, %v4829
        %v4978 = vadd.f32 %v4579, %v4834
        %v4979 = vadd.f32 %v4580, %v4837
        %v4980 = vadd.f32 %v4581, %v4842
        %v4981 = vadd.f32 %v4582, %v4845
        %v4982 = vadd.f32 %v4583, %v4850
        %v4983 = vadd.f32 %v4584, %v4853
        %v4984 = vadd.f32 %v4585, %v4858
        %v4985 = vadd.f32 %v4586, %v4861
        %v4986 = vadd.f32 %v4587, %v4866
        %v4987 = vadd.f32 %v4588, %v4869
        %v4988 = vadd.f32 %v4589, %v4874
        %v4989 = vadd.f32 %v4590, %v4877
        %v4990 = vadd.f32 %v4591, %v4882
        %v4991 = vadd.f32 %v4592, %v4885
        %v4992 = vadd.f32 %v4593, %v4890
        %v4993 = vadd.f32 %v4594, %v4893
        %v4994 = vadd.f32 %v4595, %v4898
        %v4995 = vadd.f32 %v4596, %v4901
        %v4996 = vadd.f32 %v4597, %v4906
        %v4997 = vadd.f32 %v4598, %v4909
        %v4998 = vadd.f32 %v4599, %v4914
        %v4999 = vadd.f32 %v4600, %v4917
        %v5000 = vadd.f32 %v4601, %v4922
        %v5001 = vadd.f32 %v4602, %v4925
        %v5002 = vadd.f32 %v4603, %v4930
        %v5003 = vadd.f32 %v4604, %v4933
        %v5004 = vadd.f32 %v4605, %v4938
        %v5005 = vadd.f32 %v4606, %v4941
        %v5006 = vadd.f32 %v4607, %v4946
        %v5007 = vadd.f32 %v4608, %v4949
        %v5008 = vadd.f32 %v4609, %v4954
        %v5009 = vadd.f32 %v4610, %v4957
        %v5010 = vadd.f32 %v4611, %v4962
        %v5011 = vadd.f32 %v4612, %v4965
        %v5012 = vadd.f32 %v4613, %v4970
        %v5013 = vadd.f32 %v4614, %v4973
        %v5014 = vld [vmem:[%s4] sm:$0x1]
        %v5016 = vlaneseq
        %v5017 = vshrl.u32 %v5016, 7
        %v5018 = vsub.s32 0, %v5017
        %v5019 = vrot.slane %v5014, %v5018
        %v5021 = vadd.f32 %v4976, %v5019
        %v5022 = vadd.f32 %v4977, %v5019
        %v5023 = vadd.f32 %v4978, %v5019
        %v5024 = vadd.f32 %v4979, %v5019
        %v5025 = vadd.f32 %v4980, %v5019
        %v5026 = vadd.f32 %v4981, %v5019
        %v5027 = vadd.f32 %v4982, %v5019
        %v5028 = vadd.f32 %v4983, %v5019
        %v5029 = vadd.f32 %v4984, %v5019
        %v5030 = vadd.f32 %v4985, %v5019
        %v5031 = vadd.f32 %v4986, %v5019
        %v5032 = vadd.f32 %v4987, %v5019
        %v5033 = vadd.f32 %v4988, %v5019
        %v5034 = vadd.f32 %v4989, %v5019
        %v5035 = vadd.f32 %v4990, %v5019
        %v5036 = vadd.f32 %v4991, %v5019
        %v5037 = vadd.f32 %v4992, %v5019
        %v5038 = vadd.f32 %v4993, %v5019
        %v5039 = vadd.f32 %v4994, %v5019
        %v5040 = vadd.f32 %v4995, %v5019
        %v5041 = vadd.f32 %v4996, %v5019
        %v5042 = vadd.f32 %v4997, %v5019
        %v5043 = vadd.f32 %v4998, %v5019
        %v5044 = vadd.f32 %v4999, %v5019
        %v5045 = vadd.f32 %v5000, %v5019
        %v5046 = vadd.f32 %v5001, %v5019
        %v5047 = vadd.f32 %v5002, %v5019
        %v5048 = vadd.f32 %v5003, %v5019
        %v5049 = vadd.f32 %v5004, %v5019
        %v5050 = vadd.f32 %v5005, %v5019
        %v5051 = vadd.f32 %v5006, %v5019
        %v5052 = vadd.f32 %v5007, %v5019
        %v5053 = vadd.f32 %v5008, %v5019
        %v5054 = vadd.f32 %v5009, %v5019
        %v5055 = vadd.f32 %v5010, %v5019
        %v5056 = vadd.f32 %v5011, %v5019
        %v5057 = vadd.f32 %v5012, %v5019
        %v5058 = vadd.f32 %v5013, %v5019
        %v5059 = vmax.f32 %v5021, 0.0
        %v5060 = vmax.f32 %v5022, 0.0
        %v5061 = vmax.f32 %v5023, 0.0
        %v5062 = vmax.f32 %v5024, 0.0
        %v5063 = vmax.f32 %v5025, 0.0
        %v5064 = vmax.f32 %v5026, 0.0
        %v5065 = vmax.f32 %v5027, 0.0
        %v5066 = vmax.f32 %v5028, 0.0
        %v5067 = vmax.f32 %v5029, 0.0
        %v5068 = vmax.f32 %v5030, 0.0
        %v5069 = vmax.f32 %v5031, 0.0
        %v5070 = vmax.f32 %v5032, 0.0
        %v5071 = vmax.f32 %v5033, 0.0
        %v5072 = vmax.f32 %v5034, 0.0
        %v5073 = vmax.f32 %v5035, 0.0
        %v5074 = vmax.f32 %v5036, 0.0
        %v5075 = vmax.f32 %v5037, 0.0
        %v5076 = vmax.f32 %v5038, 0.0
        %v5077 = vmax.f32 %v5039, 0.0
        %v5078 = vmax.f32 %v5040, 0.0
        %v5079 = vmax.f32 %v5041, 0.0
        %v5080 = vmax.f32 %v5042, 0.0
        %v5081 = vmax.f32 %v5043, 0.0
        %v5082 = vmax.f32 %v5044, 0.0
        %v5083 = vmax.f32 %v5045, 0.0
        %v5084 = vmax.f32 %v5046, 0.0
        %v5085 = vmax.f32 %v5047, 0.0
        %v5086 = vmax.f32 %v5048, 0.0
        %v5087 = vmax.f32 %v5049, 0.0
        %v5088 = vmax.f32 %v5050, 0.0
        %v5089 = vmax.f32 %v5051, 0.0
        %v5090 = vmax.f32 %v5052, 0.0
        %v5091 = vmax.f32 %v5053, 0.0
        %v5092 = vmax.f32 %v5054, 0.0
        %v5093 = vmax.f32 %v5055, 0.0
        %v5094 = vmax.f32 %v5056, 0.0
        %v5095 = vmax.f32 %v5057, 0.0
        %v5096 = vmax.f32 %v5058, 0.0
        %5097 = vst.msk [vmem:[#allocation5] sm:$0xff] %vm2963, %v5059
        %5098 = vst.msk [vmem:[#allocation5 + $0x8] sm:$0xff] %vm2963, %v5060
        %5099 = vst.msk [vmem:[#allocation5 + $0x10] sm:$0xff] %vm2963, %v5061
        %5100 = vst.msk [vmem:[#allocation5 + $0x18] sm:$0xff] %vm2963, %v5062
        %5101 = vst.msk [vmem:[#allocation5 + $0x20] sm:$0xff] %vm2963, %v5063
        %5102 = vst.msk [vmem:[#allocation5 + $0x28] sm:$0xff] %vm2963, %v5064
        %5103 = vst.msk [vmem:[#allocation5 + $0x30] sm:$0xff] %vm2963, %v5065
        %5104 = vst.msk [vmem:[#allocation5 + $0x38] sm:$0xff] %vm2963, %v5066
        %5105 = vst.msk [vmem:[#allocation5 + $0x40] sm:$0xff] %vm2963, %v5067
        %5106 = vst.msk [vmem:[#allocation5 + $0x48] sm:$0xff] %vm2963, %v5068
        %5107 = vst.msk [vmem:[#allocation5 + $0x50] sm:$0xff] %vm2963, %v5069
        %5108 = vst.msk [vmem:[#allocation5 + $0x58] sm:$0xff] %vm2963, %v5070
        %5109 = vst.msk [vmem:[#allocation5 + $0x60] sm:$0xff] %vm2963, %v5071
        %5110 = vst.msk [vmem:[#allocation5 + $0x68] sm:$0xff] %vm2963, %v5072
        %5111 = vst.msk [vmem:[#allocation5 + $0x70] sm:$0xff] %vm2963, %v5073
        %5112 = vst.msk [vmem:[#allocation5 + $0x78] sm:$0xff] %vm2963, %v5074
        %5113 = vst.msk [vmem:[#allocation5 + $0x80] sm:$0xff] %vm2963, %v5075
        %5114 = vst.msk [vmem:[#allocation5 + $0x88] sm:$0xff] %vm2963, %v5076
        %5115 = vst.msk [vmem:[#allocation5 + $0x90] sm:$0xff] %vm2963, %v5077
        %5116 = vst.msk [vmem:[#allocation5 + $0x98] sm:$0xff] %vm2963, %v5078
        %5117 = vst.msk [vmem:[#allocation5 + $0xa0] sm:$0xff] %vm2963, %v5079
        %5118 = vst.msk [vmem:[#allocation5 + $0xa8] sm:$0xff] %vm2963, %v5080
        %5119 = vst.msk [vmem:[#allocation5 + $0xb0] sm:$0xff] %vm2963, %v5081
        %5120 = vst.msk [vmem:[#allocation5 + $0xb8] sm:$0xff] %vm2963, %v5082
        %5121 = vst.msk [vmem:[#allocation5 + $0xc0] sm:$0xff] %vm2963, %v5083
        %5122 = vst.msk [vmem:[#allocation5 + $0xc8] sm:$0xff] %vm2963, %v5084
        %5123 = vst.msk [vmem:[#allocation5 + $0xd0] sm:$0xff] %vm2963, %v5085
        %5124 = vst.msk [vmem:[#allocation5 + $0xd8] sm:$0xff] %vm2963, %v5086
        %5125 = vst.msk [vmem:[#allocation5 + $0xe0] sm:$0xff] %vm2963, %v5087
        %5126 = vst.msk [vmem:[#allocation5 + $0xe8] sm:$0xff] %vm2963, %v5088
        %5127 = vst.msk [vmem:[#allocation5 + $0xf0] sm:$0xff] %vm2963, %v5089
        %5128 = vst.msk [vmem:[#allocation5 + $0xf8] sm:$0xff] %vm2963, %v5090
        %5129 = vst.msk [vmem:[#allocation5 + $0x100] sm:$0xff] %vm2963, %v5091
        %5130 = vst.msk [vmem:[#allocation5 + $0x108] sm:$0xff] %vm2963, %v5092
        %5131 = vst.msk [vmem:[#allocation5 + $0x110] sm:$0xff] %vm2963, %v5093
        %5132 = vst.msk [vmem:[#allocation5 + $0x118] sm:$0xff] %vm2963, %v5094
        %5133 = vst.msk [vmem:[#allocation5 + $0x120] sm:$0xff] %vm2963, %v5095
        %5134 = vst.msk [vmem:[#allocation5 + $0x128] sm:$0xff] %vm2963, %v5096
        %5135 = vst.msk [vmem:[#allocation5 + $0x130] sm:$0xff] %vm2963, 0.0
        %5136 = vst.msk [vmem:[#allocation5 + $0x138] sm:$0xff] %vm2963, 0.0
        %5137 = vst.msk [vmem:[#allocation5 + $0x140] sm:$0xff] %vm2963, 0.0
        %5138 = vst.msk [vmem:[#allocation5 + $0x148] sm:$0xff] %vm2963, 0.0
        %5139 = vst.msk [vmem:[#allocation5 + $0x150] sm:$0xff] %vm2963, 0.0
        %5140 = vst.msk [vmem:[#allocation5 + $0x158] sm:$0xff] %vm2963, 0.0
        %v5141 = vld [vmem:[#allocation5] ss:$2 sm:$0xff]
        %s5142 = scalar_lea.vmem [#allocation5], 16
        %v5143 = vld [vmem:[%s5142] ss:$2 sm:$0xff]
        %s5144 = scalar_lea.vmem [#allocation5], 32
        %v5145 = vld [vmem:[%s5144] ss:$2 sm:$0xff]
        %s5146 = scalar_lea.vmem [#allocation5], 48
        %v5147 = vld [vmem:[%s5146] ss:$2 sm:$0xff]
        %s5148 = scalar_lea.vmem [#allocation5], 64
        %v5149 = vld [vmem:[%s5148] ss:$2 sm:$0xff]
        %s5150 = scalar_lea.vmem [#allocation5], 80
        %v5151 = vld [vmem:[%s5150] ss:$2 sm:$0xff]
        %s5152 = scalar_lea.vmem [#allocation5], 96
        %v5153 = vld [vmem:[%s5152] ss:$2 sm:$0xff]
        %s5154 = scalar_lea.vmem [#allocation5], 112
        %v5155 = vld [vmem:[%s5154] ss:$2 sm:$0xff]
        %s5156 = scalar_lea.vmem [#allocation5], 128
        %v5157 = vld [vmem:[%s5156] ss:$2 sm:$0xff]
        %s5158 = scalar_lea.vmem [#allocation5], 144
        %v5159 = vld [vmem:[%s5158] ss:$2 sm:$0xff]
        %s5160 = scalar_lea.vmem [#allocation5], 160
        %v5161 = vld [vmem:[%s5160] ss:$2 sm:$0xff]
        %s5162 = scalar_lea.vmem [#allocation5], 176
        %v5163 = vld [vmem:[%s5162] ss:$2 sm:$0xff]
        %s5164 = scalar_lea.vmem [#allocation5], 192
        %v5165 = vld [vmem:[%s5164] ss:$2 sm:$0xff]
        %s5166 = scalar_lea.vmem [#allocation5], 208
        %v5167 = vld [vmem:[%s5166] ss:$2 sm:$0xff]
        %s5168 = scalar_lea.vmem [#allocation5], 224
        %v5169 = vld [vmem:[%s5168] ss:$2 sm:$0xff]
        %s5170 = scalar_lea.vmem [#allocation5], 240
        %v5171 = vld [vmem:[%s5170] ss:$2 sm:$0xff]
        %s5172 = scalar_lea.vmem [#allocation5], 256
        %v5173 = vld [vmem:[%s5172] ss:$2 sm:$0xff]
        %s5174 = scalar_lea.vmem [#allocation5], 272
        %v5175 = vld [vmem:[%s5174] ss:$2 sm:$0xff]
        %s5176 = scalar_lea.vmem [#allocation5], 288
        %v5177 = vld [vmem:[%s5176] ss:$2 sm:$0xff]
        %s5178 = scalar_lea.vmem [#allocation5], 304
        %v5179 = vld [vmem:[%s5178] ss:$2 sm:$0xff]
        %s5180 = scalar_lea.vmem [#allocation5], 1
        %v5181 = vld [vmem:[%s5180] ss:$2 sm:$0xff]
        %s5182 = scalar_lea.vmem [#allocation5], 17
        %v5183 = vld [vmem:[%s5182] ss:$2 sm:$0xff]
        %s5184 = scalar_lea.vmem [#allocation5], 33
        %v5185 = vld [vmem:[%s5184] ss:$2 sm:$0xff]
        %s5186 = scalar_lea.vmem [#allocation5], 49
        %v5187 = vld [vmem:[%s5186] ss:$2 sm:$0xff]
        %s5188 = scalar_lea.vmem [#allocation5], 65
        %v5189 = vld [vmem:[%s5188] ss:$2 sm:$0xff]
        %s5190 = scalar_lea.vmem [#allocation5], 81
        %v5191 = vld [vmem:[%s5190] ss:$2 sm:$0xff]
        %s5192 = scalar_lea.vmem [#allocation5], 97
        %v5193 = vld [vmem:[%s5192] ss:$2 sm:$0xff]
        %s5194 = scalar_lea.vmem [#allocation5], 113
        %v5195 = vld [vmem:[%s5194] ss:$2 sm:$0xff]
        %s5196 = scalar_lea.vmem [#allocation5], 129
        %v5197 = vld [vmem:[%s5196] ss:$2 sm:$0xff]
        %s5198 = scalar_lea.vmem [#allocation5], 145
        %v5199 = vld [vmem:[%s5198] ss:$2 sm:$0xff]
        %s5200 = scalar_lea.vmem [#allocation5], 161
        %v5201 = vld [vmem:[%s5200] ss:$2 sm:$0xff]
        %s5202 = scalar_lea.vmem [#allocation5], 177
        %v5203 = vld [vmem:[%s5202] ss:$2 sm:$0xff]
        %s5204 = scalar_lea.vmem [#allocation5], 193
        %v5205 = vld [vmem:[%s5204] ss:$2 sm:$0xff]
        %s5206 = scalar_lea.vmem [#allocation5], 209
        %v5207 = vld [vmem:[%s5206] ss:$2 sm:$0xff]
        %s5208 = scalar_lea.vmem [#allocation5], 225
        %v5209 = vld [vmem:[%s5208] ss:$2 sm:$0xff]
        %s5210 = scalar_lea.vmem [#allocation5], 241
        %v5211 = vld [vmem:[%s5210] ss:$2 sm:$0xff]
        %s5212 = scalar_lea.vmem [#allocation5], 257
        %v5213 = vld [vmem:[%s5212] ss:$2 sm:$0xff]
        %s5214 = scalar_lea.vmem [#allocation5], 273
        %v5215 = vld [vmem:[%s5214] ss:$2 sm:$0xff]
        %s5216 = scalar_lea.vmem [#allocation5], 289
        %v5217 = vld [vmem:[%s5216] ss:$2 sm:$0xff]
        %s5218 = scalar_lea.vmem [#allocation5], 305
        %v5219 = vld [vmem:[%s5218] ss:$2 sm:$0xff]
        %s5220 = scalar_lea.vmem [#allocation5], 320
        %v5221 = vld [vmem:[%s5220] ss:$2 sm:$0xff]
        %s5222 = scalar_lea.vmem [#allocation5], 336
        %v5223 = vld [vmem:[%s5222] ss:$2 sm:$0xff]
        %s5224 = scalar_lea.vmem [#allocation5], 321
        %v5225 = vld [vmem:[%s5224] ss:$2 sm:$0xff]
        %s5226 = scalar_lea.vmem [#allocation5], 337
        %v5227 = vld [vmem:[%s5226] ss:$2 sm:$0xff]
        %v5228 = vmax.f32 %v5141, %v5181
        %v5229 = vmax.f32 %v5143, %v5183
        %v5230 = vmax.f32 %v5145, %v5185
        %v5231 = vmax.f32 %v5147, %v5187
        %v5232 = vmax.f32 %v5149, %v5189
        %v5233 = vmax.f32 %v5151, %v5191
        %v5234 = vmax.f32 %v5153, %v5193
        %v5235 = vmax.f32 %v5155, %v5195
        %v5236 = vmax.f32 %v5157, %v5197
        %v5237 = vmax.f32 %v5159, %v5199
        %v5238 = vmax.f32 %v5161, %v5201
        %v5239 = vmax.f32 %v5163, %v5203
        %v5240 = vmax.f32 %v5165, %v5205
        %v5241 = vmax.f32 %v5167, %v5207
        %v5242 = vmax.f32 %v5169, %v5209
        %v5243 = vmax.f32 %v5171, %v5211
        %v5244 = vmax.f32 %v5173, %v5213
        %v5245 = vmax.f32 %v5175, %v5215
        %v5246 = vmax.f32 %v5177, %v5217
        %v5247 = vmax.f32 %v5179, %v5219
        %v5248 = vmax.f32 %v5221, %v5225
        %v5249 = vmax.f32 %v5223, %v5227
        %v5250 = vmax.f32 %v5228, %v5230
        %v5251 = vmax.f32 %v5229, %v5231
        %v5252 = vmax.f32 %v5230, %v5232
        %v5253 = vmax.f32 %v5231, %v5233
        %v5254 = vmax.f32 %v5232, %v5234
        %v5255 = vmax.f32 %v5233, %v5235
        %v5256 = vmax.f32 %v5234, %v5236
        %v5257 = vmax.f32 %v5235, %v5237
        %v5258 = vmax.f32 %v5236, %v5238
        %v5259 = vmax.f32 %v5237, %v5239
        %v5260 = vmax.f32 %v5238, %v5240
        %v5261 = vmax.f32 %v5239, %v5241
        %v5262 = vmax.f32 %v5240, %v5242
        %v5263 = vmax.f32 %v5241, %v5243
        %v5264 = vmax.f32 %v5242, %v5244
        %v5265 = vmax.f32 %v5243, %v5245
        %v5266 = vmax.f32 %v5244, %v5246
        %v5267 = vmax.f32 %v5245, %v5247
        %v5268 = vmax.f32 %v5246, %v5248
        %v5269 = vmax.f32 %v5247, %v5249
        %5270 = vst.msk [vmem:[#allocation6] sm:$0xff] %vm2963, %v5250
        %5271 = vst.msk [vmem:[#allocation6 + $0x8] sm:$0xff] %vm2963, %v5251
        %5272 = vst.msk [vmem:[#allocation6 + $0x10] sm:$0xff] %vm2963, %v5252
        %5273 = vst.msk [vmem:[#allocation6 + $0x18] sm:$0xff] %vm2963, %v5253
        %5274 = vst.msk [vmem:[#allocation6 + $0x20] sm:$0xff] %vm2963, %v5254
        %5275 = vst.msk [vmem:[#allocation6 + $0x28] sm:$0xff] %vm2963, %v5255
        %5276 = vst.msk [vmem:[#allocation6 + $0x30] sm:$0xff] %vm2963, %v5256
        %5277 = vst.msk [vmem:[#allocation6 + $0x38] sm:$0xff] %vm2963, %v5257
        %5278 = vst.msk [vmem:[#allocation6 + $0x40] sm:$0xff] %vm2963, %v5258
        %5279 = vst.msk [vmem:[#allocation6 + $0x48] sm:$0xff] %vm2963, %v5259
        %5280 = vst.msk [vmem:[#allocation6 + $0x50] sm:$0xff] %vm2963, %v5260
        %5281 = vst.msk [vmem:[#allocation6 + $0x58] sm:$0xff] %vm2963, %v5261
        %5282 = vst.msk [vmem:[#allocation6 + $0x60] sm:$0xff] %vm2963, %v5262
        %5283 = vst.msk [vmem:[#allocation6 + $0x68] sm:$0xff] %vm2963, %v5263
        %5284 = vst.msk [vmem:[#allocation6 + $0x70] sm:$0xff] %vm2963, %v5264
        %5285 = vst.msk [vmem:[#allocation6 + $0x78] sm:$0xff] %vm2963, %v5265
        %5286 = vst.msk [vmem:[#allocation6 + $0x80] sm:$0xff] %vm2963, %v5266
        %5287 = vst.msk [vmem:[#allocation6 + $0x88] sm:$0xff] %vm2963, %v5267
        %5288 = vst.msk [vmem:[#allocation6 + $0x90] sm:$0xff] %vm2963, %v5268
        %5289 = vst.msk [vmem:[#allocation6 + $0x98] sm:$0xff] %vm2963, %v5269
        %v5290 = vld [vmem:[#allocation6] sm:$0x1]
        %v5291 = vld [vmem:[#allocation6 + $0x1] sm:$0x1]
        %v5292 = vld [vmem:[#allocation6 + $0x2] sm:$0x1]
        %v5293 = vld [vmem:[#allocation6 + $0x3] sm:$0x1]
        %v5294 = vld [vmem:[#allocation6 + $0x4] sm:$0x1]
        %v5295 = vld [vmem:[#allocation6 + $0x20] sm:$0x1]
        %v5296 = vld [vmem:[#allocation6 + $0x21] sm:$0x1]
        %v5297 = vld [vmem:[#allocation6 + $0x22] sm:$0x1]
        %v5298 = vld [vmem:[#allocation6 + $0x23] sm:$0x1]
        %v5299 = vld [vmem:[#allocation6 + $0x24] sm:$0x1]
        %v5300 = vld [vmem:[#allocation6 + $0x40] sm:$0x1]
        %v5301 = vld [vmem:[#allocation6 + $0x41] sm:$0x1]
        %v5302 = vld [vmem:[#allocation6 + $0x42] sm:$0x1]
        %v5303 = vld [vmem:[#allocation6 + $0x43] sm:$0x1]
        %v5304 = vld [vmem:[#allocation6 + $0x44] sm:$0x1]
        %v5305 = vld [vmem:[#allocation6 + $0x60] sm:$0x1]
        %v5306 = vld [vmem:[#allocation6 + $0x61] sm:$0x1]
        %v5307 = vld [vmem:[#allocation6 + $0x62] sm:$0x1]
        %v5308 = vld [vmem:[#allocation6 + $0x63] sm:$0x1]
        %v5309 = vld [vmem:[#allocation6 + $0x64] sm:$0x1]
        %v5310 = vld [vmem:[#allocation6 + $0x80] sm:$0x1]
        %v5311 = vld [vmem:[#allocation6 + $0x81] sm:$0x1]
        %v5312 = vld [vmem:[#allocation6 + $0x82] sm:$0x1]
        %v5313 = vld [vmem:[#allocation6 + $0x83] sm:$0x1]
        %v5314 = vld [vmem:[#allocation6 + $0x84] sm:$0x1]
        %5316 = vrot.lane.b32.xlu0 %v5291, 64
        %v5317 = vpop.permute.xlu0 %5316
        %5320 = vrot.lane.b32.xlu0 %v5293, 64
        %v5321 = vpop.permute.xlu0 %5320
        %5324 = vrot.lane.b32.xlu0 %v5295, 64
        %v5325 = vpop.permute.xlu0 %5324
        %5328 = vrot.lane.b32.xlu0 %v5297, 64
        %v5329 = vpop.permute.xlu0 %5328
        %5332 = vrot.lane.b32.xlu0 %v5299, 64
        %v5333 = vpop.permute.xlu0 %5332
        %5336 = vrot.lane.b32.xlu0 %v5301, 64
        %v5337 = vpop.permute.xlu0 %5336
        %5340 = vrot.lane.b32.xlu0 %v5303, 64
        %v5341 = vpop.permute.xlu0 %5340
        %5344 = vrot.lane.b32.xlu0 %v5305, 64
        %v5345 = vpop.permute.xlu0 %5344
        %v5347 = vsel %vm2963, %v5290, %v5317
        %v5348 = vsel %vm2963, %v5292, %v5321
        %v5349 = vsel %vm2963, %v5294, %v5325
        %v5350 = vsel %vm2963, %v5296, %v5329
        %v5351 = vsel %vm2963, %v5298, %v5333
        %v5352 = vsel %vm2963, %v5300, %v5337
        %v5353 = vsel %vm2963, %v5302, %v5341
        %v5354 = vsel %vm2963, %v5304, %v5345
        %5356 = vrot.lane.b32.xlu0 %v5307, 64
        %v5357 = vpop.permute.xlu0 %5356
        %5360 = vrot.lane.b32.xlu0 %v5309, 64
        %v5361 = vpop.permute.xlu0 %5360
        %5364 = vrot.lane.b32.xlu0 %v5311, 64
        %v5365 = vpop.permute.xlu0 %5364
        %5368 = vrot.lane.b32.xlu0 %v5313, 64
        %v5369 = vpop.permute.xlu0 %5368
        %v5371 = vsel %vm2963, %v5306, %v5357
        %v5372 = vsel %vm2963, %v5308, %v5361
        %v5373 = vsel %vm2963, %v5310, %v5365
        %v5374 = vsel %vm2963, %v5312, %v5369
        %vm5375 = vcmask 1040384
        %v5376 = vsel %vm5375, %v5347, 0.0
        %v5377 = vsel %vm5375, %v5348, 0.0
        %v5378 = vsel %vm5375, %v5349, 0.0
        %v5379 = vsel %vm5375, %v5350, 0.0
        %v5380 = vsel %vm5375, %v5351, 0.0
        %v5381 = vsel %vm5375, %v5352, 0.0
        %v5382 = vsel %vm5375, %v5353, 0.0
        %v5383 = vsel %vm5375, %v5354, 0.0
        %v5384 = vsel %vm5375, %v5371, 0.0
        %v5385 = vsel %vm5375, %v5372, 0.0
        %v5386 = vsel %vm5375, %v5373, 0.0
        %v5387 = vsel %vm5375, %v5374, 0.0
        %v5388 = vsel %vm5375, %v5314, 0.0
        %v5389 = vld [vmem:[%s5] sm:$0xff]
        %v5390 = vld [vmem:[%s5 + $0x8] sm:$0xff]
        %v5391 = vld [vmem:[%s5 + $0x10] sm:$0xff]
        %v5392 = vld [vmem:[%s5 + $0x18] sm:$0xff]
        %v5393 = vld [vmem:[%s5 + $0x20] sm:$0xff]
        %v5394 = vld [vmem:[%s5 + $0x28] sm:$0xff]
        %v5395 = vld [vmem:[%s5 + $0x30] sm:$0xff]
        %v5396 = vld [vmem:[%s5 + $0x38] sm:$0xff]
        %v5397 = vld [vmem:[%s5 + $0x40] sm:$0xff]
        %v5398 = vld [vmem:[%s5 + $0x48] sm:$0xff]
        %v5399 = vld [vmem:[%s5 + $0x50] sm:$0xff]
        %v5400 = vld [vmem:[%s5 + $0x58] sm:$0xff]
        %v5401 = vld [vmem:[%s5 + $0x60] sm:$0xff]
        %v5402 = vld [vmem:[%s5 + $0x68] sm:$0xff]
        %v5403 = vld [vmem:[%s5 + $0x70] sm:$0xff]
        %v5404 = vld [vmem:[%s5 + $0x78] sm:$0xff]
        %v5405 = vld [vmem:[%s5 + $0x80] sm:$0xff]
        %v5406 = vld [vmem:[%s5 + $0x88] sm:$0xff]
        %v5407 = vld [vmem:[%s5 + $0x90] sm:$0xff]
        %v5408 = vld [vmem:[%s5 + $0x98] sm:$0xff]
        %v5409 = vld [vmem:[%s5 + $0xa0] sm:$0xff]
        %v5410 = vld [vmem:[%s5 + $0xa8] sm:$0xff]
        %v5411 = vld [vmem:[%s5 + $0xb0] sm:$0xff]
        %v5412 = vld [vmem:[%s5 + $0xb8] sm:$0xff]
        %v5413 = vld [vmem:[%s5 + $0xc0] sm:$0xff]
        %v5414 = vld [vmem:[%s5 + $0xc8] sm:$0xff]
        %v5415 = vld [vmem:[%s5 + $0xd0] sm:$0xff]
        %v5416 = vld [vmem:[%s5 + $0xd8] sm:$0xff]
        %v5417 = vld [vmem:[%s5 + $0xe0] sm:$0xff]
        %v5418 = vld [vmem:[%s5 + $0xe8] sm:$0xff]
        %v5419 = vld [vmem:[%s5 + $0xf0] sm:$0xff]
        %v5420 = vld [vmem:[%s5 + $0xf8] sm:$0xff]
        %v5421 = vld [vmem:[%s5 + $0x100] sm:$0xff]
        %v5422 = vld [vmem:[%s5 + $0x108] sm:$0xff]
        %v5423 = vld [vmem:[%s5 + $0x110] sm:$0xff]
        %v5424 = vld [vmem:[%s5 + $0x118] sm:$0xff]
        %v5425 = vld [vmem:[%s5 + $0x120] sm:$0xff]
        %v5426 = vld [vmem:[%s5 + $0x128] sm:$0xff]
        %v5427 = vld [vmem:[%s5 + $0x130] sm:$0xff]
        %v5428 = vld [vmem:[%s5 + $0x138] sm:$0xff]
        %v5429 = vld [vmem:[%s5 + $0x140] sm:$0xff]
        %v5430 = vld [vmem:[%s5 + $0x148] sm:$0xff]
        %v5431 = vld [vmem:[%s5 + $0x150] sm:$0xff]
        %v5432 = vld [vmem:[%s5 + $0x158] sm:$0xff]
        %v5433 = vld [vmem:[%s5 + $0x160] sm:$0xff]
        %v5434 = vld [vmem:[%s5 + $0x168] sm:$0xff]
        %v5435 = vld [vmem:[%s5 + $0x170] sm:$0xff]
        %v5436 = vld [vmem:[%s5 + $0x178] sm:$0xff]
        %v5437 = vld [vmem:[%s5 + $0x180] sm:$0xff]
        %v5438 = vld [vmem:[%s5 + $0x188] sm:$0xff]
        %v5439 = vld [vmem:[%s5 + $0x190] sm:$0xff]
        %v5440 = vld [vmem:[%s5 + $0x198] sm:$0xff]
        %v5441 = vld [vmem:[%s5 + $0x1a0] sm:$0xff]
        %v5442 = vld [vmem:[%s5 + $0x1a8] sm:$0xff]
        %v5443 = vld [vmem:[%s5 + $0x1b0] sm:$0xff]
        %v5444 = vld [vmem:[%s5 + $0x1b8] sm:$0xff]
        %v5445 = vld [vmem:[%s5 + $0x1c0] sm:$0xff]
        %v5446 = vld [vmem:[%s5 + $0x1c8] sm:$0xff]
        %v5447 = vld [vmem:[%s5 + $0x1d0] sm:$0xff]
        %v5448 = vld [vmem:[%s5 + $0x1d8] sm:$0xff]
        %v5449 = vld [vmem:[%s5 + $0x1e0] sm:$0xff]
        %v5450 = vld [vmem:[%s5 + $0x1e8] sm:$0xff]
        %v5451 = vld [vmem:[%s5 + $0x1f0] sm:$0xff]
        %v5452 = vld [vmem:[%s5 + $0x1f8] sm:$0xff]
        %v5453 = vld [vmem:[%s5 + $0x200] sm:$0xff]
        %v5454 = vld [vmem:[%s5 + $0x208] sm:$0xff]
        %v5455 = vld [vmem:[%s5 + $0x210] sm:$0xff]
        %v5456 = vld [vmem:[%s5 + $0x218] sm:$0xff]
        %v5457 = vld [vmem:[%s5 + $0x220] sm:$0xff]
        %v5458 = vld [vmem:[%s5 + $0x228] sm:$0xff]
        %v5459 = vld [vmem:[%s5 + $0x230] sm:$0xff]
        %v5460 = vld [vmem:[%s5 + $0x238] sm:$0xff]
        %v5461 = vld [vmem:[%s5 + $0x240] sm:$0xff]
        %v5462 = vld [vmem:[%s5 + $0x248] sm:$0xff]
        %v5463 = vld [vmem:[%s5 + $0x250] sm:$0xff]
        %v5464 = vld [vmem:[%s5 + $0x258] sm:$0xff]
        %v5465 = vld [vmem:[%s5 + $0x260] sm:$0xff]
        %v5466 = vld [vmem:[%s5 + $0x268] sm:$0xff]
        %v5467 = vld [vmem:[%s5 + $0x270] sm:$0xff]
        %v5468 = vld [vmem:[%s5 + $0x278] sm:$0xff]
        %v5469 = vld [vmem:[%s5 + $0x280] sm:$0xff]
        %v5470 = vld [vmem:[%s5 + $0x288] sm:$0xff]
        %v5471 = vld [vmem:[%s5 + $0x290] sm:$0xff]
        %v5472 = vld [vmem:[%s5 + $0x298] sm:$0xff]
        %v5473 = vld [vmem:[%s5 + $0x2a0] sm:$0xff]
        %v5474 = vld [vmem:[%s5 + $0x2a8] sm:$0xff]
        %v5475 = vld [vmem:[%s5 + $0x2b0] sm:$0xff]
        %v5476 = vld [vmem:[%s5 + $0x2b8] sm:$0xff]
        %v5477 = vld [vmem:[%s5 + $0x2c0] sm:$0xff]
        %v5478 = vld [vmem:[%s5 + $0x2c8] sm:$0xff]
        %v5479 = vld [vmem:[%s5 + $0x2d0] sm:$0xff]
        %v5480 = vld [vmem:[%s5 + $0x2d8] sm:$0xff]
        %v5481 = vld [vmem:[%s5 + $0x2e0] sm:$0xff]
        %v5482 = vld [vmem:[%s5 + $0x2e8] sm:$0xff]
        %v5483 = vld [vmem:[%s5 + $0x2f0] sm:$0xff]
        %v5484 = vld [vmem:[%s5 + $0x2f8] sm:$0xff]
        %v5485 = vld [vmem:[%s5 + $0x300] sm:$0xff]
        %v5486 = vld [vmem:[%s5 + $0x308] sm:$0xff]
        %v5487 = vld [vmem:[%s5 + $0x310] sm:$0xff]
        %v5488 = vld [vmem:[%s5 + $0x318] sm:$0xff]
        %v5489 = vld [vmem:[%s5 + $0x320] sm:$0xff]
        %v5490 = vld [vmem:[%s5 + $0x328] sm:$0xff]
        %v5491 = vld [vmem:[%s5 + $0x330] sm:$0xff]
        %v5492 = vld [vmem:[%s5 + $0x338] sm:$0xff]
        %v5493 = vld [vmem:[%s5 + $0x340] sm:$0xff]
        %v5494 = vld [vmem:[%s5 + $0x348] sm:$0xff]
        %v5495 = vld [vmem:[%s5 + $0x350] sm:$0xff]
        %v5496 = vld [vmem:[%s5 + $0x358] sm:$0xff]
        %v5497 = vld [vmem:[%s5 + $0x360] sm:$0xff]
        %v5498 = vld [vmem:[%s5 + $0x368] sm:$0xff]
        %v5499 = vld [vmem:[%s5 + $0x370] sm:$0xff]
        %v5500 = vld [vmem:[%s5 + $0x378] sm:$0xff]
        %v5501 = vld [vmem:[%s5 + $0x380] sm:$0xff]
        %v5502 = vld [vmem:[%s5 + $0x388] sm:$0xff]
        %v5503 = vld [vmem:[%s5 + $0x390] sm:$0xff]
        %v5504 = vld [vmem:[%s5 + $0x398] sm:$0xff]
        %v5505 = vld [vmem:[%s5 + $0x3a0] sm:$0xff]
        %v5506 = vld [vmem:[%s5 + $0x3a8] sm:$0xff]
        %v5507 = vld [vmem:[%s5 + $0x3b0] sm:$0xff]
        %v5508 = vld [vmem:[%s5 + $0x3b8] sm:$0xff]
        %v5509 = vld [vmem:[%s5 + $0x3c0] sm:$0xff]
        %v5510 = vld [vmem:[%s5 + $0x3c8] sm:$0xff]
        %v5511 = vld [vmem:[%s5 + $0x3d0] sm:$0xff]
        %v5512 = vld [vmem:[%s5 + $0x3d8] sm:$0xff]
        %v5513 = vld [vmem:[%s5 + $0x3e0] sm:$0xff]
        %v5514 = vld [vmem:[%s5 + $0x3e8] sm:$0xff]
        %v5515 = vld [vmem:[%s5 + $0x3f0] sm:$0xff]
        %v5516 = vld [vmem:[%s5 + $0x3f8] sm:$0xff]
        %v5517 = vld [vmem:[%s5 + $0x400] sm:$0xff]
        %v5518 = vld [vmem:[%s5 + $0x408] sm:$0xff]
        %v5519 = vld [vmem:[%s5 + $0x410] sm:$0xff]
        %v5520 = vld [vmem:[%s5 + $0x418] sm:$0xff]
        %v5521 = vld [vmem:[%s5 + $0x420] sm:$0xff]
        %v5522 = vld [vmem:[%s5 + $0x428] sm:$0xff]
        %v5523 = vld [vmem:[%s5 + $0x430] sm:$0xff]
        %v5524 = vld [vmem:[%s5 + $0x438] sm:$0xff]
        %v5525 = vld [vmem:[%s5 + $0x440] sm:$0xff]
        %v5526 = vld [vmem:[%s5 + $0x448] sm:$0xff]
        %v5527 = vld [vmem:[%s5 + $0x450] sm:$0xff]
        %v5528 = vld [vmem:[%s5 + $0x458] sm:$0xff]
        %v5529 = vld [vmem:[%s5 + $0x460] sm:$0xff]
        %v5530 = vld [vmem:[%s5 + $0x468] sm:$0xff]
        %v5531 = vld [vmem:[%s5 + $0x470] sm:$0xff]
        %v5532 = vld [vmem:[%s5 + $0x478] sm:$0xff]
        %v5533 = vld [vmem:[%s5 + $0x480] sm:$0xff]
        %v5534 = vld [vmem:[%s5 + $0x488] sm:$0xff]
        %v5535 = vld [vmem:[%s5 + $0x490] sm:$0xff]
        %v5536 = vld [vmem:[%s5 + $0x498] sm:$0xff]
        %v5537 = vld [vmem:[%s5 + $0x4a0] sm:$0xff]
        %v5538 = vld [vmem:[%s5 + $0x4a8] sm:$0xff]
        %v5539 = vld [vmem:[%s5 + $0x4b0] sm:$0xff]
        %v5540 = vld [vmem:[%s5 + $0x4b8] sm:$0xff]
        %v5541 = vld [vmem:[%s5 + $0x4c0] sm:$0xff]
        %v5542 = vld [vmem:[%s5 + $0x4c8] sm:$0xff]
        %v5543 = vld [vmem:[%s5 + $0x4d0] sm:$0xff]
        %v5544 = vld [vmem:[%s5 + $0x4d8] sm:$0xff]
        %v5545 = vld [vmem:[%s5 + $0x4e0] sm:$0xff]
        %v5546 = vld [vmem:[%s5 + $0x4e8] sm:$0xff]
        %v5547 = vld [vmem:[%s5 + $0x4f0] sm:$0xff]
        %v5548 = vld [vmem:[%s5 + $0x4f8] sm:$0xff]
        %v5549 = vld [vmem:[%s5 + $0x500] sm:$0xff]
        %v5550 = vld [vmem:[%s5 + $0x508] sm:$0xff]
        %v5551 = vld [vmem:[%s5 + $0x510] sm:$0xff]
        %v5552 = vld [vmem:[%s5 + $0x518] sm:$0xff]
        %v5553 = vld [vmem:[%s5 + $0x520] sm:$0xff]
        %v5554 = vld [vmem:[%s5 + $0x528] sm:$0xff]
        %v5555 = vld [vmem:[%s5 + $0x530] sm:$0xff]
        %v5556 = vld [vmem:[%s5 + $0x538] sm:$0xff]
        %v5557 = vld [vmem:[%s5 + $0x540] sm:$0xff]
        %v5558 = vld [vmem:[%s5 + $0x548] sm:$0xff]
        %v5559 = vld [vmem:[%s5 + $0x550] sm:$0xff]
        %v5560 = vld [vmem:[%s5 + $0x558] sm:$0xff]
        %v5561 = vld [vmem:[%s5 + $0x560] sm:$0xff]
        %v5562 = vld [vmem:[%s5 + $0x568] sm:$0xff]
        %v5563 = vld [vmem:[%s5 + $0x570] sm:$0xff]
        %v5564 = vld [vmem:[%s5 + $0x578] sm:$0xff]
        %v5565 = vld [vmem:[%s5 + $0x580] sm:$0xff]
        %v5566 = vld [vmem:[%s5 + $0x588] sm:$0xff]
        %v5567 = vld [vmem:[%s5 + $0x590] sm:$0xff]
        %v5568 = vld [vmem:[%s5 + $0x598] sm:$0xff]
        %v5569 = vld [vmem:[%s5 + $0x5a0] sm:$0xff]
        %v5570 = vld [vmem:[%s5 + $0x5a8] sm:$0xff]
        %v5571 = vld [vmem:[%s5 + $0x5b0] sm:$0xff]
        %v5572 = vld [vmem:[%s5 + $0x5b8] sm:$0xff]
        %v5573 = vld [vmem:[%s5 + $0x5c0] sm:$0xff]
        %v5574 = vld [vmem:[%s5 + $0x5c8] sm:$0xff]
        %v5575 = vld [vmem:[%s5 + $0x5d0] sm:$0xff]
        %v5576 = vld [vmem:[%s5 + $0x5d8] sm:$0xff]
        %v5577 = vld [vmem:[%s5 + $0x5e0] sm:$0xff]
        %v5578 = vld [vmem:[%s5 + $0x5e8] sm:$0xff]
        %v5579 = vld [vmem:[%s5 + $0x5f0] sm:$0xff]
        %v5580 = vld [vmem:[%s5 + $0x5f8] sm:$0xff]
        %v5581 = vld [vmem:[%s5 + $0x600] sm:$0xff]
        %v5582 = vld [vmem:[%s5 + $0x608] sm:$0xff]
        %v5583 = vld [vmem:[%s5 + $0x610] sm:$0xff]
        %v5584 = vld [vmem:[%s5 + $0x618] sm:$0xff]
        %v5585 = vld [vmem:[%s5 + $0x620] sm:$0xff]
        %v5586 = vld [vmem:[%s5 + $0x628] sm:$0xff]
        %v5587 = vld [vmem:[%s5 + $0x630] sm:$0xff]
        %v5588 = vld [vmem:[%s5 + $0x638] sm:$0xff]
        %v5590 = vsel %vm2963, %v5388, 0
        %5592 = vmatprep.subr.mxu0 0.0
        %5593 = vmatpush1.msra.mxu0 %v5389
        %5594 = vmatprep.subr.mxu0 0.0
        %5595 = vmatpush1.msra.mxu0 %v5390
        %5596 = vmatprep.subr.mxu0 0.0
        %5597 = vmatpush1.msra.mxu0 %v5391
        %5598 = vmatprep.subr.mxu0 0.0
        %5599 = vmatpush1.msra.mxu0 %v5392
        %5600 = vmatprep.subr.mxu0 0.0
        %5601 = vmatpush1.msra.mxu0 %v5393
        %5602 = vmatprep.subr.mxu0 0.0
        %5603 = vmatpush1.msra.mxu0 %v5394
        %5604 = vmatprep.subr.mxu0 0.0
        %5605 = vmatpush1.msra.mxu0 %v5395
        %5606 = vmatprep.subr.mxu0 0.0
        %5607 = vmatpush1.msra.mxu0 %v5396
        %5608 = vmatprep.subr.mxu0 0.0
        %5609 = vmatpush1.msra.mxu0 %v5397
        %5610 = vmatprep.subr.mxu0 0.0
        %5611 = vmatpush1.msra.mxu0 %v5398
        %5612 = vmatprep.subr.mxu0 0.0
        %5613 = vmatpush1.msra.mxu0 %v5399
        %5614 = vmatprep.subr.mxu0 0.0
        %5615 = vmatpush1.msra.mxu0 %v5400
        %5616 = vmatprep.subr.mxu0 0.0
        %5617 = vmatpush1.msra.mxu0 %v5401
        %5618 = vmatprep.subr.mxu0 0.0
        %5619 = vmatpush1.msra.mxu0 %v5402
        %5620 = vmatprep.subr.mxu0 0.0
        %5621 = vmatpush1.msra.mxu0 %v5403
        %5622 = vmatprep.subr.mxu0 0.0
        %5623 = vmatpush1.msra.mxu0 %v5404
        %5624 = vmatprep.subr.mxu0 0.0
        %5625 = vmatpush1.msra.mxu0 %v5405
        %5626 = vmatprep.subr.mxu0 0.0
        %5627 = vmatpush1.msra.mxu0 %v5406
        %5628 = vmatprep.subr.mxu0 0.0
        %5629 = vmatpush1.msra.mxu0 %v5407
        %5630 = vmatprep.subr.mxu0 0.0
        %5631 = vmatpush1.msra.mxu0 %v5408
        %5632 = vmatprep.subr.mxu0 0.0
        %5633 = vmatpush1.msra.mxu0 %v5409
        %5634 = vmatprep.subr.mxu0 0.0
        %5635 = vmatpush1.msra.mxu0 %v5410
        %5636 = vmatprep.subr.mxu0 0.0
        %5637 = vmatpush1.msra.mxu0 %v5411
        %5638 = vmatprep.subr.mxu0 0.0
        %5639 = vmatpush1.msra.mxu0 %v5412
        %5640 = vmatprep.subr.mxu0 0.0
        %5641 = vmatpush1.msra.mxu0 %v5413
        %5642 = vmatprep.subr.mxu0 0.0
        %5643 = vmatpush1.msra.mxu0 %v5414
        %5644 = vmatprep.subr.mxu0 0.0
        %5645 = vmatpush1.msra.mxu0 %v5415
        %5646 = vmatprep.subr.mxu0 0.0
        %5647 = vmatpush1.msra.mxu0 %v5416
        %5648 = vmatprep.subr.mxu0 0.0
        %5649 = vmatpush1.msra.mxu0 %v5417
        %5650 = vmatprep.subr.mxu0 0.0
        %5651 = vmatpush1.msra.mxu0 %v5418
        %5652 = vmatprep.subr.mxu0 0.0
        %5653 = vmatpush1.msra.mxu0 %v5419
        %5654 = vmatprep.subr.mxu0 0.0
        %5655 = vmatpush1.msra.mxu0 %v5420
        %5656 = vmatprep.mubr.f32.mxu0 %v5377
        %5657 = vmatmul.mubr.f32.gmra.mrb[0].mxu0 %v5376
        %v5658 = vpop.f32.mrb[0].mxu0
        %v5659 = vadd.f32 0.0, %v5658
        %v5660 = vpop.f32.mrb[0].mxu0
        %5661 = vdwg.mxu0
        %5662 = vmatprep.subr.mxu0 0.0
        %5663 = vmatpush1.msra.mxu0 %v5421
        %5664 = vmatprep.subr.mxu0 0.0
        %5665 = vmatpush1.msra.mxu0 %v5422
        %5666 = vmatprep.subr.mxu0 0.0
        %5667 = vmatpush1.msra.mxu0 %v5423
        %5668 = vmatprep.subr.mxu0 0.0
        %5669 = vmatpush1.msra.mxu0 %v5424
        %5670 = vmatprep.subr.mxu0 0.0
        %5671 = vmatpush1.msra.mxu0 %v5425
        %5672 = vmatprep.subr.mxu0 0.0
        %5673 = vmatpush1.msra.mxu0 %v5426
        %5674 = vmatprep.subr.mxu0 0.0
        %5675 = vmatpush1.msra.mxu0 %v5427
        %5676 = vmatprep.subr.mxu0 0.0
        %5677 = vmatpush1.msra.mxu0 %v5428
        %5678 = vmatprep.subr.mxu0 0.0
        %5679 = vmatpush1.msra.mxu0 %v5429
        %5680 = vmatprep.subr.mxu0 0.0
        %5681 = vmatpush1.msra.mxu0 %v5430
        %5682 = vmatprep.subr.mxu0 0.0
        %5683 = vmatpush1.msra.mxu0 %v5431
        %5684 = vmatprep.subr.mxu0 0.0
        %5685 = vmatpush1.msra.mxu0 %v5432
        %5686 = vmatprep.subr.mxu0 0.0
        %5687 = vmatpush1.msra.mxu0 %v5433
        %5688 = vmatprep.subr.mxu0 0.0
        %5689 = vmatpush1.msra.mxu0 %v5434
        %5690 = vmatprep.subr.mxu0 0.0
        %5691 = vmatpush1.msra.mxu0 %v5435
        %5692 = vmatprep.subr.mxu0 0.0
        %5693 = vmatpush1.msra.mxu0 %v5436
        %5694 = vmatprep.subr.mxu0 0.0
        %5695 = vmatpush1.msra.mxu0 %v5437
        %5696 = vmatprep.subr.mxu0 0.0
        %5697 = vmatpush1.msra.mxu0 %v5438
        %5698 = vmatprep.subr.mxu0 0.0
        %5699 = vmatpush1.msra.mxu0 %v5439
        %5700 = vmatprep.subr.mxu0 0.0
        %5701 = vmatpush1.msra.mxu0 %v5440
        %5702 = vmatprep.subr.mxu0 0.0
        %5703 = vmatpush1.msra.mxu0 %v5441
        %5704 = vmatprep.subr.mxu0 0.0
        %5705 = vmatpush1.msra.mxu0 %v5442
        %5706 = vmatprep.subr.mxu0 0.0
        %5707 = vmatpush1.msra.mxu0 %v5443
        %5708 = vmatprep.subr.mxu0 0.0
        %5709 = vmatpush1.msra.mxu0 %v5444
        %5710 = vmatprep.subr.mxu0 0.0
        %5711 = vmatpush1.msra.mxu0 %v5445
        %5712 = vmatprep.subr.mxu0 0.0
        %5713 = vmatpush1.msra.mxu0 %v5446
        %5714 = vmatprep.subr.mxu0 0.0
        %5715 = vmatpush1.msra.mxu0 %v5447
        %5716 = vmatprep.subr.mxu0 0.0
        %5717 = vmatpush1.msra.mxu0 %v5448
        %5718 = vmatprep.subr.mxu0 0.0
        %5719 = vmatpush1.msra.mxu0 %v5449
        %5720 = vmatprep.subr.mxu0 0.0
        %5721 = vmatpush1.msra.mxu0 %v5450
        %5722 = vmatprep.subr.mxu0 0.0
        %5723 = vmatpush1.msra.mxu0 %v5451
        %5724 = vmatprep.subr.mxu0 0.0
        %5725 = vmatpush1.msra.mxu0 %v5452
        %5726 = vmatprep.mubr.f32.mxu0 %v5379
        %5727 = vmatmul.mubr.f32.gmra.mrb[0].mxu0 %v5378
        %v5728 = vpop.f32.mrb[0].mxu0
        %v5729 = vadd.f32 %v5659, %v5728
        %v5730 = vpop.f32.mrb[0].mxu0
        %5731 = vdwg.mxu0
        %5732 = vmatprep.subr.mxu0 0.0
        %5733 = vmatpush1.msra.mxu0 %v5453
        %5734 = vmatprep.subr.mxu0 0.0
        %5735 = vmatpush1.msra.mxu0 %v5454
        %5736 = vmatprep.subr.mxu0 0.0
        %5737 = vmatpush1.msra.mxu0 %v5455
        %5738 = vmatprep.subr.mxu0 0.0
        %5739 = vmatpush1.msra.mxu0 %v5456
        %5740 = vmatprep.subr.mxu0 0.0
        %5741 = vmatpush1.msra.mxu0 %v5457
        %5742 = vmatprep.subr.mxu0 0.0
        %5743 = vmatpush1.msra.mxu0 %v5458
        %5744 = vmatprep.subr.mxu0 0.0
        %5745 = vmatpush1.msra.mxu0 %v5459
        %5746 = vmatprep.subr.mxu0 0.0
        %5747 = vmatpush1.msra.mxu0 %v5460
        %5748 = vmatprep.subr.mxu0 0.0
        %5749 = vmatpush1.msra.mxu0 %v5461
        %5750 = vmatprep.subr.mxu0 0.0
        %5751 = vmatpush1.msra.mxu0 %v5462
        %5752 = vmatprep.subr.mxu0 0.0
        %5753 = vmatpush1.msra.mxu0 %v5463
        %5754 = vmatprep.subr.mxu0 0.0
        %5755 = vmatpush1.msra.mxu0 %v5464
        %5756 = vmatprep.subr.mxu0 0.0
        %5757 = vmatpush1.msra.mxu0 %v5465
        %5758 = vmatprep.subr.mxu0 0.0
        %5759 = vmatpush1.msra.mxu0 %v5466
        %5760 = vmatprep.subr.mxu0 0.0
        %5761 = vmatpush1.msra.mxu0 %v5467
        %5762 = vmatprep.subr.mxu0 0.0
        %5763 = vmatpush1.msra.mxu0 %v5468
        %5764 = vmatprep.subr.mxu0 0.0
        %5765 = vmatpush1.msra.mxu0 %v5469
        %5766 = vmatprep.subr.mxu0 0.0
        %5767 = vmatpush1.msra.mxu0 %v5470
        %5768 = vmatprep.subr.mxu0 0.0
        %5769 = vmatpush1.msra.mxu0 %v5471
        %5770 = vmatprep.subr.mxu0 0.0
        %5771 = vmatpush1.msra.mxu0 %v5472
        %5772 = vmatprep.subr.mxu0 0.0
        %5773 = vmatpush1.msra.mxu0 %v5473
        %5774 = vmatprep.subr.mxu0 0.0
        %5775 = vmatpush1.msra.mxu0 %v5474
        %5776 = vmatprep.subr.mxu0 0.0
        %5777 = vmatpush1.msra.mxu0 %v5475
        %5778 = vmatprep.subr.mxu0 0.0
        %5779 = vmatpush1.msra.mxu0 %v5476
        %5780 = vmatprep.subr.mxu0 0.0
        %5781 = vmatpush1.msra.mxu0 %v5477
        %5782 = vmatprep.subr.mxu0 0.0
        %5783 = vmatpush1.msra.mxu0 %v5478
        %5784 = vmatprep.subr.mxu0 0.0
        %5785 = vmatpush1.msra.mxu0 %v5479
        %5786 = vmatprep.subr.mxu0 0.0
        %5787 = vmatpush1.msra.mxu0 %v5480
        %5788 = vmatprep.subr.mxu0 0.0
        %5789 = vmatpush1.msra.mxu0 %v5481
        %5790 = vmatprep.subr.mxu0 0.0
        %5791 = vmatpush1.msra.mxu0 %v5482
        %5792 = vmatprep.subr.mxu0 0.0
        %5793 = vmatpush1.msra.mxu0 %v5483
        %5794 = vmatprep.subr.mxu0 0.0
        %5795 = vmatpush1.msra.mxu0 %v5484
        %5796 = vmatprep.mubr.f32.mxu0 %v5381
        %5797 = vmatmul.mubr.f32.gmra.mrb[0].mxu0 %v5380
        %v5798 = vpop.f32.mrb[0].mxu0
        %v5799 = vadd.f32 %v5729, %v5798
        %v5800 = vpop.f32.mrb[0].mxu0
        %5801 = vdwg.mxu0
        %5802 = vmatprep.subr.mxu0 0.0
        %5803 = vmatpush1.msra.mxu0 %v5485
        %5804 = vmatprep.subr.mxu0 0.0
        %5805 = vmatpush1.msra.mxu0 %v5486
        %5806 = vmatprep.subr.mxu0 0.0
        %5807 = vmatpush1.msra.mxu0 %v5487
        %5808 = vmatprep.subr.mxu0 0.0
        %5809 = vmatpush1.msra.mxu0 %v5488
        %5810 = vmatprep.subr.mxu0 0.0
        %5811 = vmatpush1.msra.mxu0 %v5489
        %5812 = vmatprep.subr.mxu0 0.0
        %5813 = vmatpush1.msra.mxu0 %v5490
        %5814 = vmatprep.subr.mxu0 0.0
        %5815 = vmatpush1.msra.mxu0 %v5491
        %5816 = vmatprep.subr.mxu0 0.0
        %5817 = vmatpush1.msra.mxu0 %v5492
        %5818 = vmatprep.subr.mxu0 0.0
        %5819 = vmatpush1.msra.mxu0 %v5493
        %5820 = vmatprep.subr.mxu0 0.0
        %5821 = vmatpush1.msra.mxu0 %v5494
        %5822 = vmatprep.subr.mxu0 0.0
        %5823 = vmatpush1.msra.mxu0 %v5495
        %5824 = vmatprep.subr.mxu0 0.0
        %5825 = vmatpush1.msra.mxu0 %v5496
        %5826 = vmatprep.subr.mxu0 0.0
        %5827 = vmatpush1.msra.mxu0 %v5497
        %5828 = vmatprep.subr.mxu0 0.0
        %5829 = vmatpush1.msra.mxu0 %v5498
        %5830 = vmatprep.subr.mxu0 0.0
        %5831 = vmatpush1.msra.mxu0 %v5499
        %5832 = vmatprep.subr.mxu0 0.0
        %5833 = vmatpush1.msra.mxu0 %v5500
        %5834 = vmatprep.subr.mxu0 0.0
        %5835 = vmatpush1.msra.mxu0 %v5501
        %5836 = vmatprep.subr.mxu0 0.0
        %5837 = vmatpush1.msra.mxu0 %v5502
        %5838 = vmatprep.subr.mxu0 0.0
        %5839 = vmatpush1.msra.mxu0 %v5503
        %5840 = vmatprep.subr.mxu0 0.0
        %5841 = vmatpush1.msra.mxu0 %v5504
        %5842 = vmatprep.subr.mxu0 0.0
        %5843 = vmatpush1.msra.mxu0 %v5505
        %5844 = vmatprep.subr.mxu0 0.0
        %5845 = vmatpush1.msra.mxu0 %v5506
        %5846 = vmatprep.subr.mxu0 0.0
        %5847 = vmatpush1.msra.mxu0 %v5507
        %5848 = vmatprep.subr.mxu0 0.0
        %5849 = vmatpush1.msra.mxu0 %v5508
        %5850 = vmatprep.subr.mxu0 0.0
        %5851 = vmatpush1.msra.mxu0 %v5509
        %5852 = vmatprep.subr.mxu0 0.0
        %5853 = vmatpush1.msra.mxu0 %v5510
        %5854 = vmatprep.subr.mxu0 0.0
        %5855 = vmatpush1.msra.mxu0 %v5511
        %5856 = vmatprep.subr.mxu0 0.0
        %5857 = vmatpush1.msra.mxu0 %v5512
        %5858 = vmatprep.subr.mxu0 0.0
        %5859 = vmatpush1.msra.mxu0 %v5513
        %5860 = vmatprep.subr.mxu0 0.0
        %5861 = vmatpush1.msra.mxu0 %v5514
        %5862 = vmatprep.subr.mxu0 0.0
        %5863 = vmatpush1.msra.mxu0 %v5515
        %5864 = vmatprep.subr.mxu0 0.0
        %5865 = vmatpush1.msra.mxu0 %v5516
        %5866 = vmatprep.mubr.f32.mxu0 %v5383
        %5867 = vmatmul.mubr.f32.gmra.mrb[0].mxu0 %v5382
        %v5868 = vpop.f32.mrb[0].mxu0
        %v5869 = vadd.f32 %v5799, %v5868
        %v5870 = vpop.f32.mrb[0].mxu0
        %5871 = vdwg.mxu0
        %5872 = vmatprep.subr.mxu0 0.0
        %5873 = vmatpush1.msra.mxu0 %v5517
        %5874 = vmatprep.subr.mxu0 0.0
        %5875 = vmatpush1.msra.mxu0 %v5518
        %5876 = vmatprep.subr.mxu0 0.0
        %5877 = vmatpush1.msra.mxu0 %v5519
        %5878 = vmatprep.subr.mxu0 0.0
        %5879 = vmatpush1.msra.mxu0 %v5520
        %5880 = vmatprep.subr.mxu0 0.0
        %5881 = vmatpush1.msra.mxu0 %v5521
        %5882 = vmatprep.subr.mxu0 0.0
        %5883 = vmatpush1.msra.mxu0 %v5522
        %5884 = vmatprep.subr.mxu0 0.0
        %5885 = vmatpush1.msra.mxu0 %v5523
        %5886 = vmatprep.subr.mxu0 0.0
        %5887 = vmatpush1.msra.mxu0 %v5524
        %5888 = vmatprep.subr.mxu0 0.0
        %5889 = vmatpush1.msra.mxu0 %v5525
        %5890 = vmatprep.subr.mxu0 0.0
        %5891 = vmatpush1.msra.mxu0 %v5526
        %5892 = vmatprep.subr.mxu0 0.0
        %5893 = vmatpush1.msra.mxu0 %v5527
        %5894 = vmatprep.subr.mxu0 0.0
        %5895 = vmatpush1.msra.mxu0 %v5528
        %5896 = vmatprep.subr.mxu0 0.0
        %5897 = vmatpush1.msra.mxu0 %v5529
        %5898 = vmatprep.subr.mxu0 0.0
        %5899 = vmatpush1.msra.mxu0 %v5530
        %5900 = vmatprep.subr.mxu0 0.0
        %5901 = vmatpush1.msra.mxu0 %v5531
        %5902 = vmatprep.subr.mxu0 0.0
        %5903 = vmatpush1.msra.mxu0 %v5532
        %5904 = vmatprep.subr.mxu0 0.0
        %5905 = vmatpush1.msra.mxu0 %v5533
        %5906 = vmatprep.subr.mxu0 0.0
        %5907 = vmatpush1.msra.mxu0 %v5534
        %5908 = vmatprep.subr.mxu0 0.0
        %5909 = vmatpush1.msra.mxu0 %v5535
        %5910 = vmatprep.subr.mxu0 0.0
        %5911 = vmatpush1.msra.mxu0 %v5536
        %5912 = vmatprep.subr.mxu0 0.0
        %5913 = vmatpush1.msra.mxu0 %v5537
        %5914 = vmatprep.subr.mxu0 0.0
        %5915 = vmatpush1.msra.mxu0 %v5538
        %5916 = vmatprep.subr.mxu0 0.0
        %5917 = vmatpush1.msra.mxu0 %v5539
        %5918 = vmatprep.subr.mxu0 0.0
        %5919 = vmatpush1.msra.mxu0 %v5540
        %5920 = vmatprep.subr.mxu0 0.0
        %5921 = vmatpush1.msra.mxu0 %v5541
        %5922 = vmatprep.subr.mxu0 0.0
        %5923 = vmatpush1.msra.mxu0 %v5542
        %5924 = vmatprep.subr.mxu0 0.0
        %5925 = vmatpush1.msra.mxu0 %v5543
        %5926 = vmatprep.subr.mxu0 0.0
        %5927 = vmatpush1.msra.mxu0 %v5544
        %5928 = vmatprep.subr.mxu0 0.0
        %5929 = vmatpush1.msra.mxu0 %v5545
        %5930 = vmatprep.subr.mxu0 0.0
        %5931 = vmatpush1.msra.mxu0 %v5546
        %5932 = vmatprep.subr.mxu0 0.0
        %5933 = vmatpush1.msra.mxu0 %v5547
        %5934 = vmatprep.subr.mxu0 0.0
        %5935 = vmatpush1.msra.mxu0 %v5548
        %5936 = vmatprep.mubr.f32.mxu0 %v5385
        %5937 = vmatmul.mubr.f32.gmra.mrb[0].mxu0 %v5384
        %v5938 = vpop.f32.mrb[0].mxu0
        %v5939 = vadd.f32 %v5869, %v5938
        %v5940 = vpop.f32.mrb[0].mxu0
        %5941 = vdwg.mxu0
        %5942 = vmatprep.subr.mxu0 0.0
        %5943 = vmatpush1.msra.mxu0 %v5549
        %5944 = vmatprep.subr.mxu0 0.0
        %5945 = vmatpush1.msra.mxu0 %v5550
        %5946 = vmatprep.subr.mxu0 0.0
        %5947 = vmatpush1.msra.mxu0 %v5551
        %5948 = vmatprep.subr.mxu0 0.0
        %5949 = vmatpush1.msra.mxu0 %v5552
        %5950 = vmatprep.subr.mxu0 0.0
        %5951 = vmatpush1.msra.mxu0 %v5553
        %5952 = vmatprep.subr.mxu0 0.0
        %5953 = vmatpush1.msra.mxu0 %v5554
        %5954 = vmatprep.subr.mxu0 0.0
        %5955 = vmatpush1.msra.mxu0 %v5555
        %5956 = vmatprep.subr.mxu0 0.0
        %5957 = vmatpush1.msra.mxu0 %v5556
        %5958 = vmatprep.subr.mxu0 0.0
        %5959 = vmatpush1.msra.mxu0 %v5557
        %5960 = vmatprep.subr.mxu0 0.0
        %5961 = vmatpush1.msra.mxu0 %v5558
        %5962 = vmatprep.subr.mxu0 0.0
        %5963 = vmatpush1.msra.mxu0 %v5559
        %5964 = vmatprep.subr.mxu0 0.0
        %5965 = vmatpush1.msra.mxu0 %v5560
        %5966 = vmatprep.subr.mxu0 0.0
        %5967 = vmatpush1.msra.mxu0 %v5561
        %5968 = vmatprep.subr.mxu0 0.0
        %5969 = vmatpush1.msra.mxu0 %v5562
        %5970 = vmatprep.subr.mxu0 0.0
        %5971 = vmatpush1.msra.mxu0 %v5563
        %5972 = vmatprep.subr.mxu0 0.0
        %5973 = vmatpush1.msra.mxu0 %v5564
        %5974 = vmatprep.subr.mxu0 0.0
        %5975 = vmatpush1.msra.mxu0 %v5565
        %5976 = vmatprep.subr.mxu0 0.0
        %5977 = vmatpush1.msra.mxu0 %v5566
        %5978 = vmatprep.subr.mxu0 0.0
        %5979 = vmatpush1.msra.mxu0 %v5567
        %5980 = vmatprep.subr.mxu0 0.0
        %5981 = vmatpush1.msra.mxu0 %v5568
        %5982 = vmatprep.subr.mxu0 0.0
        %5983 = vmatpush1.msra.mxu0 %v5569
        %5984 = vmatprep.subr.mxu0 0.0
        %5985 = vmatpush1.msra.mxu0 %v5570
        %5986 = vmatprep.subr.mxu0 0.0
        %5987 = vmatpush1.msra.mxu0 %v5571
        %5988 = vmatprep.subr.mxu0 0.0
        %5989 = vmatpush1.msra.mxu0 %v5572
        %5990 = vmatprep.subr.mxu0 0.0
        %5991 = vmatpush1.msra.mxu0 %v5573
        %5992 = vmatprep.subr.mxu0 0.0
        %5993 = vmatpush1.msra.mxu0 %v5574
        %5994 = vmatprep.subr.mxu0 0.0
        %5995 = vmatpush1.msra.mxu0 %v5575
        %5996 = vmatprep.subr.mxu0 0.0
        %5997 = vmatpush1.msra.mxu0 %v5576
        %5998 = vmatprep.subr.mxu0 0.0
        %5999 = vmatpush1.msra.mxu0 %v5577
        %6000 = vmatprep.subr.mxu0 0.0
        %6001 = vmatpush1.msra.mxu0 %v5578
        %6002 = vmatprep.subr.mxu0 0.0
        %6003 = vmatpush1.msra.mxu0 %v5579
        %6004 = vmatprep.subr.mxu0 0.0
        %6005 = vmatpush1.msra.mxu0 %v5580
        %6006 = vmatprep.mubr.f32.mxu0 %v5387
        %6007 = vmatmul.mubr.f32.gmra.mrb[0].mxu0 %v5386
        %v6008 = vpop.f32.mrb[0].mxu0
        %v6009 = vadd.f32 %v5939, %v6008
        %v6010 = vpop.f32.mrb[0].mxu0
        %6011 = vdwg.mxu0
        %6012 = vmatprep.subr.mxu0 0.0
        %6013 = vmatpush1.msra.mxu0 %v5581
        %6014 = vmatprep.subr.mxu0 0.0
        %6015 = vmatpush1.msra.mxu0 %v5582
        %6016 = vmatprep.subr.mxu0 0.0
        %6017 = vmatpush1.msra.mxu0 %v5583
        %6018 = vmatprep.subr.mxu0 0.0
        %6019 = vmatpush1.msra.mxu0 %v5584
        %6020 = vmatprep.subr.mxu0 0.0
        %6021 = vmatpush1.msra.mxu0 %v5585
        %6022 = vmatprep.subr.mxu0 0.0
        %6023 = vmatpush1.msra.mxu0 %v5586
        %6024 = vmatprep.subr.mxu0 0.0
        %6025 = vmatpush1.msra.mxu0 %v5587
        %6026 = vmatprep.subr.mxu0 0.0
        %6027 = vmatpush1.msra.mxu0 %v5588
        %6028 = vmatprep.subr.mxu0 0.0
        %6029 = vmatpush1.msra.mxu0 0.0
        %6030 = vmatprep.subr.mxu0 0.0
        %6031 = vmatpush1.msra.mxu0 0.0
        %6032 = vmatprep.subr.mxu0 0.0
        %6033 = vmatpush1.msra.mxu0 0.0
        %6034 = vmatprep.subr.mxu0 0.0
        %6035 = vmatpush1.msra.mxu0 0.0
        %6036 = vmatprep.subr.mxu0 0.0
        %6037 = vmatpush1.msra.mxu0 0.0
        %6038 = vmatprep.subr.mxu0 0.0
        %6039 = vmatpush1.msra.mxu0 0.0
        %6040 = vmatprep.subr.mxu0 0.0
        %6041 = vmatpush1.msra.mxu0 0.0
        %6042 = vmatprep.subr.mxu0 0.0
        %6043 = vmatpush1.msra.mxu0 0.0
        %6044 = vmatprep.subr.mxu0 0.0
        %6045 = vmatpush1.msra.mxu0 0.0
        %6046 = vmatprep.subr.mxu0 0.0
        %6047 = vmatpush1.msra.mxu0 0.0
        %6048 = vmatprep.subr.mxu0 0.0
        %6049 = vmatpush1.msra.mxu0 0.0
        %6050 = vmatprep.subr.mxu0 0.0
        %6051 = vmatpush1.msra.mxu0 0.0
        %6052 = vmatprep.subr.mxu0 0.0
        %6053 = vmatpush1.msra.mxu0 0.0
        %6054 = vmatprep.subr.mxu0 0.0
        %6055 = vmatpush1.msra.mxu0 0.0
        %6056 = vmatprep.subr.mxu0 0.0
        %6057 = vmatpush1.msra.mxu0 0.0
        %6058 = vmatprep.subr.mxu0 0.0
        %6059 = vmatpush1.msra.mxu0 0.0
        %6060 = vmatprep.subr.mxu0 0.0
        %6061 = vmatpush1.msra.mxu0 0.0
        %6062 = vmatprep.subr.mxu0 0.0
        %6063 = vmatpush1.msra.mxu0 0.0
        %6064 = vmatprep.subr.mxu0 0.0
        %6065 = vmatpush1.msra.mxu0 0.0
        %6066 = vmatprep.subr.mxu0 0.0
        %6067 = vmatpush1.msra.mxu0 0.0
        %6068 = vmatprep.subr.mxu0 0.0
        %6069 = vmatpush1.msra.mxu0 0.0
        %6070 = vmatprep.subr.mxu0 0.0
        %6071 = vmatpush1.msra.mxu0 0.0
        %6072 = vmatprep.subr.mxu0 0.0
        %6073 = vmatpush1.msra.mxu0 0.0
        %6074 = vmatprep.subr.mxu0 0.0
        %6075 = vmatpush1.msra.mxu0 0.0
        %6076 = vmatprep.mubr.f32.mxu0 0.0
        %6077 = vmatmul.mubr.f32.gmra.mrb[0].mxu0 %v5590
        %v6078 = vpop.f32.mrb[0].mxu0
        %v6079 = vadd.f32 %v6009, %v6078
        %v6080 = vpop.f32.mrb[0].mxu0
        %6081 = vdwg.mxu0
        %v6082 = vld [vmem:[%s6] sm:$0x1]
        %v6083 = vadd.f32 %v6079, %v6082
        %vm6084 = vcmask 73728
        %6085 = vst.msk [vmem:[%s270] sm:$0x1] %vm6084, %v6083
        %s6086 = sand.u32 %s181, 1
        %s6087 = scalar_lea.sflag [#allocation8], %s6086
        %s6088 = sand.u32 %s181, 1
        %s6089 = scalar_lea.vmem [#allocation7], %s6088
        // Predicated region
        $region49: #{net_forward.1} parent=47 // pred_check
          %p6090 = pneg %p191
        $region50: #{net_forward.1} parent=47 // pred_check_branch
          %6092 = sbr.rel (%p6090) target = $region52
        $region51: #{net_forward.1} parent=47 // pred_region
          %s6094 = ssub.s32 16, 16
          %6095 = vsyncadd %s6087, %s6094
          %s6096 = smul.addr %s21, 16
          %s6097 = scalar_lea.hbm %s7, %s6096
          %s6099 = sshll.u32 %s6089, 4
          %s6100 = int_to_ptr.vmem [resolvable:$true] %s6099
          %6102 = dma.vmem_to_hbm [thread:$0]  %s6100, 16, %s6097, %s6087
        $region52: #{net_forward.1} parent=47 // pred_fallthru
          _
      $region48: #{net_forward.1} parent=5 // pred_fallthru
        _
      %p6103 = scmp.le.s32.totalorder 2, %s16
      // Predicated region
      $region53: #{net_forward.1} parent=5 // pred_check
        %p6104 = pneg %p6103
      $region54: #{net_forward.1} parent=5 // pred_check_branch
        %6106 = sbr.rel (%p6104) target = $region56
      $region55: #{net_forward.1} parent=5 // pred_region
        %s6107 = ssub.s32 %s16, 2
        // Predicated region
        $region57: #{net_forward.1} parent=55 // pred_check
          %p6108 = pneg %p197
        $region58: #{net_forward.1} parent=55 // pred_check_branch
          %6110 = sbr.rel (%p6108) target = $region60
        $region59: #{net_forward.1} parent=55 // pred_region
          %s6111 = sand.u32 %s182, 1
          %s6112 = scalar_lea.sflag [#allocation8], %s6111
          %s6113 = sand.u32 %s182, 1
          %s6114 = scalar_lea.vmem [#allocation7], %s6113
          %6115 = dma.done %s6112, 16
        $region60: #{net_forward.1} parent=55 // pred_fallthru
          _
      $region56: #{net_forward.1} parent=5 // pred_fallthru
        _
    $region6: #{net_forward.1} parent=1 // loop_footer
      %s20 = sadd.s32 1, %s16
    $region7: #{net_forward.1} parent=1 // loop_footer_branch
      %15 = sbr.rel target = $region3
    $region8: #{net_forward.1} parent=1 // loop_exit
      _
    %6116 = vsyncpa [#allocation8], 1
    %s6117 = scalar_lea.sflag [#allocation8], 1
    %6118 = vsyncpa %s6117, 1

</llo_original>
